<compile_context>
chip_gen: v5e
topology: v5e:2x2
jax: 0.10.0
libtpu: 0.0.40
codegen_flags: <defaults>
</compile_context>

<pallas_src>
import functools

import jax
import jax.numpy as jnp
import numpy as np
from jax.experimental import pallas as pl
from jax.experimental.pallas import tpu as pltpu

_PADL = 8  # sublane-aligned column where the image starts inside the halo scratch


# ----------------------------------------------------------------------------
# small helpers
# ----------------------------------------------------------------------------
def _round_up(x, m):
    return -(-x // m) * m


def _pick_bb(batch, hw, target_rows=256):
    """Images per grid step: enough rows (bb*H*W) to feed the MXU (~256 rows),
    never more than the batch.  Raise target_rows on 128-MiB (v5e/v6e) parts."""
    if hw >= target_rows:
        return 1
    return max(1, min(batch, -(-target_rows // hw)))


# ----------------------------------------------------------------------------
# optional single-buffering of constant-index operands (pl.Buffered probe)
# ----------------------------------------------------------------------------
_BUFFERED_OK = None


def _probe_buffered():
    try:
        spec = pl.BlockSpec((8, 128), lambda i: (0, 0), pipeline_mode=pl.Buffered(1))
    except Exception:
        return False
    try:
        def _k(x_ref, o_ref):
            o_ref[...] = x_ref[...] + 1.0

        out = pl.pallas_call(
            _k,
            out_shape=jax.ShapeDtypeStruct((8, 128), jnp.float32),
            grid=(1,),
            in_specs=[spec],
            out_specs=pl.BlockSpec((8, 128), lambda i: (0, 0)),
        )(jnp.zeros((8, 128), jnp.float32))
        jax.block_until_ready(out)
        return True
    except Exception:
        return False


def _buffered_ok():
    global _BUFFERED_OK
    if _BUFFERED_OK is None:
        _BUFFERED_OK = _probe_buffered()
    return _BUFFERED_OK


def _const_spec(shape):
    """BlockSpec for an operand whose block never changes across the grid."""
    idx = lambda i: (0,) * len(shape)
    if _buffered_ok():
        return pl.BlockSpec(shape, idx, pipeline_mode=pl.Buffered(1))
    return pl.BlockSpec(shape, idx)


# ----------------------------------------------------------------------------
# fused Pallas kernel: conv1+BN+ReLU -> conv2+BN+ReLU -> depthnet -> softmax
#                      -> depth (x) context outer product in final layout
# ----------------------------------------------------------------------------
def _cam_encode_fused_kernel(x_ref, w1_ref, s1_ref, b1_ref,
                             w2_ref, s2_ref, b2_ref, wd_ref, bd_ref,
                             o_ref, h1pad_ref, *, H, W, D, C):
    bb = o_ref.shape[0]
    HW = H * W
    M = bb * HW
    Cmid = w1_ref.shape[-1]

    def conv3x3(src_ref, w_ref, col0):
        # 9-tap accumulation over statically shifted slices (no HBM im2col).
        cin = src_ref.shape[-1]

        def tap(k):
            dh, dw = divmod(k, 3)
            xs = src_ref[:, dh:dh + H, col0 + dw:col0 + dw + W, :]
            return jnp.dot(xs.reshape(M, cin), w_ref[k],
                           preferred_element_type=jnp.float32)

        acc = tap(0)
        for k in range(1, 9):
            acc = acc + tap(k)
        return acc

    # conv1 (input pre-padded by 1 in the wrapper) + folded BN + ReLU
    h1 = jnp.maximum(conv3x3(x_ref, w1_ref, 0) * s1_ref[...] + b1_ref[...], 0.0)

    # stage into a zero-halo VMEM scratch; image at column _PADL -> aligned store
    h1pad_ref[...] = jnp.zeros(h1pad_ref.shape, h1pad_ref.dtype)
    h1pad_ref[:, 1:H + 1, _PADL:_PADL + W, :] = (
        h1.astype(jnp.bfloat16).reshape(bb, H, W, Cmid))

    # conv2 (taps read the scratch at column offset _PADL-1) + folded BN + ReLU
    h2 = jnp.maximum(conv3x3(h1pad_ref, w2_ref, _PADL - 1) * s2_ref[...]
                     + b2_ref[...], 0.0)

    # depthnet 1x1 conv; weight/bias pre-padded to a 128-lane multiple
    logits = jnp.dot(h2.astype(jnp.bfloat16), wd_ref[...],
                     preferred_element_type=jnp.float32) + bd_ref[...]

    # single transpose -> (P, M): depth bins on sublanes, pixels lane-dense
    lt = jnp.transpose(logits)
    dl = lt[:D]                               # (D, M) depth logits
    ctx = lt[D:D + C]                         # (C, M) context features
    m = jnp.max(dl, axis=0, keepdims=True)
    e = jnp.exp(dl - m)
    inv = pl.reciprocal(jnp.sum(e, axis=0, keepdims=True), approx=True)
    depth = e * inv                           # softmax over the D depth bins

    # outer product directly in the final (C, D, pixel) layout; bf16 store
    prod = (ctx[:, None, :] * depth[None, :, :]).astype(o_ref.dtype)   # (C, D, M)
    for b in range(bb):
        o_ref[b] = prod[:, :, b * HW:(b + 1) * HW]


def _fused_vmem_limit(bb, Hp, Wp, Cin, Ws, Cmid, P, C, D, HW, w_bufs):
    M = bb * HW
    blocks = 2 * bb * Hp * Wp * Cin * 2                                 # input block x2
    blocks += w_bufs * ((9 * Cin + 9 * Cmid) * Cmid + Cmid * P) * 2     # bf16 weights
    blocks += w_bufs * (4 * Cmid + P) * 4                               # BN affine + bias
    blocks += 2 * bb * C * D * HW * 2                                   # output block x2
    blocks += bb * Hp * Ws * Cmid * 2                                   # halo scratch
    interm = (2 * M * Cmid + 2 * M * P + C * D * M + M * max(Cin, Cmid)) * 4
    need = blocks + interm + (8 << 20)
    # clamp to 48 MiB: safe under v7x's 64 MiB; v5e/v6e (128 MiB) are unaffected.
    return int(min(max(need, 32 << 20), 48 << 20))


def cam_encode_head_pallas(x_pad, prep, *, D, C):
    """x_pad: (B, H+2, W+2, Cin) bf16 zero-padded -> (B, C, D, H*W) bf16."""
    B, Hp, Wp, Cin = x_pad.shape
    H, W = Hp - 2, Wp - 2
    HW = H * W
    Cmid = prep["w1"].shape[-1]
    P = prep["wd"].shape[-1]
    bb = _pick_bb(B, HW)
    B_pad = _round_up(B, bb)
    if B_pad != B:
        x_pad = jnp.pad(x_pad, ((0, B_pad - B), (0, 0), (0, 0), (0, 0)))
    Ws = W + 2 * _PADL
    w_bufs = 1 if _buffered_ok() else 2

    kernel = functools.partial(_cam_encode_fused_kernel, H=H, W=W, D=D, C=C)
    out = pl.pallas_call(
        kernel,
        out_shape=jax.ShapeDtypeStruct((B_pad, C, D, HW), jnp.bfloat16),
        grid=(B_pad // bb,),
        in_specs=[
            pl.BlockSpec((bb, Hp, Wp, Cin), lambda i: (i, 0, 0, 0)),
            _const_spec((9, Cin, Cmid)),      # conv1 weight (tap-major)
            _const_spec((1, Cmid)),           # BN1 scale (folded)
            _const_spec((1, Cmid)),           # BN1 bias  (folded)
            _const_spec((9, Cmid, Cmid)),     # conv2 weight (tap-major)
            _const_spec((1, Cmid)),           # BN2 scale
            _const_spec((1, Cmid)),           # BN2 bias
            _const_spec((Cmid, P)),           # depthnet weight (lane padded)
            _const_spec((1, P)),              # depthnet bias   (lane padded)
        ],
        out_specs=pl.BlockSpec((bb, C, D, HW), lambda i: (i, 0, 0, 0)),
        scratch_shapes=[pltpu.VMEM((bb, Hp, Ws, Cmid), jnp.bfloat16)],
        compiler_params=pltpu.CompilerParams(
            dimension_semantics=("parallel",),
            vmem_limit_bytes=_fused_vmem_limit(bb, Hp, Wp, Cin, Ws, Cmid, P,
                                               C, D, HW, w_bufs)),
    )(x_pad, prep["w1"], prep["s1"], prep["b1"],
      prep["w2"], prep["s2"], prep["b2"], prep["wd"], prep["bd"])
    return out[:B]


# ----------------------------------------------------------------------------
# pure-JAX reference of the same math (same bf16 casts; exact softmax division)
# ----------------------------------------------------------------------------
def cam_encode_head_reference(x_pad, prep, *, D, C):
    B, Hp, Wp, _ = x_pad.shape
    H, W = Hp - 2, Wp - 2
    w1, w2, wd = prep["w1"], prep["w2"], prep["wd"]

    def conv3x3(xp, w):
        acc = None
        for k in range(9):
            dh, dw = divmod(k, 3)
            xs = xp[:, dh:dh + H, dw:dw + W, :]
            t = jnp.einsum("bhwc,co->bhwo", xs, w[k],
                           preferred_element_type=jnp.float32)
            acc = t if acc is None else acc + t
        return acc

    h1 = jnp.maximum(conv3x3(x_pad, w1) * prep["s1"] + prep["b1"], 0.0)
    h1p = jnp.pad(h1.astype(jnp.bfloat16), ((0, 0), (1, 1), (1, 1), (0, 0)))
    h2 = jnp.maximum(conv3x3(h1p, w2) * prep["s2"] + prep["b2"], 0.0)
    logits = jnp.einsum("bhwc,cp->bhwp", h2.astype(jnp.bfloat16), wd,
                        preferred_element_type=jnp.float32) + prep["bd"]
    dl, ctx = logits[..., :D], logits[..., D:D + C]
    e = jnp.exp(dl - jnp.max(dl, axis=-1, keepdims=True))
    depth = e / jnp.sum(e, axis=-1, keepdims=True)
    new = (ctx[..., :, None] * depth[..., None, :]).astype(jnp.bfloat16)   # (B,H,W,C,D)
    return jnp.transpose(new, (0, 3, 4, 1, 2))                             # (B,C,D,H,W)


# ----------------------------------------------------------------------------
# plain-JAX glue (trunk stub, bilinear upsample, BN folding)
# ----------------------------------------------------------------------------
def _bilinear_matrix(out_size, in_size):
    m = np.zeros((out_size, in_size), np.float32)
    if in_size == 1 or out_size == 1:
        m[:, 0] = 1.0
        return m
    src = np.arange(out_size, dtype=np.float64) * (in_size - 1) / (out_size - 1)
    lo = np.minimum(np.floor(src).astype(np.int64), in_size - 1)
    hi = np.minimum(lo + 1, in_size - 1)
    w = (src - lo).astype(np.float32)
    m[np.arange(out_size), lo] += 1.0 - w
    m[np.arange(out_size), hi] += w
    return m


def upsample_bilinear_x2_align_corners(x):
    _, H, W, _ = x.shape
    Wy = jnp.asarray(_bilinear_matrix(2 * H, H))
    Wx = jnp.asarray(_bilinear_matrix(2 * W, W))
    t = jnp.einsum("oh,bhwc->bowc", Wy, x)
    return jnp.einsum("pw,bowc->bopc", Wx, t)


def fold_bn(gamma, beta, mean, var, eps=1e-5):
    scale = gamma / jnp.sqrt(var + eps)
    bias = beta - mean * scale
    return scale[None, :], bias[None, :]


def cam_encode_forward(x_nchw, prep, *, D, C, use_pallas=True):
    # --- stub trunk (TODO(synk) above): reduction_4 / reduction_5 endpoints
    x = jnp.transpose(x_nchw, (0, 2, 3, 1)).astype(jnp.float32)       # NHWC

    def pool(t, k):
        b, h, w, c = t.shape
        return t.reshape(b, h // k, k, w // k, k, c).mean(axis=(2, 4))

    r4 = pool(x, 16) @ prep["trunk_w4"]          # (B, H/16, W/16, ch4)
    r5 = pool(x, 32) @ prep["trunk_w5"]          # (B, H/32, W/32, ch5)

    # --- Up block input: upsample r5 (bilinear x2, align_corners), concat
    up = upsample_bilinear_x2_align_corners(r5)
    cat = jnp.concatenate([r4, up], axis=-1)     # (B, H/16, W/16, in_ch)
    Bh, Hh, Wh, _ = cat.shape

    # zero pad H/W by 1 (conv1 halo) and cast once to bf16
    x_pad = jnp.pad(cat.astype(jnp.bfloat16), ((0, 0), (1, 1), (1, 1), (0, 0)))

    if use_pallas:
        flat = cam_encode_head_pallas(x_pad, prep, D=D, C=C)   # (B, C, D, Hh*Wh)
        return flat.reshape(Bh, C, D, Hh, Wh)                  # free minor-dim split
    return cam_encode_head_reference(x_pad, prep, D=D, C=C)


# ----------------------------------------------------------------------------
# parameter construction + one-time preprocessing
# ----------------------------------------------------------------------------
def make_params(key, *, ch5, ch4, out_ch, D, C):
    in_ch = ch5 + ch4
    ks = list(jax.random.split(key, 12))

    def nrm(k, shape, s=0.05):
        return s * jax.random.normal(k, shape, jnp.float32)

    return {
        "trunk_w5": nrm(ks[0], (3, ch5), 0.2),
        "trunk_w4": nrm(ks[1], (3, ch4), 0.2),
        "conv1_w": nrm(ks[2], (3, 3, in_ch, out_ch)),
        "conv2_w": nrm(ks[3], (3, 3, out_ch, out_ch)),
        "bn1_gamma": 1.0 + nrm(ks[4], (out_ch,), 0.1),
        "bn1_beta": nrm(ks[5], (out_ch,), 0.1),
        "bn1_mean": nrm(ks[6], (out_ch,), 0.1),
        "bn1_var": 1.0 + jnp.abs(nrm(ks[7], (out_ch,), 0.1)),
        "bn2_gamma": 1.0 + nrm(ks[8], (out_ch,), 0.1),
        "bn2_beta": nrm(ks[9], (out_ch,), 0.1),
        "bn2_mean": nrm(ks[10], (out_ch,), 0.1),
        "bn2_var": 1.0 + jnp.abs(nrm(ks[11], (out_ch,), 0.1)),
        "depthnet_w": nrm(jax.random.fold_in(key, 100), (out_ch, D + C), 0.1),
        "depthnet_b": nrm(jax.random.fold_in(key, 101), (D + C,), 0.1),
    }


def prepare_params(params, *, D, C):
    """One-time weight prep hoisted out of the jitted forward: bf16 casts,
    tap-major conv weights, folded BN, depthnet padded to a 128-lane multiple."""
    s1, b1 = fold_bn(params["bn1_gamma"], params["bn1_beta"],
                     params["bn1_mean"], params["bn1_var"])
    s2, b2 = fold_bn(params["bn2_gamma"], params["bn2_beta"],
                     params["bn2_mean"], params["bn2_var"])
    _, _, cin, cout = params["conv1_w"].shape
    P = _round_up(D + C, 128)
    wd = (jnp.zeros((cout, P), jnp.float32)
          .at[:, :D + C].set(params["depthnet_w"]).astype(jnp.bfloat16))
    bd = jnp.zeros((1, P), jnp.float32).at[0, :D + C].set(params["depthnet_b"])
    return {
        "trunk_w4": params["trunk_w4"], "trunk_w5": params["trunk_w5"],
        "w1": params["conv1_w"].reshape(9, cin, cout).astype(jnp.bfloat16),
        "w2": params["conv2_w"].reshape(9, cout, cout).astype(jnp.bfloat16),
        "s1": s1, "b1": b1, "s2": s2, "b2": b2,
        "wd": wd, "bd": bd,
    }


if __name__ == "__main__":
    # Small shapes consistent with the module (downsample=16 path); real LSS
    # uses ch5=320, ch4=112, out_ch=512, D=41, C=64 on (B*cams, 3, 128, 352).
    B, H, W = 2, 128, 128
    ch5, ch4, out_ch = 40, 24, 64
    D, C = 8, 16

    key = jax.random.PRNGKey(0)
    x = jax.random.normal(jax.random.fold_in(key, 7), (B, 3, H, W), jnp.float32)
    params = make_params(key, ch5=ch5, ch4=ch4, out_ch=out_ch, D=D, C=C)
    prep = prepare_params(params, D=D, C=C)

    _buffered_ok()  # probe pl.Buffered(1) support once, outside jit tracing

    fwd = jax.jit(functools.partial(cam_encode_forward, D=D, C=C, use_pallas=True))
    out = jax.block_until_ready(fwd(x, prep))

    # Expected PyTorch output shape: (B, C, D, H/16, W/16)
    assert out.shape == (B, C, D, H // 16, W // 16), out.shape

    ref_fn = jax.jit(functools.partial(cam_encode_forward, D=D, C=C,
                                       use_pallas=False))
    ref = jax.block_until_ready(ref_fn(x, prep))
    np.testing.assert_allclose(np.asarray(out.astype(jnp.float32)),
                               np.asarray(ref.astype(jnp.float32)),
                               rtol=2e-2, atol=3e-3)

    print("KERNEL_OK")
</pallas_src>

<mosaic_0001>
module attributes {stable_mosaic.version = 11 : i64} {
  func.func @_k(%arg0: i32, %arg1: memref<8x128xf32, #tpu.memory_space<vmem>>, %arg2: memref<8x128xf32, #tpu.memory_space<vmem>>) attributes {dimension_semantics = [#tpu.dimension_semantics<arbitrary>], iteration_bounds = array<i64: 1>, scalar_prefetch = 0 : i64, scratch_operands = 0 : i64, tpu.core_type = #tpu.core_type<tc>, window_params = [{pipeline_mode = #tpu.pipeline_mode<synchronous>, transform_indices = @transform_0, window_bounds = array<i64: 8, 128>}, {pipeline_mode = #tpu.pipeline_mode<synchronous>, transform_indices = @transform_1, window_bounds = array<i64: 8, 128>}]} {
    %c0 = arith.constant 0 : index
    %c0_0 = arith.constant 0 : index
    %0 = vector.load %arg1[%c0, %c0_0] : memref<8x128xf32, #tpu.memory_space<vmem>>, vector<8x128xf32>
    %cst = arith.constant 1.000000e+00 : f32
    %1 = vector.broadcast %cst : f32 to vector<8x128xf32>
    %2 = arith.addf %0, %1 : vector<8x128xf32>
    %c0_1 = arith.constant 0 : index
    %c0_2 = arith.constant 0 : index
    %3 = vector.load %arg2[%c0_1, %c0_2] : memref<8x128xf32, #tpu.memory_space<vmem>>, vector<8x128xf32>
    tpu.vector_store %arg2[%c0_1, %c0_2], %2 {strides = array<i32>} : memref<8x128xf32, #tpu.memory_space<vmem>>, vector<8x128xf32>,
    return
  }
  func.func @transform_0(%arg0: i32) -> (i32, i32) {
    %c0_i32 = arith.constant 0 : i32
    %c0_i32_0 = arith.constant 0 : i32
    %c0_i32_1 = arith.constant 0 : i32
    return %c0_i32, %c0_i32_0 : i32, i32
  }
  func.func @transform_1(%arg0: i32) -> (i32, i32) {
    %c0_i32 = arith.constant 0 : i32
    %c0_i32_0 = arith.constant 0 : i32
    %c0_i32_1 = arith.constant 0 : i32
    return %c0_i32, %c0_i32_0 : i32, i32
  }
}

module attributes {stable_mosaic.version = 11 : i64} {
  func.func @_cam_encode_fused_kernel(%arg0: i32, %arg1: memref<2x10x10x64xbf16, #tpu.memory_space<vmem>>, %arg2: memref<9x64x64xbf16, #tpu.memory_space<vmem>>, %arg3: memref<1x64xf32, #tpu.memory_space<vmem>>, %arg4: memref<1x64xf32, #tpu.memory_space<vmem>>, %arg5: memref<9x64x64xbf16, #tpu.memory_space<vmem>>, %arg6: memref<1x64xf32, #tpu.memory_space<vmem>>, %arg7: memref<1x64xf32, #tpu.memory_space<vmem>>, %arg8: memref<64x128xbf16, #tpu.memory_space<vmem>>, %arg9: memref<1x128xf32, #tpu.memory_space<vmem>>, %arg10: memref<2x16x8x64xbf16, #tpu.memory_space<vmem>>, %arg11: memref<2x10x24x64xbf16, #tpu.memory_space<vmem>>) attributes {dimension_semantics = [#tpu.dimension_semantics<parallel>], iteration_bounds = array<i64: 1>, scalar_prefetch = 0 : i64, scratch_operands = 1 : i64, tpu.core_type = #tpu.core_type<tc>, window_params = [{transform_indices = @transform_0, window_bounds = array<i64: 2, 10, 10, 64>}, {pipeline_mode = #tpu.pipeline_mode<synchronous>, transform_indices = @transform_1, window_bounds = array<i64: 9, 64, 64>}, {pipeline_mode = #tpu.pipeline_mode<synchronous>, transform_indices = @transform_2, window_bounds = array<i64: 1, 64>}, {pipeline_mode = #tpu.pipeline_mode<synchronous>, transform_indices = @transform_3, window_bounds = array<i64: 1, 64>}, {pipeline_mode = #tpu.pipeline_mode<synchronous>, transform_indices = @transform_4, window_bounds = array<i64: 9, 64, 64>}, {pipeline_mode = #tpu.pipeline_mode<synchronous>, transform_indices = @transform_5, window_bounds = array<i64: 1, 64>}, {pipeline_mode = #tpu.pipeline_mode<synchronous>, transform_indices = @transform_6, window_bounds = array<i64: 1, 64>}, {pipeline_mode = #tpu.pipeline_mode<synchronous>, transform_indices = @transform_7, window_bounds = array<i64: 64, 128>}, {pipeline_mode = #tpu.pipeline_mode<synchronous>, transform_indices = @transform_8, window_bounds = array<i64: 1, 128>}, {transform_indices = @transform_9, window_bounds = array<i64: 2, 16, 8, 64>}]} {
    %c0 = arith.constant 0 : index
    %c0_0 = arith.constant 0 : index
    %c0_1 = arith.constant 0 : index
    %c0_2 = arith.constant 0 : index
    %0 = vector.load %arg1[%c0, %c0_0, %c0_1, %c0_2] : memref<2x10x10x64xbf16, #tpu.memory_space<vmem>>, vector<2x8x8x64xbf16>
    %1 = vector.shape_cast %0 : vector<2x8x8x64xbf16> to vector<128x64xbf16>
    %c0_3 = arith.constant 0 : index
    %c0_4 = arith.constant 0 : index
    %c0_5 = arith.constant 0 : index
    %2 = vector.load %arg2[%c0_3, %c0_4, %c0_5] : memref<9x64x64xbf16, #tpu.memory_space<vmem>>, vector<1x64x64xbf16>
    %3 = vector.shape_cast %2 : vector<1x64x64xbf16> to vector<64x64xbf16>
    %cst = arith.constant dense<0.000000e+00> : vector<128x64xf32>
    %4 = tpu.matmul %1, %3, %cst {dimension_numbers = #tpu.dot_dimension_numbers<[1], [0], [0], [1], [0, 0, 1, 1], [], []>} : vector<128x64xbf16>, vector<64x64xbf16>, vector<128x64xf32> -> vector<128x64xf32>
    %c0_6 = arith.constant 0 : index
    %c0_7 = arith.constant 0 : index
    %c1 = arith.constant 1 : index
    %c0_8 = arith.constant 0 : index
    %5 = vector.load %arg1[%c0_6, %c0_7, %c1, %c0_8] : memref<2x10x10x64xbf16, #tpu.memory_space<vmem>>, vector<2x8x8x64xbf16>
    %6 = vector.shape_cast %5 : vector<2x8x8x64xbf16> to vector<128x64xbf16>
    %c1_9 = arith.constant 1 : index
    %c0_10 = arith.constant 0 : index
    %c0_11 = arith.constant 0 : index
    %7 = vector.load %arg2[%c1_9, %c0_10, %c0_11] : memref<9x64x64xbf16, #tpu.memory_space<vmem>>, vector<1x64x64xbf16>
    %8 = vector.shape_cast %7 : vector<1x64x64xbf16> to vector<64x64xbf16>
    %cst_12 = arith.constant dense<0.000000e+00> : vector<128x64xf32>
    %9 = tpu.matmul %6, %8, %cst_12 {dimension_numbers = #tpu.dot_dimension_numbers<[1], [0], [0], [1], [0, 0, 1, 1], [], []>} : vector<128x64xbf16>, vector<64x64xbf16>, vector<128x64xf32> -> vector<128x64xf32>
    %10 = arith.addf %4, %9 : vector<128x64xf32>
    %c0_13 = arith.constant 0 : index
    %c0_14 = arith.constant 0 : index
    %c2 = arith.constant 2 : index
    %c0_15 = arith.constant 0 : index
    %11 = vector.load %arg1[%c0_13, %c0_14, %c2, %c0_15] : memref<2x10x10x64xbf16, #tpu.memory_space<vmem>>, vector<2x8x8x64xbf16>
    %12 = vector.shape_cast %11 : vector<2x8x8x64xbf16> to vector<128x64xbf16>
    %c2_16 = arith.constant 2 : index
    %c0_17 = arith.constant 0 : index
    %c0_18 = arith.constant 0 : index
    %13 = vector.load %arg2[%c2_16, %c0_17, %c0_18] : memref<9x64x64xbf16, #tpu.memory_space<vmem>>, vector<1x64x64xbf16>
    %14 = vector.shape_cast %13 : vector<1x64x64xbf16> to vector<64x64xbf16>
    %cst_19 = arith.constant dense<0.000000e+00> : vector<128x64xf32>
    %15 = tpu.matmul %12, %14, %cst_19 {dimension_numbers = #tpu.dot_dimension_numbers<[1], [0], [0], [1], [0, 0, 1, 1], [], []>} : vector<128x64xbf16>, vector<64x64xbf16>, vector<128x64xf32> -> vector<128x64xf32>
    %16 = arith.addf %10, %15 : vector<128x64xf32>
    %c0_20 = arith.constant 0 : index
    %c1_21 = arith.constant 1 : index
    %c0_22 = arith.constant 0 : index
    %c0_23 = arith.constant 0 : index
    %17 = vector.load %arg1[%c0_20, %c1_21, %c0_22, %c0_23] : memref<2x10x10x64xbf16, #tpu.memory_space<vmem>>, vector<2x8x8x64xbf16>
    %18 = vector.shape_cast %17 : vector<2x8x8x64xbf16> to vector<128x64xbf16>
    %c3 = arith.constant 3 : index
    %c0_24 = arith.constant 0 : index
    %c0_25 = arith.constant 0 : index
    %19 = vector.load %arg2[%c3, %c0_24, %c0_25] : memref<9x64x64xbf16, #tpu.memory_space<vmem>>, vector<1x64x64xbf16>
    %20 = vector.shape_cast %19 : vector<1x64x64xbf16> to vector<64x64xbf16>
    %cst_26 = arith.constant dense<0.000000e+00> : vector<128x64xf32>
    %21 = tpu.matmul %18, %20, %cst_26 {dimension_numbers = #tpu.dot_dimension_numbers<[1], [0], [0], [1], [0, 0, 1, 1], [], []>} : vector<128x64xbf16>, vector<64x64xbf16>, vector<128x64xf32> -> vector<128x64xf32>
    %22 = arith.addf %16, %21 : vector<128x64xf32>
    %c0_27 = arith.constant 0 : index
    %c1_28 = arith.constant 1 : index
    %c1_29 = arith.constant 1 : index
    %c0_30 = arith.constant 0 : index
    %23 = vector.load %arg1[%c0_27, %c1_28, %c1_29, %c0_30] : memref<2x10x10x64xbf16, #tpu.memory_space<vmem>>, vector<2x8x8x64xbf16>
    %24 = vector.shape_cast %23 : vector<2x8x8x64xbf16> to vector<128x64xbf16>
    %c4 = arith.constant 4 : index
    %c0_31 = arith.constant 0 : index
    %c0_32 = arith.constant 0 : index
    %25 = vector.load %arg2[%c4, %c0_31, %c0_32] : memref<9x64x64xbf16, #tpu.memory_space<vmem>>, vector<1x64x64xbf16>
    %26 = vector.shape_cast %25 : vector<1x64x64xbf16> to vector<64x64xbf16>
    %cst_33 = arith.constant dense<0.000000e+00> : vector<128x64xf32>
    %27 = tpu.matmul %24, %26, %cst_33 {dimension_numbers = #tpu.dot_dimension_numbers<[1], [0], [0], [1], [0, 0, 1, 1], [], []>} : vector<128x64xbf16>, vector<64x64xbf16>, vector<128x64xf32> -> vector<128x64xf32>
    %28 = arith.addf %22, %27 : vector<128x64xf32>
    %c0_34 = arith.constant 0 : index
    %c1_35 = arith.constant 1 : index
    %c2_36 = arith.constant 2 : index
    %c0_37 = arith.constant 0 : index
    %29 = vector.load %arg1[%c0_34, %c1_35, %c2_36, %c0_37] : memref<2x10x10x64xbf16, #tpu.memory_space<vmem>>, vector<2x8x8x64xbf16>
    %30 = vector.shape_cast %29 : vector<2x8x8x64xbf16> to vector<128x64xbf16>
    %c5 = arith.constant 5 : index
    %c0_38 = arith.constant 0 : index
    %c0_39 = arith.constant 0 : index
    %31 = vector.load %arg2[%c5, %c0_38, %c0_39] : memref<9x64x64xbf16, #tpu.memory_space<vmem>>, vector<1x64x64xbf16>
    %32 = vector.shape_cast %31 : vector<1x64x64xbf16> to vector<64x64xbf16>
    %cst_40 = arith.constant dense<0.000000e+00> : vector<128x64xf32>
    %33 = tpu.matmul %30, %32, %cst_40 {dimension_numbers = #tpu.dot_dimension_numbers<[1], [0], [0], [1], [0, 0, 1, 1], [], []>} : vector<128x64xbf16>, vector<64x64xbf16>, vector<128x64xf32> -> vector<128x64xf32>
    %34 = arith.addf %28, %33 : vector<128x64xf32>
    %c0_41 = arith.constant 0 : index
    %c2_42 = arith.constant 2 : index
    %c0_43 = arith.constant 0 : index
    %c0_44 = arith.constant 0 : index
    %35 = vector.load %arg1[%c0_41, %c2_42, %c0_43, %c0_44] : memref<2x10x10x64xbf16, #tpu.memory_space<vmem>>, vector<2x8x8x64xbf16>
    %36 = vector.shape_cast %35 : vector<2x8x8x64xbf16> to vector<128x64xbf16>
    %c6 = arith.constant 6 : index
    %c0_45 = arith.constant 0 : index
    %c0_46 = arith.constant 0 : index
    %37 = vector.load %arg2[%c6, %c0_45, %c0_46] : memref<9x64x64xbf16, #tpu.memory_space<vmem>>, vector<1x64x64xbf16>
    %38 = vector.shape_cast %37 : vector<1x64x64xbf16> to vector<64x64xbf16>
    %cst_47 = arith.constant dense<0.000000e+00> : vector<128x64xf32>
    %39 = tpu.matmul %36, %38, %cst_47 {dimension_numbers = #tpu.dot_dimension_numbers<[1], [0], [0], [1], [0, 0, 1, 1], [], []>} : vector<128x64xbf16>, vector<64x64xbf16>, vector<128x64xf32> -> vector<128x64xf32>
    %40 = arith.addf %34, %39 : vector<128x64xf32>
    %c0_48 = arith.constant 0 : index
    %c2_49 = arith.constant 2 : index
    %c1_50 = arith.constant 1 : index
    %c0_51 = arith.constant 0 : index
    %41 = vector.load %arg1[%c0_48, %c2_49, %c1_50, %c0_51] : memref<2x10x10x64xbf16, #tpu.memory_space<vmem>>, vector<2x8x8x64xbf16>
    %42 = vector.shape_cast %41 : vector<2x8x8x64xbf16> to vector<128x64xbf16>
    %c7 = arith.constant 7 : index
    %c0_52 = arith.constant 0 : index
    %c0_53 = arith.constant 0 : index
    %43 = vector.load %arg2[%c7, %c0_52, %c0_53] : memref<9x64x64xbf16, #tpu.memory_space<vmem>>, vector<1x64x64xbf16>
    %44 = vector.shape_cast %43 : vector<1x64x64xbf16> to vector<64x64xbf16>
    %cst_54 = arith.constant dense<0.000000e+00> : vector<128x64xf32>
    %45 = tpu.matmul %42, %44, %cst_54 {dimension_numbers = #tpu.dot_dimension_numbers<[1], [0], [0], [1], [0, 0, 1, 1], [], []>} : vector<128x64xbf16>, vector<64x64xbf16>, vector<128x64xf32> -> vector<128x64xf32>
    %46 = arith.addf %40, %45 : vector<128x64xf32>
    %c0_55 = arith.constant 0 : index
    %c2_56 = arith.constant 2 : index
    %c2_57 = arith.constant 2 : index
    %c0_58 = arith.constant 0 : index
    %47 = vector.load %arg1[%c0_55, %c2_56, %c2_57, %c0_58] : memref<2x10x10x64xbf16, #tpu.memory_space<vmem>>, vector<2x8x8x64xbf16>
    %48 = vector.shape_cast %47 : vector<2x8x8x64xbf16> to vector<128x64xbf16>
    %c8 = arith.constant 8 : index
    %c0_59 = arith.constant 0 : index
    %c0_60 = arith.constant 0 : index
    %49 = vector.load %arg2[%c8, %c0_59, %c0_60] : memref<9x64x64xbf16, #tpu.memory_space<vmem>>, vector<1x64x64xbf16>
    %50 = vector.shape_cast %49 : vector<1x64x64xbf16> to vector<64x64xbf16>
    %cst_61 = arith.constant dense<0.000000e+00> : vector<128x64xf32>
    %51 = tpu.matmul %48, %50, %cst_61 {dimension_numbers = #tpu.dot_dimension_numbers<[1], [0], [0], [1], [0, 0, 1, 1], [], []>} : vector<128x64xbf16>, vector<64x64xbf16>, vector<128x64xf32> -> vector<128x64xf32>
    %52 = arith.addf %46, %51 : vector<128x64xf32>
    %c0_62 = arith.constant 0 : index
    %c0_63 = arith.constant 0 : index
    %53 = vector.load %arg3[%c0_62, %c0_63] : memref<1x64xf32, #tpu.memory_space<vmem>>, vector<1x64xf32>
    %54 = vector.broadcast %53 : vector<1x64xf32> to vector<128x64xf32>
    %55 = arith.mulf %52, %54 : vector<128x64xf32>
    %c0_64 = arith.constant 0 : index
    %c0_65 = arith.constant 0 : index
    %56 = vector.load %arg4[%c0_64, %c0_65] : memref<1x64xf32, #tpu.memory_space<vmem>>, vector<1x64xf32>
    %57 = vector.broadcast %56 : vector<1x64xf32> to vector<128x64xf32>
    %58 = arith.addf %55, %57 : vector<128x64xf32>
    %cst_66 = arith.constant 0.000000e+00 : f32
    %59 = vector.broadcast %cst_66 : f32 to vector<128x64xf32>
    %60 = arith.maximumf %58, %59 : vector<128x64xf32>
    %cst_67 = arith.constant 0.000000e+00 : bf16
    %61 = vector.broadcast %cst_67 : bf16 to vector<2x10x24x64xbf16>
    %c0_68 = arith.constant 0 : index
    %c0_69 = arith.constant 0 : index
    %c0_70 = arith.constant 0 : index
    %c0_71 = arith.constant 0 : index
    %62 = vector.load %arg11[%c0_68, %c0_69, %c0_70, %c0_71] : memref<2x10x24x64xbf16, #tpu.memory_space<vmem>>, vector<2x10x24x64xbf16>
    tpu.vector_store %arg11[%c0_68, %c0_69, %c0_70, %c0_71], %61 {strides = array<i32>} : memref<2x10x24x64xbf16, #tpu.memory_space<vmem>>, vector<2x10x24x64xbf16>,
    %63 = arith.truncf %60 : vector<128x64xf32> to vector<128x64xbf16>
    %64 = vector.shape_cast %63 : vector<128x64xbf16> to vector<2x8x8x64xbf16>
    %c0_72 = arith.constant 0 : index
    %c1_73 = arith.constant 1 : index
    %c8_74 = arith.constant 8 : index
    %c0_75 = arith.constant 0 : index
    %65 = vector.load %arg11[%c0_72, %c1_73, %c8_74, %c0_75] : memref<2x10x24x64xbf16, #tpu.memory_space<vmem>>, vector<2x8x8x64xbf16>
    tpu.vector_store %arg11[%c0_72, %c1_73, %c8_74, %c0_75], %64 {strides = array<i32>} : memref<2x10x24x64xbf16, #tpu.memory_space<vmem>>, vector<2x8x8x64xbf16>,
    %c0_76 = arith.constant 0 : index
    %c0_77 = arith.constant 0 : index
    %c7_78 = arith.constant 7 : index
    %c0_79 = arith.constant 0 : index
    %66 = vector.load %arg11[%c0_76, %c0_77, %c7_78, %c0_79] : memref<2x10x24x64xbf16, #tpu.memory_space<vmem>>, vector<2x8x8x64xbf16>
    %67 = vector.shape_cast %66 : vector<2x8x8x64xbf16> to vector<128x64xbf16>
    %c0_80 = arith.constant 0 : index
    %c0_81 = arith.constant 0 : index
    %c0_82 = arith.constant 0 : index
    %68 = vector.load %arg5[%c0_80, %c0_81, %c0_82] : memref<9x64x64xbf16, #tpu.memory_space<vmem>>, vector<1x64x64xbf16>
    %69 = vector.shape_cast %68 : vector<1x64x64xbf16> to vector<64x64xbf16>
    %cst_83 = arith.constant dense<0.000000e+00> : vector<128x64xf32>
    %70 = tpu.matmul %67, %69, %cst_83 {dimension_numbers = #tpu.dot_dimension_numbers<[1], [0], [0], [1], [0, 0, 1, 1], [], []>} : vector<128x64xbf16>, vector<64x64xbf16>, vector<128x64xf32> -> vector<128x64xf32>
    %c0_84 = arith.constant 0 : index
    %c0_85 = arith.constant 0 : index
    %c8_86 = arith.constant 8 : index
    %c0_87 = arith.constant 0 : index
    %71 = vector.load %arg11[%c0_84, %c0_85, %c8_86, %c0_87] : memref<2x10x24x64xbf16, #tpu.memory_space<vmem>>, vector<2x8x8x64xbf16>
    %72 = vector.shape_cast %71 : vector<2x8x8x64xbf16> to vector<128x64xbf16>
    %c1_88 = arith.constant 1 : index
    %c0_89 = arith.constant 0 : index
    %c0_90 = arith.constant 0 : index
    %73 = vector.load %arg5[%c1_88, %c0_89, %c0_90] : memref<9x64x64xbf16, #tpu.memory_space<vmem>>, vector<1x64x64xbf16>
    %74 = vector.shape_cast %73 : vector<1x64x64xbf16> to vector<64x64xbf16>
    %cst_91 = arith.constant dense<0.000000e+00> : vector<128x64xf32>
    %75 = tpu.matmul %72, %74, %cst_91 {dimension_numbers = #tpu.dot_dimension_numbers<[1], [0], [0], [1], [0, 0, 1, 1], [], []>} : vector<128x64xbf16>, vector<64x64xbf16>, vector<128x64xf32> -> vector<128x64xf32>
    %76 = arith.addf %70, %75 : vector<128x64xf32>
    %c0_92 = arith.constant 0 : index
    %c0_93 = arith.constant 0 : index
    %c9 = arith.constant 9 : index
    %c0_94 = arith.constant 0 : index
    %77 = vector.load %arg11[%c0_92, %c0_93, %c9, %c0_94] : memref<2x10x24x64xbf16, #tpu.memory_space<vmem>>, vector<2x8x8x64xbf16>
    %78 = vector.shape_cast %77 : vector<2x8x8x64xbf16> to vector<128x64xbf16>
    %c2_95 = arith.constant 2 : index
    %c0_96 = arith.constant 0 : index
    %c0_97 = arith.constant 0 : index
    %79 = vector.load %arg5[%c2_95, %c0_96, %c0_97] : memref<9x64x64xbf16, #tpu.memory_space<vmem>>, vector<1x64x64xbf16>
    %80 = vector.shape_cast %79 : vector<1x64x64xbf16> to vector<64x64xbf16>
    %cst_98 = arith.constant dense<0.000000e+00> : vector<128x64xf32>
    %81 = tpu.matmul %78, %80, %cst_98 {dimension_numbers = #tpu.dot_dimension_numbers<[1], [0], [0], [1], [0, 0, 1, 1], [], []>} : vector<128x64xbf16>, vector<64x64xbf16>, vector<128x64xf32> -> vector<128x64xf32>
    %82 = arith.addf %76, %81 : vector<128x64xf32>
    %c0_99 = arith.constant 0 : index
    %c1_100 = arith.constant 1 : index
    %c7_101 = arith.constant 7 : index
    %c0_102 = arith.constant 0 : index
    %83 = vector.load %arg11[%c0_99, %c1_100, %c7_101, %c0_102] : memref<2x10x24x64xbf16, #tpu.memory_space<vmem>>, vector<2x8x8x64xbf16>
    %84 = vector.shape_cast %83 : vector<2x8x8x64xbf16> to vector<128x64xbf16>
    %c3_103 = arith.constant 3 : index
    %c0_104 = arith.constant 0 : index
    %c0_105 = arith.constant 0 : index
    %85 = vector.load %arg5[%c3_103, %c0_104, %c0_105] : memref<9x64x64xbf16, #tpu.memory_space<vmem>>, vector<1x64x64xbf16>
    %86 = vector.shape_cast %85 : vector<1x64x64xbf16> to vector<64x64xbf16>
    %cst_106 = arith.constant dense<0.000000e+00> : vector<128x64xf32>
    %87 = tpu.matmul %84, %86, %cst_106 {dimension_numbers = #tpu.dot_dimension_numbers<[1], [0], [0], [1], [0, 0, 1, 1], [], []>} : vector<128x64xbf16>, vector<64x64xbf16>, vector<128x64xf32> -> vector<128x64xf32>
    %88 = arith.addf %82, %87 : vector<128x64xf32>
    %c0_107 = arith.constant 0 : index
    %c1_108 = arith.constant 1 : index
    %c8_109 = arith.constant 8 : index
    %c0_110 = arith.constant 0 : index
    %89 = vector.load %arg11[%c0_107, %c1_108, %c8_109, %c0_110] : memref<2x10x24x64xbf16, #tpu.memory_space<vmem>>, vector<2x8x8x64xbf16>
    %90 = vector.shape_cast %89 : vector<2x8x8x64xbf16> to vector<128x64xbf16>
    %c4_111 = arith.constant 4 : index
    %c0_112 = arith.constant 0 : index
    %c0_113 = arith.constant 0 : index
    %91 = vector.load %arg5[%c4_111, %c0_112, %c0_113] : memref<9x64x64xbf16, #tpu.memory_space<vmem>>, vector<1x64x64xbf16>
    %92 = vector.shape_cast %91 : vector<1x64x64xbf16> to vector<64x64xbf16>
    %cst_114 = arith.constant dense<0.000000e+00> : vector<128x64xf32>
    %93 = tpu.matmul %90, %92, %cst_114 {dimension_numbers = #tpu.dot_dimension_numbers<[1], [0], [0], [1], [0, 0, 1, 1], [], []>} : vector<128x64xbf16>, vector<64x64xbf16>, vector<128x64xf32> -> vector<128x64xf32>
    %94 = arith.addf %88, %93 : vector<128x64xf32>
    %c0_115 = arith.constant 0 : index
    %c1_116 = arith.constant 1 : index
    %c9_117 = arith.constant 9 : index
    %c0_118 = arith.constant 0 : index
    %95 = vector.load %arg11[%c0_115, %c1_116, %c9_117, %c0_118] : memref<2x10x24x64xbf16, #tpu.memory_space<vmem>>, vector<2x8x8x64xbf16>
    %96 = vector.shape_cast %95 : vector<2x8x8x64xbf16> to vector<128x64xbf16>
    %c5_119 = arith.constant 5 : index
    %c0_120 = arith.constant 0 : index
    %c0_121 = arith.constant 0 : index
    %97 = vector.load %arg5[%c5_119, %c0_120, %c0_121] : memref<9x64x64xbf16, #tpu.memory_space<vmem>>, vector<1x64x64xbf16>
    %98 = vector.shape_cast %97 : vector<1x64x64xbf16> to vector<64x64xbf16>
    %cst_122 = arith.constant dense<0.000000e+00> : vector<128x64xf32>
    %99 = tpu.matmul %96, %98, %cst_122 {dimension_numbers = #tpu.dot_dimension_numbers<[1], [0], [0], [1], [0, 0, 1, 1], [], []>} : vector<128x64xbf16>, vector<64x64xbf16>, vector<128x64xf32> -> vector<128x64xf32>
    %100 = arith.addf %94, %99 : vector<128x64xf32>
    %c0_123 = arith.constant 0 : index
    %c2_124 = arith.constant 2 : index
    %c7_125 = arith.constant 7 : index
    %c0_126 = arith.constant 0 : index
    %101 = vector.load %arg11[%c0_123, %c2_124, %c7_125, %c0_126] : memref<2x10x24x64xbf16, #tpu.memory_space<vmem>>, vector<2x8x8x64xbf16>
    %102 = vector.shape_cast %101 : vector<2x8x8x64xbf16> to vector<128x64xbf16>
    %c6_127 = arith.constant 6 : index
    %c0_128 = arith.constant 0 : index
    %c0_129 = arith.constant 0 : index
    %103 = vector.load %arg5[%c6_127, %c0_128, %c0_129] : memref<9x64x64xbf16, #tpu.memory_space<vmem>>, vector<1x64x64xbf16>
    %104 = vector.shape_cast %103 : vector<1x64x64xbf16> to vector<64x64xbf16>
    %cst_130 = arith.constant dense<0.000000e+00> : vector<128x64xf32>
    %105 = tpu.matmul %102, %104, %cst_130 {dimension_numbers = #tpu.dot_dimension_numbers<[1], [0], [0], [1], [0, 0, 1, 1], [], []>} : vector<128x64xbf16>, vector<64x64xbf16>, vector<128x64xf32> -> vector<128x64xf32>
    %106 = arith.addf %100, %105 : vector<128x64xf32>
    %c0_131 = arith.constant 0 : index
    %c2_132 = arith.constant 2 : index
    %c8_133 = arith.constant 8 : index
    %c0_134 = arith.constant 0 : index
    %107 = vector.load %arg11[%c0_131, %c2_132, %c8_133, %c0_134] : memref<2x10x24x64xbf16, #tpu.memory_space<vmem>>, vector<2x8x8x64xbf16>
    %108 = vector.shape_cast %107 : vector<2x8x8x64xbf16> to vector<128x64xbf16>
    %c7_135 = arith.constant 7 : index
    %c0_136 = arith.constant 0 : index
    %c0_137 = arith.constant 0 : index
    %109 = vector.load %arg5[%c7_135, %c0_136, %c0_137] : memref<9x64x64xbf16, #tpu.memory_space<vmem>>, vector<1x64x64xbf16>
    %110 = vector.shape_cast %109 : vector<1x64x64xbf16> to vector<64x64xbf16>
    %cst_138 = arith.constant dense<0.000000e+00> : vector<128x64xf32>
    %111 = tpu.matmul %108, %110, %cst_138 {dimension_numbers = #tpu.dot_dimension_numbers<[1], [0], [0], [1], [0, 0, 1, 1], [], []>} : vector<128x64xbf16>, vector<64x64xbf16>, vector<128x64xf32> -> vector<128x64xf32>
    %112 = arith.addf %106, %111 : vector<128x64xf32>
    %c0_139 = arith.constant 0 : index
    %c2_140 = arith.constant 2 : index
    %c9_141 = arith.constant 9 : index
    %c0_142 = arith.constant 0 : index
    %113 = vector.load %arg11[%c0_139, %c2_140, %c9_141, %c0_142] : memref<2x10x24x64xbf16, #tpu.memory_space<vmem>>, vector<2x8x8x64xbf16>
    %114 = vector.shape_cast %113 : vector<2x8x8x64xbf16> to vector<128x64xbf16>
    %c8_143 = arith.constant 8 : index
    %c0_144 = arith.constant 0 : index
    %c0_145 = arith.constant 0 : index
    %115 = vector.load %arg5[%c8_143, %c0_144, %c0_145] : memref<9x64x64xbf16, #tpu.memory_space<vmem>>, vector<1x64x64xbf16>
    %116 = vector.shape_cast %115 : vector<1x64x64xbf16> to vector<64x64xbf16>
    %cst_146 = arith.constant dense<0.000000e+00> : vector<128x64xf32>
    %117 = tpu.matmul %114, %116, %cst_146 {dimension_numbers = #tpu.dot_dimension_numbers<[1], [0], [0], [1], [0, 0, 1, 1], [], []>} : vector<128x64xbf16>, vector<64x64xbf16>, vector<128x64xf32> -> vector<128x64xf32>
    %118 = arith.addf %112, %117 : vector<128x64xf32>
    %c0_147 = arith.constant 0 : index
    %c0_148 = arith.constant 0 : index
    %119 = vector.load %arg6[%c0_147, %c0_148] : memref<1x64xf32, #tpu.memory_space<vmem>>, vector<1x64xf32>
    %120 = vector.broadcast %119 : vector<1x64xf32> to vector<128x64xf32>
    %121 = arith.mulf %118, %120 : vector<128x64xf32>
    %c0_149 = arith.constant 0 : index
    %c0_150 = arith.constant 0 : index
    %122 = vector.load %arg7[%c0_149, %c0_150] : memref<1x64xf32, #tpu.memory_space<vmem>>, vector<1x64xf32>
    %123 = vector.broadcast %122 : vector<1x64xf32> to vector<128x64xf32>
    %124 = arith.addf %121, %123 : vector<128x64xf32>
    %cst_151 = arith.constant 0.000000e+00 : f32
    %125 = vector.broadcast %cst_151 : f32 to vector<128x64xf32>
    %126 = arith.maximumf %124, %125 : vector<128x64xf32>
    %127 = arith.truncf %126 : vector<128x64xf32> to vector<128x64xbf16>
    %c0_152 = arith.constant 0 : index
    %c0_153 = arith.constant 0 : index
    %128 = vector.load %arg8[%c0_152, %c0_153] : memref<64x128xbf16, #tpu.memory_space<vmem>>, vector<64x128xbf16>
    %cst_154 = arith.constant dense<0.000000e+00> : vector<128x128xf32>
    %129 = tpu.matmul %127, %128, %cst_154 {dimension_numbers = #tpu.dot_dimension_numbers<[1], [0], [0], [1], [0, 0, 1, 1], [], []>} : vector<128x64xbf16>, vector<64x128xbf16>, vector<128x128xf32> -> vector<128x128xf32>
    %c0_155 = arith.constant 0 : index
    %c0_156 = arith.constant 0 : index
    %130 = vector.load %arg9[%c0_155, %c0_156] : memref<1x128xf32, #tpu.memory_space<vmem>>, vector<1x128xf32>
    %131 = vector.broadcast %130 : vector<1x128xf32> to vector<128x128xf32>
    %132 = arith.addf %129, %131 : vector<128x128xf32>
    %133 = tpu.transpose %132, [1, 0] : vector<128x128xf32> -> vector<128x128xf32>
    %134 = vector.extract_strided_slice %133 {offsets = [0, 0], sizes = [8, 128], strides = [1, 1]} : vector<128x128xf32> to vector<8x128xf32>
    %135 = vector.extract_strided_slice %133 {offsets = [8, 0], sizes = [16, 128], strides = [1, 1]} : vector<128x128xf32> to vector<16x128xf32>
    %cst_157 = arith.constant dense<0xFF800000> : vector<128xf32>
    %136 = vector.multi_reduction <maximumf>, %134, %cst_157 [0] : vector<8x128xf32> to vector<128xf32>
    %137 = vector.shape_cast %136 : vector<128xf32> to vector<1x128xf32>
    %138 = vector.broadcast %137 : vector<1x128xf32> to vector<8x128xf32>
    %139 = arith.subf %134, %138 : vector<8x128xf32>
    %140 = math.exp %139 : vector<8x128xf32>
    %cst_158 = arith.constant dense<0.000000e+00> : vector<128xf32>
    %141 = vector.multi_reduction <add>, %140, %cst_158 [0] : vector<8x128xf32> to vector<128xf32>
    %142 = vector.shape_cast %141 : vector<128xf32> to vector<1x128xf32>
    %143 = tpu.reciprocal %142 {approx = true} : vector<1x128xf32> -> vector<1x128xf32>
    %144 = vector.broadcast %143 : vector<1x128xf32> to vector<8x128xf32>
    %145 = arith.mulf %140, %144 : vector<8x128xf32>
    %146 = vector.shape_cast %135 : vector<16x128xf32> to vector<16x1x128xf32>
    %147 = vector.shape_cast %145 : vector<8x128xf32> to vector<1x8x128xf32>
    %148 = vector.broadcast %146 : vector<16x1x128xf32> to vector<16x8x128xf32>
    %149 = vector.broadcast %147 : vector<1x8x128xf32> to vector<16x8x128xf32>
    %150 = arith.mulf %148, %149 : vector<16x8x128xf32>
    %151 = arith.truncf %150 : vector<16x8x128xf32> to vector<16x8x128xbf16>
    %152 = vector.extract_strided_slice %151 {offsets = [0, 0, 0], sizes = [16, 8, 64], strides = [1, 1, 1]} : vector<16x8x128xbf16> to vector<16x8x64xbf16>
    %c0_159 = arith.constant 0 : index
    %c0_160 = arith.constant 0 : index
    %c0_161 = arith.constant 0 : index
    %c0_162 = arith.constant 0 : index
    %153 = vector.load %arg10[%c0_159, %c0_160, %c0_161, %c0_162] : memref<2x16x8x64xbf16, #tpu.memory_space<vmem>>, vector<1x16x8x64xbf16>
    %154 = vector.shape_cast %153 : vector<1x16x8x64xbf16> to vector<16x8x64xbf16>
    %155 = vector.shape_cast %152 : vector<16x8x64xbf16> to vector<1x16x8x64xbf16>
    tpu.vector_store %arg10[%c0_159, %c0_160, %c0_161, %c0_162], %155 {strides = array<i32>} : memref<2x16x8x64xbf16, #tpu.memory_space<vmem>>, vector<1x16x8x64xbf16>,
    %156 = vector.extract_strided_slice %151 {offsets = [0, 0, 64], sizes = [16, 8, 64], strides = [1, 1, 1]} : vector<16x8x128xbf16> to vector<16x8x64xbf16>
    %c1_163 = arith.constant 1 : index
    %c0_164 = arith.constant 0 : index
    %c0_165 = arith.constant 0 : index
    %c0_166 = arith.constant 0 : index
    %157 = vector.load %arg10[%c1_163, %c0_164, %c0_165, %c0_166] : memref<2x16x8x64xbf16, #tpu.memory_space<vmem>>, vector<1x16x8x64xbf16>
    %158 = vector.shape_cast %157 : vector<1x16x8x64xbf16> to vector<16x8x64xbf16>
    %159 = vector.shape_cast %156 : vector<16x8x64xbf16> to vector<1x16x8x64xbf16>
    tpu.vector_store %arg10[%c1_163, %c0_164, %c0_165, %c0_166], %159 {strides = array<i32>} : memref<2x16x8x64xbf16, #tpu.memory_space<vmem>>, vector<1x16x8x64xbf16>,
    return
  }
  func.func @transform_0(%arg0: i32) -> (i32, i32, i32, i32) {
    %c0_i32 = arith.constant 0 : i32
    %c0_i32_0 = arith.constant 0 : i32
    %c0_i32_1 = arith.constant 0 : i32
    %c0_i32_2 = arith.constant 0 : i32
    return %arg0, %c0_i32, %c0_i32_0, %c0_i32_1 : i32, i32, i32, i32
  }
  func.func @transform_1(%arg0: i32) -> (i32, i32, i32) {
    %c0_i32 = arith.constant 0 : i32
    %c0_i32_0 = arith.constant 0 : i32
    %c0_i32_1 = arith.constant 0 : i32
    %c0_i32_2 = arith.constant 0 : i32
    return %c0_i32, %c0_i32_0, %c0_i32_1 : i32, i32, i32
  }
  func.func @transform_2(%arg0: i32) -> (i32, i32) {
    %c0_i32 = arith.constant 0 : i32
    %c0_i32_0 = arith.constant 0 : i32
    %c0_i32_1 = arith.constant 0 : i32
    return %c0_i32, %c0_i32_0 : i32, i32
  }
  func.func @transform_3(%arg0: i32) -> (i32, i32) {
    %c0_i32 = arith.constant 0 : i32
    %c0_i32_0 = arith.constant 0 : i32
    %c0_i32_1 = arith.constant 0 : i32
    return %c0_i32, %c0_i32_0 : i32, i32
  }
  func.func @transform_4(%arg0: i32) -> (i32, i32, i32) {
    %c0_i32 = arith.constant 0 : i32
    %c0_i32_0 = arith.constant 0 : i32
    %c0_i32_1 = arith.constant 0 : i32
    %c0_i32_2 = arith.constant 0 : i32
    return %c0_i32, %c0_i32_0, %c0_i32_1 : i32, i32, i32
  }
  func.func @transform_5(%arg0: i32) -> (i32, i32) {
    %c0_i32 = arith.constant 0 : i32
    %c0_i32_0 = arith.constant 0 : i32
    %c0_i32_1 = arith.constant 0 : i32
    return %c0_i32, %c0_i32_0 : i32, i32
  }
  func.func @transform_6(%arg0: i32) -> (i32, i32) {
    %c0_i32 = arith.constant 0 : i32
    %c0_i32_0 = arith.constant 0 : i32
    %c0_i32_1 = arith.constant 0 : i32
    return %c0_i32, %c0_i32_0 : i32, i32
  }
  func.func @transform_7(%arg0: i32) -> (i32, i32) {
    %c0_i32 = arith.constant 0 : i32
    %c0_i32_0 = arith.constant 0 : i32
    %c0_i32_1 = arith.constant 0 : i32
    return %c0_i32, %c0_i32_0 : i32, i32
  }
  func.func @transform_8(%arg0: i32) -> (i32, i32) {
    %c0_i32 = arith.constant 0 : i32
    %c0_i32_0 = arith.constant 0 : i32
    %c0_i32_1 = arith.constant 0 : i32
    return %c0_i32, %c0_i32_0 : i32, i32
  }
  func.func @transform_9(%arg0: i32) -> (i32, i32, i32, i32) {
    %c0_i32 = arith.constant 0 : i32
    %c0_i32_0 = arith.constant 0 : i32
    %c0_i32_1 = arith.constant 0 : i32
    %c0_i32_2 = arith.constant 0 : i32
    return %arg0, %c0_i32, %c0_i32_0, %c0_i32_1 : i32, i32, i32, i32
  }
}

</mosaic_0001>

<llo_original>
// kernel: tpu_custom_call.1
$region0: #{tpu_custom_call.1}
  #allocation0 [shape = 'u32[]', space=smem, size = 0x4, offset = 0x4, fixed_abs, tag = 'smem constant byte address 0x4 - core index']
  #allocation1 [shape = 'u32[72,128]{1,0:T(1,128)}', space=vmem, size = 0x9000, scoped, tag = 'internal scratch']
  %s0 = inlined_call_operand.hbm [shape: f32[8,128], index: 0, kind: input, shape index: {}]
  %s1 = inlined_call_operand.hbm [shape: f32[8,128], index: 1, kind: output, shape index: {}]
  %s2 = sld [smem:[#allocation0]]
  $region18: #{tpu_custom_call.1} parent=0
    _
  %s4 = ssub.s32 1, %s2
  %s5 = scalar_select 0, %s4, %s2
  $region1: #{tpu_custom_call.1} parent=0
    #allocation2 [shape = 'u8[4096]{0}', space=vmem, size = 0x1000, scoped, tag = 'input window, operand 0, single buffered']
    #allocation3 [shape = 's32[1]{0}', space=sflag, size = 0x4, scoped, tag = 'scoped memory for tpu_custom_call.1']
    #allocation4 [shape = 's32[1]{0}', space=sflag, size = 0x4, scoped, tag = 'scoped memory for tpu_custom_call.1']
    #allocation5 [shape = 'u8[4096]{0}', space=vmem, size = 0x1000, scoped, tag = 'output window, operand 0, single buffered']
    %6 = vsyncpa [#allocation3], 0
    %7 = vsyncpa [#allocation4], 0
    // Predicated region
    $region2: #{tpu_custom_call.1} parent=1 // pred_check
      _
    $region3: #{tpu_custom_call.1} parent=1 // pred_check_branch
      %9 = sbr.rel (0) target = $region5
    $region4: #{tpu_custom_call.1} parent=1 // pred_region
      %11 = vsyncadd [#allocation3], 0
      %s13 = sshll.u32 %s0, 4
      %s14 = int_to_ptr.hbm [resolvable:$true] %s13
      %s15 = sshll.u32 [#allocation2], 4
      %s16 = int_to_ptr.vmem [resolvable:$true] %s15
      %18 = dma.hbm_to_vmem [thread:$0]  %s14, 128, %s16, [#allocation3]
    $region5: #{tpu_custom_call.1} parent=1 // pred_fallthru
      _
    // Predicated region
    $region6: #{tpu_custom_call.1} parent=1 // pred_check
      _
    $region7: #{tpu_custom_call.1} parent=1 // pred_check_branch
      %20 = sbr.rel (0) target = $region9
    $region8: #{tpu_custom_call.1} parent=1 // pred_region
      %22 = dma.done [#allocation3], 128
    $region9: #{tpu_custom_call.1} parent=1 // pred_fallthru
      _
    %v23 = vld [vmem:[#allocation2] sm:$0xff]
    %v24 = vadd.f32 %v23, 1.0
    %25 = vst [vmem:[#allocation5] sm:$0xff] %v24
    // Predicated region
    $region10: #{tpu_custom_call.1} parent=1 // pred_check
      _
    $region11: #{tpu_custom_call.1} parent=1 // pred_check_branch
      %27 = sbr.rel (0) target = $region13
    $region12: #{tpu_custom_call.1} parent=1 // pred_region
      %29 = vsyncadd [#allocation4], 0
      %s31 = sshll.u32 [#allocation5], 4
      %s32 = int_to_ptr.vmem [resolvable:$true] %s31
      %s33 = sshll.u32 %s1, 4
      %s34 = int_to_ptr.hbm [resolvable:$true] %s33
      %36 = dma.vmem_to_hbm [thread:$0]  %s32, 128, %s34, [#allocation4]
    $region13: #{tpu_custom_call.1} parent=1 // pred_fallthru
      _
    // Predicated region
    $region14: #{tpu_custom_call.1} parent=1 // pred_check
      _
    $region15: #{tpu_custom_call.1} parent=1 // pred_check_branch
      %38 = sbr.rel (0) target = $region17
    $region16: #{tpu_custom_call.1} parent=1 // pred_region
      %40 = dma.done [#allocation4], 128
    $region17: #{tpu_custom_call.1} parent=1 // pred_fallthru
      _
    %41 = vsyncpa [#allocation3], 1
    %42 = vsyncpa [#allocation4], 1

// kernel: cam_encode_forward.1
$region0: #{cam_encode_forward.1}
  #allocation0 [shape = 'u32[]', space=smem, size = 0x4, offset = 0x4, fixed_abs, tag = 'smem constant byte address 0x4 - core index']
  #allocation1 [shape = 'u32[72,128]{1,0:T(1,128)}', space=vmem, size = 0x9000, scoped, tag = 'internal scratch']
  #allocation2 [shape = 'bf16[2,10,24,64]{3,2,1,0:T(8,128)(2,1)}', space=vmem, size = 0x1e000, scoped, tag = 'scratch operand']
  %s0 = inlined_call_operand.vmem [shape: bf16[2,10,10,64], index: 0, kind: input, shape index: {}]
  %s1 = inlined_call_operand.vmem [shape: bf16[9,64,64], index: 1, kind: input, shape index: {}]
  %s2 = inlined_call_operand.vmem [shape: f32[1,64], index: 2, kind: input, shape index: {}]
  %s3 = inlined_call_operand.vmem [shape: f32[1,64], index: 3, kind: input, shape index: {}]
  %s4 = inlined_call_operand.vmem [shape: bf16[9,64,64], index: 4, kind: input, shape index: {}]
  %s5 = inlined_call_operand.vmem [shape: f32[1,64], index: 5, kind: input, shape index: {}]
  %s6 = inlined_call_operand.vmem [shape: f32[1,64], index: 6, kind: input, shape index: {}]
  %s7 = inlined_call_operand.vmem [shape: bf16[64,128], index: 7, kind: input, shape index: {}]
  %s8 = inlined_call_operand.vmem [shape: f32[1,128], index: 8, kind: input, shape index: {}]
  %s9 = inlined_call_operand.vmem [shape: bf16[2,16,8,64], index: 9, kind: output, shape index: {}]
  %s10 = sld [smem:[#allocation0]]
  $region46: #{cam_encode_forward.1} parent=0
    _
  %s12 = ssub.s32 1, %s10
  %s13 = scalar_select 0, %s12, %s10
  // Predicated region
  $region2: #{cam_encode_forward.1} parent=0 // pred_check
    _
  $region3: #{cam_encode_forward.1} parent=0 // pred_check_branch
    %15 = sbr.rel (0) target = $region5
  $region4: #{cam_encode_forward.1} parent=0 // pred_region
    _
  $region5: #{cam_encode_forward.1} parent=0 // pred_fallthru
    _
  // Predicated region
  $region6: #{cam_encode_forward.1} parent=0 // pred_check
    _
  $region7: #{cam_encode_forward.1} parent=0 // pred_check_branch
    %17 = sbr.rel (0) target = $region9
  $region8: #{cam_encode_forward.1} parent=0 // pred_region
    _
  $region9: #{cam_encode_forward.1} parent=0 // pred_fallthru
    _
  // Predicated region
  $region10: #{cam_encode_forward.1} parent=0 // pred_check
    _
  $region11: #{cam_encode_forward.1} parent=0 // pred_check_branch
    %19 = sbr.rel (0) target = $region13
  $region12: #{cam_encode_forward.1} parent=0 // pred_region
    _
  $region13: #{cam_encode_forward.1} parent=0 // pred_fallthru
    _
  // Predicated region
  $region14: #{cam_encode_forward.1} parent=0 // pred_check
    _
  $region15: #{cam_encode_forward.1} parent=0 // pred_check_branch
    %21 = sbr.rel (0) target = $region17
  $region16: #{cam_encode_forward.1} parent=0 // pred_region
    _
  $region17: #{cam_encode_forward.1} parent=0 // pred_fallthru
    _
  // Predicated region
  $region18: #{cam_encode_forward.1} parent=0 // pred_check
    _
  $region19: #{cam_encode_forward.1} parent=0 // pred_check_branch
    %23 = sbr.rel (0) target = $region21
  $region20: #{cam_encode_forward.1} parent=0 // pred_region
    _
  $region21: #{cam_encode_forward.1} parent=0 // pred_fallthru
    _
  // Predicated region
  $region22: #{cam_encode_forward.1} parent=0 // pred_check
    _
  $region23: #{cam_encode_forward.1} parent=0 // pred_check_branch
    %25 = sbr.rel (0) target = $region25
  $region24: #{cam_encode_forward.1} parent=0 // pred_region
    _
  $region25: #{cam_encode_forward.1} parent=0 // pred_fallthru
    _
  // Predicated region
  $region26: #{cam_encode_forward.1} parent=0 // pred_check
    _
  $region27: #{cam_encode_forward.1} parent=0 // pred_check_branch
    %27 = sbr.rel (0) target = $region29
  $region28: #{cam_encode_forward.1} parent=0 // pred_region
    _
  $region29: #{cam_encode_forward.1} parent=0 // pred_fallthru
    _
  // Predicated region
  $region30: #{cam_encode_forward.1} parent=0 // pred_check
    _
  $region31: #{cam_encode_forward.1} parent=0 // pred_check_branch
    %29 = sbr.rel (0) target = $region33
  $region32: #{cam_encode_forward.1} parent=0 // pred_region
    _
  $region33: #{cam_encode_forward.1} parent=0 // pred_fallthru
    _
  // Predicated region
  $region34: #{cam_encode_forward.1} parent=0 // pred_check
    _
  $region35: #{cam_encode_forward.1} parent=0 // pred_check_branch
    %31 = sbr.rel (0) target = $region37
  $region36: #{cam_encode_forward.1} parent=0 // pred_region
    _
  $region37: #{cam_encode_forward.1} parent=0 // pred_fallthru
    _
  %v33 = vld [vmem:[%s0] sm:$0xf]
  %v34 = vld [vmem:[%s0 + $0x8] sm:$0xf]
  %v35 = vld [vmem:[%s0 + $0x10] sm:$0xf]
  %v36 = vld [vmem:[%s0 + $0x18] sm:$0xf]
  %v37 = vld [vmem:[%s0 + $0x20] sm:$0xf]
  %v38 = vld [vmem:[%s0 + $0x28] sm:$0xf]
  %v39 = vld [vmem:[%s0 + $0x30] sm:$0xf]
  %v40 = vld [vmem:[%s0 + $0x38] sm:$0xf]
  %v41 = vld [vmem:[%s0 + $0x50] sm:$0xf]
  %v42 = vld [vmem:[%s0 + $0x58] sm:$0xf]
  %v43 = vld [vmem:[%s0 + $0x60] sm:$0xf]
  %v44 = vld [vmem:[%s0 + $0x68] sm:$0xf]
  %v45 = vld [vmem:[%s0 + $0x70] sm:$0xf]
  %v46 = vld [vmem:[%s0 + $0x78] sm:$0xf]
  %v47 = vld [vmem:[%s0 + $0x80] sm:$0xf]
  %v48 = vld [vmem:[%s0 + $0x88] sm:$0xf]
  %v49 = vld [vmem:[%s1] sm:$0xf]
  %v50 = vld [vmem:[%s1 + $0x4] sm:$0xf]
  %v51 = vld [vmem:[%s1 + $0x8] sm:$0xf]
  %v52 = vld [vmem:[%s1 + $0xc] sm:$0xf]
  %v53 = vld [vmem:[%s1 + $0x10] sm:$0xf]
  %v54 = vld [vmem:[%s1 + $0x14] sm:$0xf]
  %v55 = vld [vmem:[%s1 + $0x18] sm:$0xf]
  %v56 = vld [vmem:[%s1 + $0x1c] sm:$0xf]
  %v57 = vld [vmem:[%s0 + $0x4] sm:$0x1]
  %v58 = vld [vmem:[%s0 + $0xc] sm:$0x1]
  %v59 = vld [vmem:[%s0 + $0x14] sm:$0x1]
  %v60 = vld [vmem:[%s0 + $0x1c] sm:$0x1]
  %v61 = vld [vmem:[%s0 + $0x24] sm:$0x1]
  %v62 = vld [vmem:[%s0 + $0x2c] sm:$0x1]
  %v63 = vld [vmem:[%s0 + $0x34] sm:$0x1]
  %v64 = vld [vmem:[%s0 + $0x3c] sm:$0x1]
  %v65 = vld [vmem:[%s0 + $0x54] sm:$0x1]
  %v66 = vld [vmem:[%s0 + $0x5c] sm:$0x1]
  %v67 = vld [vmem:[%s0 + $0x64] sm:$0x1]
  %v68 = vld [vmem:[%s0 + $0x6c] sm:$0x1]
  %v69 = vld [vmem:[%s0 + $0x74] sm:$0x1]
  %v70 = vld [vmem:[%s0 + $0x7c] sm:$0x1]
  %v71 = vld [vmem:[%s0 + $0x84] sm:$0x1]
  %v72 = vld [vmem:[%s0 + $0x8c] sm:$0x1]
  %vm73 = vsmask.f32 3328
  %vm74 = vsmask.f32 7440
  %vm75 = vmor %vm73, %vm74
  %v77 = vshrl.u32 %v33, 16
  %v79 = vrot.slane %v77, 4
  %v80 = vshll.u32 %v33, 16
  %v82 = vrot.slane %v80, 5
  %v83 = vor.u32 %v79, %v82
  %v84 = vrot.slane %v83, 4
  %v86 = vshll.u32 %v57, 16
  %v88 = vrot.slane %v86, 5
  %v89 = vsel %vm75, %v84, %v88
  %v91 = vshrl.u32 %v34, 16
  %v93 = vrot.slane %v91, 4
  %v94 = vshll.u32 %v34, 16
  %v96 = vrot.slane %v94, 5
  %v97 = vor.u32 %v93, %v96
  %v98 = vrot.slane %v97, 4
  %v100 = vshll.u32 %v58, 16
  %v102 = vrot.slane %v100, 5
  %v103 = vsel %vm75, %v98, %v102
  %v105 = vshrl.u32 %v35, 16
  %v107 = vrot.slane %v105, 4
  %v108 = vshll.u32 %v35, 16
  %v110 = vrot.slane %v108, 5
  %v111 = vor.u32 %v107, %v110
  %v112 = vrot.slane %v111, 4
  %v114 = vshll.u32 %v59, 16
  %v116 = vrot.slane %v114, 5
  %v117 = vsel %vm75, %v112, %v116
  %v119 = vshrl.u32 %v36, 16
  %v121 = vrot.slane %v119, 4
  %v122 = vshll.u32 %v36, 16
  %v124 = vrot.slane %v122, 5
  %v125 = vor.u32 %v121, %v124
  %v126 = vrot.slane %v125, 4
  %v128 = vshll.u32 %v60, 16
  %v130 = vrot.slane %v128, 5
  %v131 = vsel %vm75, %v126, %v130
  %v133 = vshrl.u32 %v37, 16
  %v135 = vrot.slane %v133, 4
  %v136 = vshll.u32 %v37, 16
  %v138 = vrot.slane %v136, 5
  %v139 = vor.u32 %v135, %v138
  %v140 = vrot.slane %v139, 4
  %v142 = vshll.u32 %v61, 16
  %v144 = vrot.slane %v142, 5
  %v145 = vsel %vm75, %v140, %v144
  %v147 = vshrl.u32 %v38, 16
  %v149 = vrot.slane %v147, 4
  %v150 = vshll.u32 %v38, 16
  %v152 = vrot.slane %v150, 5
  %v153 = vor.u32 %v149, %v152
  %v154 = vrot.slane %v153, 4
  %v156 = vshll.u32 %v62, 16
  %v158 = vrot.slane %v156, 5
  %v159 = vsel %vm75, %v154, %v158
  %v161 = vshrl.u32 %v39, 16
  %v163 = vrot.slane %v161, 4
  %v164 = vshll.u32 %v39, 16
  %v166 = vrot.slane %v164, 5
  %v167 = vor.u32 %v163, %v166
  %v168 = vrot.slane %v167, 4
  %v170 = vshll.u32 %v63, 16
  %v172 = vrot.slane %v170, 5
  %v173 = vsel %vm75, %v168, %v172
  %v175 = vshrl.u32 %v40, 16
  %v177 = vrot.slane %v175, 4
  %v178 = vshll.u32 %v40, 16
  %v180 = vrot.slane %v178, 5
  %v181 = vor.u32 %v177, %v180
  %v182 = vrot.slane %v181, 4
  %v184 = vshll.u32 %v64, 16
  %v186 = vrot.slane %v184, 5
  %v187 = vsel %vm75, %v182, %v186
  %v189 = vshrl.u32 %v41, 16
  %v191 = vrot.slane %v189, 4
  %v192 = vshll.u32 %v41, 16
  %v194 = vrot.slane %v192, 5
  %v195 = vor.u32 %v191, %v194
  %v196 = vrot.slane %v195, 4
  %v198 = vshll.u32 %v65, 16
  %v200 = vrot.slane %v198, 5
  %v201 = vsel %vm75, %v196, %v200
  %v203 = vshrl.u32 %v42, 16
  %v205 = vrot.slane %v203, 4
  %v206 = vshll.u32 %v42, 16
  %v208 = vrot.slane %v206, 5
  %v209 = vor.u32 %v205, %v208
  %v210 = vrot.slane %v209, 4
  %v212 = vshll.u32 %v66, 16
  %v214 = vrot.slane %v212, 5
  %v215 = vsel %vm75, %v210, %v214
  %v217 = vshrl.u32 %v43, 16
  %v219 = vrot.slane %v217, 4
  %v220 = vshll.u32 %v43, 16
  %v222 = vrot.slane %v220, 5
  %v223 = vor.u32 %v219, %v222
  %v224 = vrot.slane %v223, 4
  %v226 = vshll.u32 %v67, 16
  %v228 = vrot.slane %v226, 5
  %v229 = vsel %vm75, %v224, %v228
  %v231 = vshrl.u32 %v44, 16
  %v233 = vrot.slane %v231, 4
  %v234 = vshll.u32 %v44, 16
  %v236 = vrot.slane %v234, 5
  %v237 = vor.u32 %v233, %v236
  %v238 = vrot.slane %v237, 4
  %v240 = vshll.u32 %v68, 16
  %v242 = vrot.slane %v240, 5
  %v243 = vsel %vm75, %v238, %v242
  %v245 = vshrl.u32 %v45, 16
  %v247 = vrot.slane %v245, 4
  %v248 = vshll.u32 %v45, 16
  %v250 = vrot.slane %v248, 5
  %v251 = vor.u32 %v247, %v250
  %v252 = vrot.slane %v251, 4
  %v254 = vshll.u32 %v69, 16
  %v256 = vrot.slane %v254, 5
  %v257 = vsel %vm75, %v252, %v256
  %v259 = vshrl.u32 %v46, 16
  %v261 = vrot.slane %v259, 4
  %v262 = vshll.u32 %v46, 16
  %v264 = vrot.slane %v262, 5
  %v265 = vor.u32 %v261, %v264
  %v266 = vrot.slane %v265, 4
  %v268 = vshll.u32 %v70, 16
  %v270 = vrot.slane %v268, 5
  %v271 = vsel %vm75, %v266, %v270
  %v273 = vshrl.u32 %v47, 16
  %v275 = vrot.slane %v273, 4
  %v276 = vshll.u32 %v47, 16
  %v278 = vrot.slane %v276, 5
  %v279 = vor.u32 %v275, %v278
  %v280 = vrot.slane %v279, 4
  %v282 = vshll.u32 %v71, 16
  %v284 = vrot.slane %v282, 5
  %v285 = vsel %vm75, %v280, %v284
  %v287 = vshrl.u32 %v48, 16
  %v289 = vrot.slane %v287, 4
  %v290 = vshll.u32 %v48, 16
  %v292 = vrot.slane %v290, 5
  %v293 = vor.u32 %v289, %v292
  %v294 = vrot.slane %v293, 4
  %v296 = vshll.u32 %v72, 16
  %v298 = vrot.slane %v296, 5
  %v299 = vsel %vm75, %v294, %v298
  %s300 = scalar_lea.vmem %s1, 32
  %v301 = vld [vmem:[%s300] sm:$0xf]
  %v302 = vld [vmem:[%s300 + $0x4] sm:$0xf]
  %v303 = vld [vmem:[%s300 + $0x8] sm:$0xf]
  %v304 = vld [vmem:[%s300 + $0xc] sm:$0xf]
  %v305 = vld [vmem:[%s300 + $0x10] sm:$0xf]
  %v306 = vld [vmem:[%s300 + $0x14] sm:$0xf]
  %v307 = vld [vmem:[%s300 + $0x18] sm:$0xf]
  %v308 = vld [vmem:[%s300 + $0x1c] sm:$0xf]
  %v309 = vunpack.c.l.b16 %v89
  %v310 = vunpack.c.l.b16 %v103
  %v311 = vunpack.c.l.b16 %v117
  %v312 = vunpack.c.l.b16 %v131
  %v313 = vunpack.c.l.b16 %v145
  %v314 = vunpack.c.l.b16 %v159
  %v315 = vunpack.c.l.b16 %v173
  %v316 = vunpack.c.l.b16 %v187
  %v317 = vunpack.c.l.b16 %v201
  %v318 = vunpack.c.l.b16 %v215
  %v319 = vunpack.c.l.b16 %v229
  %v320 = vunpack.c.l.b16 %v243
  %v321 = vunpack.c.l.b16 %v257
  %v322 = vunpack.c.l.b16 %v271
  %v323 = vunpack.c.l.b16 %v285
  %v324 = vunpack.c.l.b16 %v299
  %v325 = vpack.c.b16 %v310, %v309
  %v326 = vpack.c.b16 %v312, %v311
  %v327 = vpack.c.b16 %v314, %v313
  %v328 = vpack.c.b16 %v316, %v315
  %v329 = vpack.c.b16 %v318, %v317
  %v330 = vpack.c.b16 %v320, %v319
  %v331 = vpack.c.b16 %v322, %v321
  %v332 = vpack.c.b16 %v324, %v323
  %v341 = vunpack.c.l.b16 %v301
  %v342 = vunpack.c.l.b16 %v302
  %v343 = vunpack.c.l.b16 %v303
  %v344 = vunpack.c.l.b16 %v304
  %v345 = vunpack.c.l.b16 %v305
  %v346 = vunpack.c.l.b16 %v306
  %v347 = vunpack.c.l.b16 %v307
  %v348 = vunpack.c.l.b16 %v308
  %v349 = vpack.c.b16 %v342, %v341
  %v350 = vpack.c.b16 %v344, %v343
  %v351 = vpack.c.b16 %v346, %v345
  %v352 = vpack.c.b16 %v348, %v347
  %vm357 = vcmask 523264
  %v359 = vsel %vm357, %v325, 0
  %v362 = vsel %vm357, %v326, 0
  %v365 = vsel %vm357, %v327, 0
  %v368 = vsel %vm357, %v328, 0
  %v371 = vsel %vm357, %v329, 0
  %v374 = vsel %vm357, %v330, 0
  %v377 = vsel %vm357, %v331, 0
  %v380 = vsel %vm357, %v332, 0
  %382 = vmatpush.bf16.msra.mxu0 0
  %383 = vmatpush.bf16.msra.mxu0 0
  %384 = vmatpush.bf16.msra.mxu0 0
  %385 = vmatpush.bf16.msra.mxu0 0
  %386 = vmatpush.bf16.msra.mxu0 %v352
  %387 = vmatpush.bf16.msra.mxu0 %v351
  %388 = vmatpush.bf16.msra.mxu0 %v350
  %389 = vmatpush.bf16.msra.mxu0 %v349
  %390 = vmatmul.bf16.gmra.mxu0 %v359
  %v391 = vpop.f32.mrf.mxu0
  %v392 = vadd.f32 0.0, %v391
  %v393 = vpop.f32.mrf.mxu0
  %v394 = vadd.f32 0.0, %v393
  %395 = vmatmul.bf16.gmra.mxu0 %v362
  %v396 = vpop.f32.mrf.mxu0
  %v397 = vadd.f32 0.0, %v396
  %v398 = vpop.f32.mrf.mxu0
  %v399 = vadd.f32 0.0, %v398
  %400 = vmatmul.bf16.gmra.mxu0 %v365
  %v401 = vpop.f32.mrf.mxu0
  %v402 = vadd.f32 0.0, %v401
  %v403 = vpop.f32.mrf.mxu0
  %v404 = vadd.f32 0.0, %v403
  %405 = vmatmul.bf16.gmra.mxu0 %v368
  %v406 = vpop.f32.mrf.mxu0
  %v407 = vadd.f32 0.0, %v406
  %v408 = vpop.f32.mrf.mxu0
  %v409 = vadd.f32 0.0, %v408
  %410 = vmatmul.bf16.gmra.mxu0 %v371
  %v411 = vpop.f32.mrf.mxu0
  %v412 = vadd.f32 0.0, %v411
  %v413 = vpop.f32.mrf.mxu0
  %v414 = vadd.f32 0.0, %v413
  %415 = vmatmul.bf16.gmra.mxu0 %v374
  %v416 = vpop.f32.mrf.mxu0
  %v417 = vadd.f32 0.0, %v416
  %v418 = vpop.f32.mrf.mxu0
  %v419 = vadd.f32 0.0, %v418
  %420 = vmatmul.bf16.gmra.mxu0 %v377
  %v421 = vpop.f32.mrf.mxu0
  %v422 = vadd.f32 0.0, %v421
  %v423 = vpop.f32.mrf.mxu0
  %v424 = vadd.f32 0.0, %v423
  %425 = vmatmul.bf16.gmra.mxu0 %v380
  %v426 = vpop.f32.mrf.mxu0
  %v427 = vadd.f32 0.0, %v426
  %v428 = vpop.f32.mrf.mxu0
  %v429 = vadd.f32 0.0, %v428
  %430 = vdwg.mxu0
  %v447 = vunpack.c.l.b16 %v33
  %v448 = vunpack.c.l.b16 %v34
  %v449 = vunpack.c.l.b16 %v35
  %v450 = vunpack.c.l.b16 %v36
  %v451 = vunpack.c.l.b16 %v37
  %v452 = vunpack.c.l.b16 %v38
  %v453 = vunpack.c.l.b16 %v39
  %v454 = vunpack.c.l.b16 %v40
  %v455 = vunpack.c.l.b16 %v41
  %v456 = vunpack.c.l.b16 %v42
  %v457 = vunpack.c.l.b16 %v43
  %v458 = vunpack.c.l.b16 %v44
  %v459 = vunpack.c.l.b16 %v45
  %v460 = vunpack.c.l.b16 %v46
  %v461 = vunpack.c.l.b16 %v47
  %v462 = vunpack.c.l.b16 %v48
  %v463 = vpack.c.b16 %v448, %v447
  %v464 = vpack.c.b16 %v450, %v449
  %v465 = vpack.c.b16 %v452, %v451
  %v466 = vpack.c.b16 %v454, %v453
  %v467 = vpack.c.b16 %v456, %v455
  %v468 = vpack.c.b16 %v458, %v457
  %v469 = vpack.c.b16 %v460, %v459
  %v470 = vpack.c.b16 %v462, %v461
  %v479 = vunpack.c.l.b16 %v49
  %v480 = vunpack.c.l.b16 %v50
  %v481 = vunpack.c.l.b16 %v51
  %v482 = vunpack.c.l.b16 %v52
  %v483 = vunpack.c.l.b16 %v53
  %v484 = vunpack.c.l.b16 %v54
  %v485 = vunpack.c.l.b16 %v55
  %v486 = vunpack.c.l.b16 %v56
  %v487 = vpack.c.b16 %v480, %v479
  %v488 = vpack.c.b16 %v482, %v481
  %v489 = vpack.c.b16 %v484, %v483
  %v490 = vpack.c.b16 %v486, %v485
  %v496 = vsel %vm357, %v463, 0
  %v499 = vsel %vm357, %v464, 0
  %v502 = vsel %vm357, %v465, 0
  %v505 = vsel %vm357, %v466, 0
  %v508 = vsel %vm357, %v467, 0
  %v511 = vsel %vm357, %v468, 0
  %v514 = vsel %vm357, %v469, 0
  %v517 = vsel %vm357, %v470, 0
  %519 = vmatpush.bf16.msra.mxu0 0
  %520 = vmatpush.bf16.msra.mxu0 0
  %521 = vmatpush.bf16.msra.mxu0 0
  %522 = vmatpush.bf16.msra.mxu0 0
  %523 = vmatpush.bf16.msra.mxu0 %v490
  %524 = vmatpush.bf16.msra.mxu0 %v489
  %525 = vmatpush.bf16.msra.mxu0 %v488
  %526 = vmatpush.bf16.msra.mxu0 %v487
  %527 = vmatmul.bf16.gmra.mxu0 %v496
  %v528 = vpop.f32.mrf.mxu0
  %v529 = vadd.f32 %v392, %v528
  %v530 = vpop.f32.mrf.mxu0
  %v531 = vadd.f32 %v394, %v530
  %532 = vmatmul.bf16.gmra.mxu0 %v499
  %v533 = vpop.f32.mrf.mxu0
  %v534 = vadd.f32 %v397, %v533
  %v535 = vpop.f32.mrf.mxu0
  %v536 = vadd.f32 %v399, %v535
  %537 = vmatmul.bf16.gmra.mxu0 %v502
  %v538 = vpop.f32.mrf.mxu0
  %v539 = vadd.f32 %v402, %v538
  %v540 = vpop.f32.mrf.mxu0
  %v541 = vadd.f32 %v404, %v540
  %542 = vmatmul.bf16.gmra.mxu0 %v505
  %v543 = vpop.f32.mrf.mxu0
  %v544 = vadd.f32 %v407, %v543
  %v545 = vpop.f32.mrf.mxu0
  %v546 = vadd.f32 %v409, %v545
  %547 = vmatmul.bf16.gmra.mxu0 %v508
  %v548 = vpop.f32.mrf.mxu0
  %v549 = vadd.f32 %v412, %v548
  %v550 = vpop.f32.mrf.mxu0
  %v551 = vadd.f32 %v414, %v550
  %552 = vmatmul.bf16.gmra.mxu0 %v511
  %v553 = vpop.f32.mrf.mxu0
  %v554 = vadd.f32 %v417, %v553
  %v555 = vpop.f32.mrf.mxu0
  %v556 = vadd.f32 %v419, %v555
  %557 = vmatmul.bf16.gmra.mxu0 %v514
  %v558 = vpop.f32.mrf.mxu0
  %v559 = vadd.f32 %v422, %v558
  %v560 = vpop.f32.mrf.mxu0
  %v561 = vadd.f32 %v424, %v560
  %562 = vmatmul.bf16.gmra.mxu0 %v517
  %v563 = vpop.f32.mrf.mxu0
  %v564 = vadd.f32 %v427, %v563
  %v565 = vpop.f32.mrf.mxu0
  %v566 = vadd.f32 %v429, %v565
  %567 = vdwg.mxu0
  %v568 = vld [vmem:[%s0] sm:$0xe]
  %v569 = vld [vmem:[%s0 + $0x8] sm:$0xe]
  %v570 = vld [vmem:[%s0 + $0x10] sm:$0xe]
  %v571 = vld [vmem:[%s0 + $0x18] sm:$0xe]
  %v572 = vld [vmem:[%s0 + $0x20] sm:$0xe]
  %v573 = vld [vmem:[%s0 + $0x28] sm:$0xe]
  %v574 = vld [vmem:[%s0 + $0x30] sm:$0xe]
  %v575 = vld [vmem:[%s0 + $0x38] sm:$0xe]
  %v576 = vld [vmem:[%s0 + $0x50] sm:$0xe]
  %v577 = vld [vmem:[%s0 + $0x58] sm:$0xe]
  %v578 = vld [vmem:[%s0 + $0x60] sm:$0xe]
  %v579 = vld [vmem:[%s0 + $0x68] sm:$0xe]
  %v580 = vld [vmem:[%s0 + $0x70] sm:$0xe]
  %v581 = vld [vmem:[%s0 + $0x78] sm:$0xe]
  %v582 = vld [vmem:[%s0 + $0x80] sm:$0xe]
  %v583 = vld [vmem:[%s0 + $0x88] sm:$0xe]
  %vm616 = vcmask 1042432
  %vm617 = vcmask 1046532
  %vm618 = vmor %vm616, %vm617
  %v619 = vrot.slane %v568, 5
  %v620 = vrot.slane %v619, 4
  %v621 = vrot.slane %v57, 5
  %v622 = vsel %vm618, %v620, %v621
  %v623 = vrot.slane %v569, 5
  %v624 = vrot.slane %v623, 4
  %v625 = vrot.slane %v58, 5
  %v626 = vsel %vm618, %v624, %v625
  %v627 = vrot.slane %v570, 5
  %v628 = vrot.slane %v627, 4
  %v629 = vrot.slane %v59, 5
  %v630 = vsel %vm618, %v628, %v629
  %v631 = vrot.slane %v571, 5
  %v632 = vrot.slane %v631, 4
  %v633 = vrot.slane %v60, 5
  %v634 = vsel %vm618, %v632, %v633
  %v635 = vrot.slane %v572, 5
  %v636 = vrot.slane %v635, 4
  %v637 = vrot.slane %v61, 5
  %v638 = vsel %vm618, %v636, %v637
  %v639 = vrot.slane %v573, 5
  %v640 = vrot.slane %v639, 4
  %v641 = vrot.slane %v62, 5
  %v642 = vsel %vm618, %v640, %v641
  %v643 = vrot.slane %v574, 5
  %v644 = vrot.slane %v643, 4
  %v645 = vrot.slane %v63, 5
  %v646 = vsel %vm618, %v644, %v645
  %v647 = vrot.slane %v575, 5
  %v648 = vrot.slane %v647, 4
  %v649 = vrot.slane %v64, 5
  %v650 = vsel %vm618, %v648, %v649
  %v651 = vrot.slane %v576, 5
  %v652 = vrot.slane %v651, 4
  %v653 = vrot.slane %v65, 5
  %v654 = vsel %vm618, %v652, %v653
  %v655 = vrot.slane %v577, 5
  %v656 = vrot.slane %v655, 4
  %v657 = vrot.slane %v66, 5
  %v658 = vsel %vm618, %v656, %v657
  %v659 = vrot.slane %v578, 5
  %v660 = vrot.slane %v659, 4
  %v661 = vrot.slane %v67, 5
  %v662 = vsel %vm618, %v660, %v661
  %v663 = vrot.slane %v579, 5
  %v664 = vrot.slane %v663, 4
  %v665 = vrot.slane %v68, 5
  %v666 = vsel %vm618, %v664, %v665
  %v667 = vrot.slane %v580, 5
  %v668 = vrot.slane %v667, 4
  %v669 = vrot.slane %v69, 5
  %v670 = vsel %vm618, %v668, %v669
  %v671 = vrot.slane %v581, 5
  %v672 = vrot.slane %v671, 4
  %v673 = vrot.slane %v70, 5
  %v674 = vsel %vm618, %v672, %v673
  %v675 = vrot.slane %v582, 5
  %v676 = vrot.slane %v675, 4
  %v677 = vrot.slane %v71, 5
  %v678 = vsel %vm618, %v676, %v677
  %v679 = vrot.slane %v583, 5
  %v680 = vrot.slane %v679, 4
  %v681 = vrot.slane %v72, 5
  %v682 = vsel %vm618, %v680, %v681
  %s683 = scalar_lea.vmem %s1, 64
  %v684 = vld [vmem:[%s683] sm:$0xf]
  %v685 = vld [vmem:[%s683 + $0x4] sm:$0xf]
  %v686 = vld [vmem:[%s683 + $0x8] sm:$0xf]
  %v687 = vld [vmem:[%s683 + $0xc] sm:$0xf]
  %v688 = vld [vmem:[%s683 + $0x10] sm:$0xf]
  %v689 = vld [vmem:[%s683 + $0x14] sm:$0xf]
  %v690 = vld [vmem:[%s683 + $0x18] sm:$0xf]
  %v691 = vld [vmem:[%s683 + $0x1c] sm:$0xf]
  %v692 = vunpack.c.l.b16 %v622
  %v693 = vunpack.c.l.b16 %v626
  %v694 = vunpack.c.l.b16 %v630
  %v695 = vunpack.c.l.b16 %v634
  %v696 = vunpack.c.l.b16 %v638
  %v697 = vunpack.c.l.b16 %v642
  %v698 = vunpack.c.l.b16 %v646
  %v699 = vunpack.c.l.b16 %v650
  %v700 = vunpack.c.l.b16 %v654
  %v701 = vunpack.c.l.b16 %v658
  %v702 = vunpack.c.l.b16 %v662
  %v703 = vunpack.c.l.b16 %v666
  %v704 = vunpack.c.l.b16 %v670
  %v705 = vunpack.c.l.b16 %v674
  %v706 = vunpack.c.l.b16 %v678
  %v707 = vunpack.c.l.b16 %v682
  %v708 = vpack.c.b16 %v693, %v692
  %v709 = vpack.c.b16 %v695, %v694
  %v710 = vpack.c.b16 %v697, %v696
  %v711 = vpack.c.b16 %v699, %v698
  %v712 = vpack.c.b16 %v701, %v700
  %v713 = vpack.c.b16 %v703, %v702
  %v714 = vpack.c.b16 %v705, %v704
  %v715 = vpack.c.b16 %v707, %v706
  %v724 = vunpack.c.l.b16 %v684
  %v725 = vunpack.c.l.b16 %v685
  %v726 = vunpack.c.l.b16 %v686
  %v727 = vunpack.c.l.b16 %v687
  %v728 = vunpack.c.l.b16 %v688
  %v729 = vunpack.c.l.b16 %v689
  %v730 = vunpack.c.l.b16 %v690
  %v731 = vunpack.c.l.b16 %v691
  %v732 = vpack.c.b16 %v725, %v724
  %v733 = vpack.c.b16 %v727, %v726
  %v734 = vpack.c.b16 %v729, %v728
  %v735 = vpack.c.b16 %v731, %v730
  %v741 = vsel %vm357, %v708, 0
  %v744 = vsel %vm357, %v709, 0
  %v747 = vsel %vm357, %v710, 0
  %v750 = vsel %vm357, %v711, 0
  %v753 = vsel %vm357, %v712, 0
  %v756 = vsel %vm357, %v713, 0
  %v759 = vsel %vm357, %v714, 0
  %v762 = vsel %vm357, %v715, 0
  %764 = vmatpush.bf16.msra.mxu0 0
  %765 = vmatpush.bf16.msra.mxu0 0
  %766 = vmatpush.bf16.msra.mxu0 0
  %767 = vmatpush.bf16.msra.mxu0 0
  %768 = vmatpush.bf16.msra.mxu0 %v735
  %769 = vmatpush.bf16.msra.mxu0 %v734
  %770 = vmatpush.bf16.msra.mxu0 %v733
  %771 = vmatpush.bf16.msra.mxu0 %v732
  %772 = vmatmul.bf16.gmra.mxu0 %v741
  %v773 = vpop.f32.mrf.mxu0
  %v774 = vadd.f32 0.0, %v773
  %v775 = vpop.f32.mrf.mxu0
  %v776 = vadd.f32 0.0, %v775
  %777 = vmatmul.bf16.gmra.mxu0 %v744
  %v778 = vpop.f32.mrf.mxu0
  %v779 = vadd.f32 0.0, %v778
  %v780 = vpop.f32.mrf.mxu0
  %v781 = vadd.f32 0.0, %v780
  %782 = vmatmul.bf16.gmra.mxu0 %v747
  %v783 = vpop.f32.mrf.mxu0
  %v784 = vadd.f32 0.0, %v783
  %v785 = vpop.f32.mrf.mxu0
  %v786 = vadd.f32 0.0, %v785
  %787 = vmatmul.bf16.gmra.mxu0 %v750
  %v788 = vpop.f32.mrf.mxu0
  %v789 = vadd.f32 0.0, %v788
  %v790 = vpop.f32.mrf.mxu0
  %v791 = vadd.f32 0.0, %v790
  %792 = vmatmul.bf16.gmra.mxu0 %v753
  %v793 = vpop.f32.mrf.mxu0
  %v794 = vadd.f32 0.0, %v793
  %v795 = vpop.f32.mrf.mxu0
  %v796 = vadd.f32 0.0, %v795
  %797 = vmatmul.bf16.gmra.mxu0 %v756
  %v798 = vpop.f32.mrf.mxu0
  %v799 = vadd.f32 0.0, %v798
  %v800 = vpop.f32.mrf.mxu0
  %v801 = vadd.f32 0.0, %v800
  %802 = vmatmul.bf16.gmra.mxu0 %v759
  %v803 = vpop.f32.mrf.mxu0
  %v804 = vadd.f32 0.0, %v803
  %v805 = vpop.f32.mrf.mxu0
  %v806 = vadd.f32 0.0, %v805
  %807 = vmatmul.bf16.gmra.mxu0 %v762
  %v808 = vpop.f32.mrf.mxu0
  %v809 = vadd.f32 0.0, %v808
  %v810 = vpop.f32.mrf.mxu0
  %v811 = vadd.f32 0.0, %v810
  %812 = vdwg.mxu0
  %v813 = vadd.f32 %v529, %v774
  %v814 = vadd.f32 %v531, %v776
  %v815 = vadd.f32 %v534, %v779
  %v816 = vadd.f32 %v536, %v781
  %v817 = vadd.f32 %v539, %v784
  %v818 = vadd.f32 %v541, %v786
  %v819 = vadd.f32 %v544, %v789
  %v820 = vadd.f32 %v546, %v791
  %v821 = vadd.f32 %v549, %v794
  %v822 = vadd.f32 %v551, %v796
  %v823 = vadd.f32 %v554, %v799
  %v824 = vadd.f32 %v556, %v801
  %v825 = vadd.f32 %v559, %v804
  %v826 = vadd.f32 %v561, %v806
  %v827 = vadd.f32 %v564, %v809
  %v828 = vadd.f32 %v566, %v811
  %s829 = scalar_lea.vmem %s0, 8
  %v830 = vld [vmem:[%s829] sm:$0xf]
  %v831 = vld [vmem:[%s829 + $0x8] sm:$0xf]
  %v832 = vld [vmem:[%s829 + $0x10] sm:$0xf]
  %v833 = vld [vmem:[%s829 + $0x18] sm:$0xf]
  %v834 = vld [vmem:[%s829 + $0x20] sm:$0xf]
  %v835 = vld [vmem:[%s829 + $0x28] sm:$0xf]
  %v836 = vld [vmem:[%s829 + $0x30] sm:$0xf]
  %v837 = vld [vmem:[%s829 + $0x38] sm:$0xf]
  %v838 = vld [vmem:[%s829 + $0x50] sm:$0xf]
  %v839 = vld [vmem:[%s829 + $0x58] sm:$0xf]
  %v840 = vld [vmem:[%s829 + $0x60] sm:$0xf]
  %v841 = vld [vmem:[%s829 + $0x68] sm:$0xf]
  %v842 = vld [vmem:[%s829 + $0x70] sm:$0xf]
  %v843 = vld [vmem:[%s829 + $0x78] sm:$0xf]
  %v844 = vld [vmem:[%s829 + $0x80] sm:$0xf]
  %v845 = vld [vmem:[%s829 + $0x88] sm:$0xf]
  %s846 = scalar_lea.vmem %s1, 96
  %v847 = vld [vmem:[%s846] sm:$0xf]
  %v848 = vld [vmem:[%s846 + $0x4] sm:$0xf]
  %v849 = vld [vmem:[%s846 + $0x8] sm:$0xf]
  %v850 = vld [vmem:[%s846 + $0xc] sm:$0xf]
  %v851 = vld [vmem:[%s846 + $0x10] sm:$0xf]
  %v852 = vld [vmem:[%s846 + $0x14] sm:$0xf]
  %v853 = vld [vmem:[%s846 + $0x18] sm:$0xf]
  %v854 = vld [vmem:[%s846 + $0x1c] sm:$0xf]
  %v871 = vunpack.c.l.b16 %v830
  %v872 = vunpack.c.l.b16 %v831
  %v873 = vunpack.c.l.b16 %v832
  %v874 = vunpack.c.l.b16 %v833
  %v875 = vunpack.c.l.b16 %v834
  %v876 = vunpack.c.l.b16 %v835
  %v877 = vunpack.c.l.b16 %v836
  %v878 = vunpack.c.l.b16 %v837
  %v879 = vunpack.c.l.b16 %v838
  %v880 = vunpack.c.l.b16 %v839
  %v881 = vunpack.c.l.b16 %v840
  %v882 = vunpack.c.l.b16 %v841
  %v883 = vunpack.c.l.b16 %v842
  %v884 = vunpack.c.l.b16 %v843
  %v885 = vunpack.c.l.b16 %v844
  %v886 = vunpack.c.l.b16 %v845
  %v887 = vpack.c.b16 %v872, %v871
  %v888 = vpack.c.b16 %v874, %v873
  %v889 = vpack.c.b16 %v876, %v875
  %v890 = vpack.c.b16 %v878, %v877
  %v891 = vpack.c.b16 %v880, %v879
  %v892 = vpack.c.b16 %v882, %v881
  %v893 = vpack.c.b16 %v884, %v883
  %v894 = vpack.c.b16 %v886, %v885
  %v903 = vunpack.c.l.b16 %v847
  %v904 = vunpack.c.l.b16 %v848
  %v905 = vunpack.c.l.b16 %v849
  %v906 = vunpack.c.l.b16 %v850
  %v907 = vunpack.c.l.b16 %v851
  %v908 = vunpack.c.l.b16 %v852
  %v909 = vunpack.c.l.b16 %v853
  %v910 = vunpack.c.l.b16 %v854
  %v911 = vpack.c.b16 %v904, %v903
  %v912 = vpack.c.b16 %v906, %v905
  %v913 = vpack.c.b16 %v908, %v907
  %v914 = vpack.c.b16 %v910, %v909
  %v920 = vsel %vm357, %v887, 0
  %v923 = vsel %vm357, %v888, 0
  %v926 = vsel %vm357, %v889, 0
  %v929 = vsel %vm357, %v890, 0
  %v932 = vsel %vm357, %v891, 0
  %v935 = vsel %vm357, %v892, 0
  %v938 = vsel %vm357, %v893, 0
  %v941 = vsel %vm357, %v894, 0
  %943 = vmatpush.bf16.msra.mxu0 0
  %944 = vmatpush.bf16.msra.mxu0 0
  %945 = vmatpush.bf16.msra.mxu0 0
  %946 = vmatpush.bf16.msra.mxu0 0
  %947 = vmatpush.bf16.msra.mxu0 %v914
  %948 = vmatpush.bf16.msra.mxu0 %v913
  %949 = vmatpush.bf16.msra.mxu0 %v912
  %950 = vmatpush.bf16.msra.mxu0 %v911
  %951 = vmatmul.bf16.gmra.mxu0 %v920
  %v952 = vpop.f32.mrf.mxu0
  %v953 = vadd.f32 0.0, %v952
  %v954 = vpop.f32.mrf.mxu0
  %v955 = vadd.f32 0.0, %v954
  %956 = vmatmul.bf16.gmra.mxu0 %v923
  %v957 = vpop.f32.mrf.mxu0
  %v958 = vadd.f32 0.0, %v957
  %v959 = vpop.f32.mrf.mxu0
  %v960 = vadd.f32 0.0, %v959
  %961 = vmatmul.bf16.gmra.mxu0 %v926
  %v962 = vpop.f32.mrf.mxu0
  %v963 = vadd.f32 0.0, %v962
  %v964 = vpop.f32.mrf.mxu0
  %v965 = vadd.f32 0.0, %v964
  %966 = vmatmul.bf16.gmra.mxu0 %v929
  %v967 = vpop.f32.mrf.mxu0
  %v968 = vadd.f32 0.0, %v967
  %v969 = vpop.f32.mrf.mxu0
  %v970 = vadd.f32 0.0, %v969
  %971 = vmatmul.bf16.gmra.mxu0 %v932
  %v972 = vpop.f32.mrf.mxu0
  %v973 = vadd.f32 0.0, %v972
  %v974 = vpop.f32.mrf.mxu0
  %v975 = vadd.f32 0.0, %v974
  %976 = vmatmul.bf16.gmra.mxu0 %v935
  %v977 = vpop.f32.mrf.mxu0
  %v978 = vadd.f32 0.0, %v977
  %v979 = vpop.f32.mrf.mxu0
  %v980 = vadd.f32 0.0, %v979
  %981 = vmatmul.bf16.gmra.mxu0 %v938
  %v982 = vpop.f32.mrf.mxu0
  %v983 = vadd.f32 0.0, %v982
  %v984 = vpop.f32.mrf.mxu0
  %v985 = vadd.f32 0.0, %v984
  %986 = vmatmul.bf16.gmra.mxu0 %v941
  %v987 = vpop.f32.mrf.mxu0
  %v988 = vadd.f32 0.0, %v987
  %v989 = vpop.f32.mrf.mxu0
  %v990 = vadd.f32 0.0, %v989
  %991 = vdwg.mxu0
  %v992 = vadd.f32 %v813, %v953
  %v993 = vadd.f32 %v814, %v955
  %v994 = vadd.f32 %v815, %v958
  %v995 = vadd.f32 %v816, %v960
  %v996 = vadd.f32 %v817, %v963
  %v997 = vadd.f32 %v818, %v965
  %v998 = vadd.f32 %v819, %v968
  %v999 = vadd.f32 %v820, %v970
  %v1000 = vadd.f32 %v821, %v973
  %v1001 = vadd.f32 %v822, %v975
  %v1002 = vadd.f32 %v823, %v978
  %v1003 = vadd.f32 %v824, %v980
  %v1004 = vadd.f32 %v825, %v983
  %v1005 = vadd.f32 %v826, %v985
  %v1006 = vadd.f32 %v827, %v988
  %v1007 = vadd.f32 %v828, %v990
  %v1008 = vld [vmem:[%s829] sm:$0xf]
  %v1009 = vld [vmem:[%s829 + $0x4] sm:$0x1]
  %v1010 = vld [vmem:[%s829 + $0x8] sm:$0xf]
  %v1011 = vld [vmem:[%s829 + $0xc] sm:$0x1]
  %v1012 = vld [vmem:[%s829 + $0x10] sm:$0xf]
  %v1013 = vld [vmem:[%s829 + $0x14] sm:$0x1]
  %v1014 = vld [vmem:[%s829 + $0x18] sm:$0xf]
  %v1015 = vld [vmem:[%s829 + $0x1c] sm:$0x1]
  %v1016 = vld [vmem:[%s829 + $0x20] sm:$0xf]
  %v1017 = vld [vmem:[%s829 + $0x24] sm:$0x1]
  %v1018 = vld [vmem:[%s829 + $0x28] sm:$0xf]
  %v1019 = vld [vmem:[%s829 + $0x2c] sm:$0x1]
  %v1020 = vld [vmem:[%s829 + $0x30] sm:$0xf]
  %v1021 = vld [vmem:[%s829 + $0x34] sm:$0x1]
  %v1022 = vld [vmem:[%s829 + $0x38] sm:$0xf]
  %v1023 = vld [vmem:[%s829 + $0x3c] sm:$0x1]
  %v1024 = vld [vmem:[%s829 + $0x50] sm:$0xf]
  %v1025 = vld [vmem:[%s829 + $0x54] sm:$0x1]
  %v1026 = vld [vmem:[%s829 + $0x58] sm:$0xf]
  %v1027 = vld [vmem:[%s829 + $0x5c] sm:$0x1]
  %v1028 = vld [vmem:[%s829 + $0x60] sm:$0xf]
  %v1029 = vld [vmem:[%s829 + $0x64] sm:$0x1]
  %v1030 = vld [vmem:[%s829 + $0x68] sm:$0xf]
  %v1031 = vld [vmem:[%s829 + $0x6c] sm:$0x1]
  %v1032 = vld [vmem:[%s829 + $0x70] sm:$0xf]
  %v1033 = vld [vmem:[%s829 + $0x74] sm:$0x1]
  %v1034 = vld [vmem:[%s829 + $0x78] sm:$0xf]
  %v1035 = vld [vmem:[%s829 + $0x7c] sm:$0x1]
  %v1036 = vld [vmem:[%s829 + $0x80] sm:$0xf]
  %v1037 = vld [vmem:[%s829 + $0x84] sm:$0x1]
  %v1038 = vld [vmem:[%s829 + $0x88] sm:$0xf]
  %v1039 = vld [vmem:[%s829 + $0x8c] sm:$0x1]
  %v1041 = vshrl.u32 %v1008, 16
  %v1043 = vrot.slane %v1041, 4
  %v1044 = vshll.u32 %v1008, 16
  %v1046 = vrot.slane %v1044, 5
  %v1047 = vor.u32 %v1043, %v1046
  %v1048 = vrot.slane %v1047, 4
  %v1050 = vshll.u32 %v1009, 16
  %v1052 = vrot.slane %v1050, 5
  %v1053 = vsel %vm75, %v1048, %v1052
  %v1055 = vshrl.u32 %v1010, 16
  %v1057 = vrot.slane %v1055, 4
  %v1058 = vshll.u32 %v1010, 16
  %v1060 = vrot.slane %v1058, 5
  %v1061 = vor.u32 %v1057, %v1060
  %v1062 = vrot.slane %v1061, 4
  %v1064 = vshll.u32 %v1011, 16
  %v1066 = vrot.slane %v1064, 5
  %v1067 = vsel %vm75, %v1062, %v1066
  %v1069 = vshrl.u32 %v1012, 16
  %v1071 = vrot.slane %v1069, 4
  %v1072 = vshll.u32 %v1012, 16
  %v1074 = vrot.slane %v1072, 5
  %v1075 = vor.u32 %v1071, %v1074
  %v1076 = vrot.slane %v1075, 4
  %v1078 = vshll.u32 %v1013, 16
  %v1080 = vrot.slane %v1078, 5
  %v1081 = vsel %vm75, %v1076, %v1080
  %v1083 = vshrl.u32 %v1014, 16
  %v1085 = vrot.slane %v1083, 4
  %v1086 = vshll.u32 %v1014, 16
  %v1088 = vrot.slane %v1086, 5
  %v1089 = vor.u32 %v1085, %v1088
  %v1090 = vrot.slane %v1089, 4
  %v1092 = vshll.u32 %v1015, 16
  %v1094 = vrot.slane %v1092, 5
  %v1095 = vsel %vm75, %v1090, %v1094
  %v1097 = vshrl.u32 %v1016, 16
  %v1099 = vrot.slane %v1097, 4
  %v1100 = vshll.u32 %v1016, 16
  %v1102 = vrot.slane %v1100, 5
  %v1103 = vor.u32 %v1099, %v1102
  %v1104 = vrot.slane %v1103, 4
  %v1106 = vshll.u32 %v1017, 16
  %v1108 = vrot.slane %v1106, 5
  %v1109 = vsel %vm75, %v1104, %v1108
  %v1111 = vshrl.u32 %v1018, 16
  %v1113 = vrot.slane %v1111, 4
  %v1114 = vshll.u32 %v1018, 16
  %v1116 = vrot.slane %v1114, 5
  %v1117 = vor.u32 %v1113, %v1116
  %v1118 = vrot.slane %v1117, 4
  %v1120 = vshll.u32 %v1019, 16
  %v1122 = vrot.slane %v1120, 5
  %v1123 = vsel %vm75, %v1118, %v1122
  %v1125 = vshrl.u32 %v1020, 16
  %v1127 = vrot.slane %v1125, 4
  %v1128 = vshll.u32 %v1020, 16
  %v1130 = vrot.slane %v1128, 5
  %v1131 = vor.u32 %v1127, %v1130
  %v1132 = vrot.slane %v1131, 4
  %v1134 = vshll.u32 %v1021, 16
  %v1136 = vrot.slane %v1134, 5
  %v1137 = vsel %vm75, %v1132, %v1136
  %v1139 = vshrl.u32 %v1022, 16
  %v1141 = vrot.slane %v1139, 4
  %v1142 = vshll.u32 %v1022, 16
  %v1144 = vrot.slane %v1142, 5
  %v1145 = vor.u32 %v1141, %v1144
  %v1146 = vrot.slane %v1145, 4
  %v1148 = vshll.u32 %v1023, 16
  %v1150 = vrot.slane %v1148, 5
  %v1151 = vsel %vm75, %v1146, %v1150
  %v1153 = vshrl.u32 %v1024, 16
  %v1155 = vrot.slane %v1153, 4
  %v1156 = vshll.u32 %v1024, 16
  %v1158 = vrot.slane %v1156, 5
  %v1159 = vor.u32 %v1155, %v1158
  %v1160 = vrot.slane %v1159, 4
  %v1162 = vshll.u32 %v1025, 16
  %v1164 = vrot.slane %v1162, 5
  %v1165 = vsel %vm75, %v1160, %v1164
  %v1167 = vshrl.u32 %v1026, 16
  %v1169 = vrot.slane %v1167, 4
  %v1170 = vshll.u32 %v1026, 16
  %v1172 = vrot.slane %v1170, 5
  %v1173 = vor.u32 %v1169, %v1172
  %v1174 = vrot.slane %v1173, 4
  %v1176 = vshll.u32 %v1027, 16
  %v1178 = vrot.slane %v1176, 5
  %v1179 = vsel %vm75, %v1174, %v1178
  %v1181 = vshrl.u32 %v1028, 16
  %v1183 = vrot.slane %v1181, 4
  %v1184 = vshll.u32 %v1028, 16
  %v1186 = vrot.slane %v1184, 5
  %v1187 = vor.u32 %v1183, %v1186
  %v1188 = vrot.slane %v1187, 4
  %v1190 = vshll.u32 %v1029, 16
  %v1192 = vrot.slane %v1190, 5
  %v1193 = vsel %vm75, %v1188, %v1192
  %v1195 = vshrl.u32 %v1030, 16
  %v1197 = vrot.slane %v1195, 4
  %v1198 = vshll.u32 %v1030, 16
  %v1200 = vrot.slane %v1198, 5
  %v1201 = vor.u32 %v1197, %v1200
  %v1202 = vrot.slane %v1201, 4
  %v1204 = vshll.u32 %v1031, 16
  %v1206 = vrot.slane %v1204, 5
  %v1207 = vsel %vm75, %v1202, %v1206
  %v1209 = vshrl.u32 %v1032, 16
  %v1211 = vrot.slane %v1209, 4
  %v1212 = vshll.u32 %v1032, 16
  %v1214 = vrot.slane %v1212, 5
  %v1215 = vor.u32 %v1211, %v1214
  %v1216 = vrot.slane %v1215, 4
  %v1218 = vshll.u32 %v1033, 16
  %v1220 = vrot.slane %v1218, 5
  %v1221 = vsel %vm75, %v1216, %v1220
  %v1223 = vshrl.u32 %v1034, 16
  %v1225 = vrot.slane %v1223, 4
  %v1226 = vshll.u32 %v1034, 16
  %v1228 = vrot.slane %v1226, 5
  %v1229 = vor.u32 %v1225, %v1228
  %v1230 = vrot.slane %v1229, 4
  %v1232 = vshll.u32 %v1035, 16
  %v1234 = vrot.slane %v1232, 5
  %v1235 = vsel %vm75, %v1230, %v1234
  %v1237 = vshrl.u32 %v1036, 16
  %v1239 = vrot.slane %v1237, 4
  %v1240 = vshll.u32 %v1036, 16
  %v1242 = vrot.slane %v1240, 5
  %v1243 = vor.u32 %v1239, %v1242
  %v1244 = vrot.slane %v1243, 4
  %v1246 = vshll.u32 %v1037, 16
  %v1248 = vrot.slane %v1246, 5
  %v1249 = vsel %vm75, %v1244, %v1248
  %v1251 = vshrl.u32 %v1038, 16
  %v1253 = vrot.slane %v1251, 4
  %v1254 = vshll.u32 %v1038, 16
  %v1256 = vrot.slane %v1254, 5
  %v1257 = vor.u32 %v1253, %v1256
  %v1258 = vrot.slane %v1257, 4
  %v1260 = vshll.u32 %v1039, 16
  %v1262 = vrot.slane %v1260, 5
  %v1263 = vsel %vm75, %v1258, %v1262
  %s1264 = scalar_lea.vmem %s1, 128
  %v1265 = vld [vmem:[%s1264] sm:$0xf]
  %v1266 = vld [vmem:[%s1264 + $0x4] sm:$0xf]
  %v1267 = vld [vmem:[%s1264 + $0x8] sm:$0xf]
  %v1268 = vld [vmem:[%s1264 + $0xc] sm:$0xf]
  %v1269 = vld [vmem:[%s1264 + $0x10] sm:$0xf]
  %v1270 = vld [vmem:[%s1264 + $0x14] sm:$0xf]
  %v1271 = vld [vmem:[%s1264 + $0x18] sm:$0xf]
  %v1272 = vld [vmem:[%s1264 + $0x1c] sm:$0xf]
  %v1273 = vunpack.c.l.b16 %v1053
  %v1274 = vunpack.c.l.b16 %v1067
  %v1275 = vunpack.c.l.b16 %v1081
  %v1276 = vunpack.c.l.b16 %v1095
  %v1277 = vunpack.c.l.b16 %v1109
  %v1278 = vunpack.c.l.b16 %v1123
  %v1279 = vunpack.c.l.b16 %v1137
  %v1280 = vunpack.c.l.b16 %v1151
  %v1281 = vunpack.c.l.b16 %v1165
  %v1282 = vunpack.c.l.b16 %v1179
  %v1283 = vunpack.c.l.b16 %v1193
  %v1284 = vunpack.c.l.b16 %v1207
  %v1285 = vunpack.c.l.b16 %v1221
  %v1286 = vunpack.c.l.b16 %v1235
  %v1287 = vunpack.c.l.b16 %v1249
  %v1288 = vunpack.c.l.b16 %v1263
  %v1289 = vpack.c.b16 %v1274, %v1273
  %v1290 = vpack.c.b16 %v1276, %v1275
  %v1291 = vpack.c.b16 %v1278, %v1277
  %v1292 = vpack.c.b16 %v1280, %v1279
  %v1293 = vpack.c.b16 %v1282, %v1281
  %v1294 = vpack.c.b16 %v1284, %v1283
  %v1295 = vpack.c.b16 %v1286, %v1285
  %v1296 = vpack.c.b16 %v1288, %v1287
  %v1305 = vunpack.c.l.b16 %v1265
  %v1306 = vunpack.c.l.b16 %v1266
  %v1307 = vunpack.c.l.b16 %v1267
  %v1308 = vunpack.c.l.b16 %v1268
  %v1309 = vunpack.c.l.b16 %v1269
  %v1310 = vunpack.c.l.b16 %v1270
  %v1311 = vunpack.c.l.b16 %v1271
  %v1312 = vunpack.c.l.b16 %v1272
  %v1313 = vpack.c.b16 %v1306, %v1305
  %v1314 = vpack.c.b16 %v1308, %v1307
  %v1315 = vpack.c.b16 %v1310, %v1309
  %v1316 = vpack.c.b16 %v1312, %v1311
  %v1322 = vsel %vm357, %v1289, 0
  %v1325 = vsel %vm357, %v1290, 0
  %v1328 = vsel %vm357, %v1291, 0
  %v1331 = vsel %vm357, %v1292, 0
  %v1334 = vsel %vm357, %v1293, 0
  %v1337 = vsel %vm357, %v1294, 0
  %v1340 = vsel %vm357, %v1295, 0
  %v1343 = vsel %vm357, %v1296, 0
  %1345 = vmatpush.bf16.msra.mxu0 0
  %1346 = vmatpush.bf16.msra.mxu0 0
  %1347 = vmatpush.bf16.msra.mxu0 0
  %1348 = vmatpush.bf16.msra.mxu0 0
  %1349 = vmatpush.bf16.msra.mxu0 %v1316
  %1350 = vmatpush.bf16.msra.mxu0 %v1315
  %1351 = vmatpush.bf16.msra.mxu0 %v1314
  %1352 = vmatpush.bf16.msra.mxu0 %v1313
  %1353 = vmatmul.bf16.gmra.mxu0 %v1322
  %v1354 = vpop.f32.mrf.mxu0
  %v1355 = vadd.f32 0.0, %v1354
  %v1356 = vpop.f32.mrf.mxu0
  %v1357 = vadd.f32 0.0, %v1356
  %1358 = vmatmul.bf16.gmra.mxu0 %v1325
  %v1359 = vpop.f32.mrf.mxu0
  %v1360 = vadd.f32 0.0, %v1359
  %v1361 = vpop.f32.mrf.mxu0
  %v1362 = vadd.f32 0.0, %v1361
  %1363 = vmatmul.bf16.gmra.mxu0 %v1328
  %v1364 = vpop.f32.mrf.mxu0
  %v1365 = vadd.f32 0.0, %v1364
  %v1366 = vpop.f32.mrf.mxu0
  %v1367 = vadd.f32 0.0, %v1366
  %1368 = vmatmul.bf16.gmra.mxu0 %v1331
  %v1369 = vpop.f32.mrf.mxu0
  %v1370 = vadd.f32 0.0, %v1369
  %v1371 = vpop.f32.mrf.mxu0
  %v1372 = vadd.f32 0.0, %v1371
  %1373 = vmatmul.bf16.gmra.mxu0 %v1334
  %v1374 = vpop.f32.mrf.mxu0
  %v1375 = vadd.f32 0.0, %v1374
  %v1376 = vpop.f32.mrf.mxu0
  %v1377 = vadd.f32 0.0, %v1376
  %1378 = vmatmul.bf16.gmra.mxu0 %v1337
  %v1379 = vpop.f32.mrf.mxu0
  %v1380 = vadd.f32 0.0, %v1379
  %v1381 = vpop.f32.mrf.mxu0
  %v1382 = vadd.f32 0.0, %v1381
  %1383 = vmatmul.bf16.gmra.mxu0 %v1340
  %v1384 = vpop.f32.mrf.mxu0
  %v1385 = vadd.f32 0.0, %v1384
  %v1386 = vpop.f32.mrf.mxu0
  %v1387 = vadd.f32 0.0, %v1386
  %1388 = vmatmul.bf16.gmra.mxu0 %v1343
  %v1389 = vpop.f32.mrf.mxu0
  %v1390 = vadd.f32 0.0, %v1389
  %v1391 = vpop.f32.mrf.mxu0
  %v1392 = vadd.f32 0.0, %v1391
  %1393 = vdwg.mxu0
  %v1394 = vadd.f32 %v992, %v1355
  %v1395 = vadd.f32 %v993, %v1357
  %v1396 = vadd.f32 %v994, %v1360
  %v1397 = vadd.f32 %v995, %v1362
  %v1398 = vadd.f32 %v996, %v1365
  %v1399 = vadd.f32 %v997, %v1367
  %v1400 = vadd.f32 %v998, %v1370
  %v1401 = vadd.f32 %v999, %v1372
  %v1402 = vadd.f32 %v1000, %v1375
  %v1403 = vadd.f32 %v1001, %v1377
  %v1404 = vadd.f32 %v1002, %v1380
  %v1405 = vadd.f32 %v1003, %v1382
  %v1406 = vadd.f32 %v1004, %v1385
  %v1407 = vadd.f32 %v1005, %v1387
  %v1408 = vadd.f32 %v1006, %v1390
  %v1409 = vadd.f32 %v1007, %v1392
  %v1410 = vld [vmem:[%s829] sm:$0xe]
  %v1411 = vld [vmem:[%s829 + $0x8] sm:$0xe]
  %v1412 = vld [vmem:[%s829 + $0x10] sm:$0xe]
  %v1413 = vld [vmem:[%s829 + $0x18] sm:$0xe]
  %v1414 = vld [vmem:[%s829 + $0x20] sm:$0xe]
  %v1415 = vld [vmem:[%s829 + $0x28] sm:$0xe]
  %v1416 = vld [vmem:[%s829 + $0x30] sm:$0xe]
  %v1417 = vld [vmem:[%s829 + $0x38] sm:$0xe]
  %v1418 = vld [vmem:[%s829 + $0x50] sm:$0xe]
  %v1419 = vld [vmem:[%s829 + $0x58] sm:$0xe]
  %v1420 = vld [vmem:[%s829 + $0x60] sm:$0xe]
  %v1421 = vld [vmem:[%s829 + $0x68] sm:$0xe]
  %v1422 = vld [vmem:[%s829 + $0x70] sm:$0xe]
  %v1423 = vld [vmem:[%s829 + $0x78] sm:$0xe]
  %v1424 = vld [vmem:[%s829 + $0x80] sm:$0xe]
  %v1425 = vld [vmem:[%s829 + $0x88] sm:$0xe]
  %v1458 = vrot.slane %v1410, 5
  %v1459 = vrot.slane %v1458, 4
  %v1460 = vrot.slane %v1009, 5
  %v1461 = vsel %vm618, %v1459, %v1460
  %v1462 = vrot.slane %v1411, 5
  %v1463 = vrot.slane %v1462, 4
  %v1464 = vrot.slane %v1011, 5
  %v1465 = vsel %vm618, %v1463, %v1464
  %v1466 = vrot.slane %v1412, 5
  %v1467 = vrot.slane %v1466, 4
  %v1468 = vrot.slane %v1013, 5
  %v1469 = vsel %vm618, %v1467, %v1468
  %v1470 = vrot.slane %v1413, 5
  %v1471 = vrot.slane %v1470, 4
  %v1472 = vrot.slane %v1015, 5
  %v1473 = vsel %vm618, %v1471, %v1472
  %v1474 = vrot.slane %v1414, 5
  %v1475 = vrot.slane %v1474, 4
  %v1476 = vrot.slane %v1017, 5
  %v1477 = vsel %vm618, %v1475, %v1476
  %v1478 = vrot.slane %v1415, 5
  %v1479 = vrot.slane %v1478, 4
  %v1480 = vrot.slane %v1019, 5
  %v1481 = vsel %vm618, %v1479, %v1480
  %v1482 = vrot.slane %v1416, 5
  %v1483 = vrot.slane %v1482, 4
  %v1484 = vrot.slane %v1021, 5
  %v1485 = vsel %vm618, %v1483, %v1484
  %v1486 = vrot.slane %v1417, 5
  %v1487 = vrot.slane %v1486, 4
  %v1488 = vrot.slane %v1023, 5
  %v1489 = vsel %vm618, %v1487, %v1488
  %v1490 = vrot.slane %v1418, 5
  %v1491 = vrot.slane %v1490, 4
  %v1492 = vrot.slane %v1025, 5
  %v1493 = vsel %vm618, %v1491, %v1492
  %v1494 = vrot.slane %v1419, 5
  %v1495 = vrot.slane %v1494, 4
  %v1496 = vrot.slane %v1027, 5
  %v1497 = vsel %vm618, %v1495, %v1496
  %v1498 = vrot.slane %v1420, 5
  %v1499 = vrot.slane %v1498, 4
  %v1500 = vrot.slane %v1029, 5
  %v1501 = vsel %vm618, %v1499, %v1500
  %v1502 = vrot.slane %v1421, 5
  %v1503 = vrot.slane %v1502, 4
  %v1504 = vrot.slane %v1031, 5
  %v1505 = vsel %vm618, %v1503, %v1504
  %v1506 = vrot.slane %v1422, 5
  %v1507 = vrot.slane %v1506, 4
  %v1508 = vrot.slane %v1033, 5
  %v1509 = vsel %vm618, %v1507, %v1508
  %v1510 = vrot.slane %v1423, 5
  %v1511 = vrot.slane %v1510, 4
  %v1512 = vrot.slane %v1035, 5
  %v1513 = vsel %vm618, %v1511, %v1512
  %v1514 = vrot.slane %v1424, 5
  %v1515 = vrot.slane %v1514, 4
  %v1516 = vrot.slane %v1037, 5
  %v1517 = vsel %vm618, %v1515, %v1516
  %v1518 = vrot.slane %v1425, 5
  %v1519 = vrot.slane %v1518, 4
  %v1520 = vrot.slane %v1039, 5
  %v1521 = vsel %vm618, %v1519, %v1520
  %s1522 = scalar_lea.vmem %s1, 160
  %v1523 = vld [vmem:[%s1522] sm:$0xf]
  %v1524 = vld [vmem:[%s1522 + $0x4] sm:$0xf]
  %v1525 = vld [vmem:[%s1522 + $0x8] sm:$0xf]
  %v1526 = vld [vmem:[%s1522 + $0xc] sm:$0xf]
  %v1527 = vld [vmem:[%s1522 + $0x10] sm:$0xf]
  %v1528 = vld [vmem:[%s1522 + $0x14] sm:$0xf]
  %v1529 = vld [vmem:[%s1522 + $0x18] sm:$0xf]
  %v1530 = vld [vmem:[%s1522 + $0x1c] sm:$0xf]
  %v1531 = vunpack.c.l.b16 %v1461
  %v1532 = vunpack.c.l.b16 %v1465
  %v1533 = vunpack.c.l.b16 %v1469
  %v1534 = vunpack.c.l.b16 %v1473
  %v1535 = vunpack.c.l.b16 %v1477
  %v1536 = vunpack.c.l.b16 %v1481
  %v1537 = vunpack.c.l.b16 %v1485
  %v1538 = vunpack.c.l.b16 %v1489
  %v1539 = vunpack.c.l.b16 %v1493
  %v1540 = vunpack.c.l.b16 %v1497
  %v1541 = vunpack.c.l.b16 %v1501
  %v1542 = vunpack.c.l.b16 %v1505
  %v1543 = vunpack.c.l.b16 %v1509
  %v1544 = vunpack.c.l.b16 %v1513
  %v1545 = vunpack.c.l.b16 %v1517
  %v1546 = vunpack.c.l.b16 %v1521
  %v1547 = vpack.c.b16 %v1532, %v1531
  %v1548 = vpack.c.b16 %v1534, %v1533
  %v1549 = vpack.c.b16 %v1536, %v1535
  %v1550 = vpack.c.b16 %v1538, %v1537
  %v1551 = vpack.c.b16 %v1540, %v1539
  %v1552 = vpack.c.b16 %v1542, %v1541
  %v1553 = vpack.c.b16 %v1544, %v1543
  %v1554 = vpack.c.b16 %v1546, %v1545
  %v1563 = vunpack.c.l.b16 %v1523
  %v1564 = vunpack.c.l.b16 %v1524
  %v1565 = vunpack.c.l.b16 %v1525
  %v1566 = vunpack.c.l.b16 %v1526
  %v1567 = vunpack.c.l.b16 %v1527
  %v1568 = vunpack.c.l.b16 %v1528
  %v1569 = vunpack.c.l.b16 %v1529
  %v1570 = vunpack.c.l.b16 %v1530
  %v1571 = vpack.c.b16 %v1564, %v1563
  %v1572 = vpack.c.b16 %v1566, %v1565
  %v1573 = vpack.c.b16 %v1568, %v1567
  %v1574 = vpack.c.b16 %v1570, %v1569
  %v1580 = vsel %vm357, %v1547, 0
  %v1583 = vsel %vm357, %v1548, 0
  %v1586 = vsel %vm357, %v1549, 0
  %v1589 = vsel %vm357, %v1550, 0
  %v1592 = vsel %vm357, %v1551, 0
  %v1595 = vsel %vm357, %v1552, 0
  %v1598 = vsel %vm357, %v1553, 0
  %v1601 = vsel %vm357, %v1554, 0
  %1603 = vmatpush.bf16.msra.mxu0 0
  %1604 = vmatpush.bf16.msra.mxu0 0
  %1605 = vmatpush.bf16.msra.mxu0 0
  %1606 = vmatpush.bf16.msra.mxu0 0
  %1607 = vmatpush.bf16.msra.mxu0 %v1574
  %1608 = vmatpush.bf16.msra.mxu0 %v1573
  %1609 = vmatpush.bf16.msra.mxu0 %v1572
  %1610 = vmatpush.bf16.msra.mxu0 %v1571
  %1611 = vmatmul.bf16.gmra.mxu0 %v1580
  %v1612 = vpop.f32.mrf.mxu0
  %v1613 = vadd.f32 0.0, %v1612
  %v1614 = vpop.f32.mrf.mxu0
  %v1615 = vadd.f32 0.0, %v1614
  %1616 = vmatmul.bf16.gmra.mxu0 %v1583
  %v1617 = vpop.f32.mrf.mxu0
  %v1618 = vadd.f32 0.0, %v1617
  %v1619 = vpop.f32.mrf.mxu0
  %v1620 = vadd.f32 0.0, %v1619
  %1621 = vmatmul.bf16.gmra.mxu0 %v1586
  %v1622 = vpop.f32.mrf.mxu0
  %v1623 = vadd.f32 0.0, %v1622
  %v1624 = vpop.f32.mrf.mxu0
  %v1625 = vadd.f32 0.0, %v1624
  %1626 = vmatmul.bf16.gmra.mxu0 %v1589
  %v1627 = vpop.f32.mrf.mxu0
  %v1628 = vadd.f32 0.0, %v1627
  %v1629 = vpop.f32.mrf.mxu0
  %v1630 = vadd.f32 0.0, %v1629
  %1631 = vmatmul.bf16.gmra.mxu0 %v1592
  %v1632 = vpop.f32.mrf.mxu0
  %v1633 = vadd.f32 0.0, %v1632
  %v1634 = vpop.f32.mrf.mxu0
  %v1635 = vadd.f32 0.0, %v1634
  %1636 = vmatmul.bf16.gmra.mxu0 %v1595
  %v1637 = vpop.f32.mrf.mxu0
  %v1638 = vadd.f32 0.0, %v1637
  %v1639 = vpop.f32.mrf.mxu0
  %v1640 = vadd.f32 0.0, %v1639
  %1641 = vmatmul.bf16.gmra.mxu0 %v1598
  %v1642 = vpop.f32.mrf.mxu0
  %v1643 = vadd.f32 0.0, %v1642
  %v1644 = vpop.f32.mrf.mxu0
  %v1645 = vadd.f32 0.0, %v1644
  %1646 = vmatmul.bf16.gmra.mxu0 %v1601
  %v1647 = vpop.f32.mrf.mxu0
  %v1648 = vadd.f32 0.0, %v1647
  %v1649 = vpop.f32.mrf.mxu0
  %v1650 = vadd.f32 0.0, %v1649
  %1651 = vdwg.mxu0
  %v1652 = vadd.f32 %v1394, %v1613
  %v1653 = vadd.f32 %v1395, %v1615
  %v1654 = vadd.f32 %v1396, %v1618
  %v1655 = vadd.f32 %v1397, %v1620
  %v1656 = vadd.f32 %v1398, %v1623
  %v1657 = vadd.f32 %v1399, %v1625
  %v1658 = vadd.f32 %v1400, %v1628
  %v1659 = vadd.f32 %v1401, %v1630
  %v1660 = vadd.f32 %v1402, %v1633
  %v1661 = vadd.f32 %v1403, %v1635
  %v1662 = vadd.f32 %v1404, %v1638
  %v1663 = vadd.f32 %v1405, %v1640
  %v1664 = vadd.f32 %v1406, %v1643
  %v1665 = vadd.f32 %v1407, %v1645
  %v1666 = vadd.f32 %v1408, %v1648
  %v1667 = vadd.f32 %v1409, %v1650
  %s1668 = scalar_lea.vmem %s0, 16
  %v1669 = vld [vmem:[%s1668] sm:$0xf]
  %v1670 = vld [vmem:[%s1668 + $0x8] sm:$0xf]
  %v1671 = vld [vmem:[%s1668 + $0x10] sm:$0xf]
  %v1672 = vld [vmem:[%s1668 + $0x18] sm:$0xf]
  %v1673 = vld [vmem:[%s1668 + $0x20] sm:$0xf]
  %v1674 = vld [vmem:[%s1668 + $0x28] sm:$0xf]
  %v1675 = vld [vmem:[%s1668 + $0x30] sm:$0xf]
  %v1676 = vld [vmem:[%s1668 + $0x38] sm:$0xf]
  %v1677 = vld [vmem:[%s1668 + $0x50] sm:$0xf]
  %v1678 = vld [vmem:[%s1668 + $0x58] sm:$0xf]
  %v1679 = vld [vmem:[%s1668 + $0x60] sm:$0xf]
  %v1680 = vld [vmem:[%s1668 + $0x68] sm:$0xf]
  %v1681 = vld [vmem:[%s1668 + $0x70] sm:$0xf]
  %v1682 = vld [vmem:[%s1668 + $0x78] sm:$0xf]
  %v1683 = vld [vmem:[%s1668 + $0x80] sm:$0xf]
  %v1684 = vld [vmem:[%s1668 + $0x88] sm:$0xf]
  %s1685 = scalar_lea.vmem %s1, 192
  %v1686 = vld [vmem:[%s1685] sm:$0xf]
  %v1687 = vld [vmem:[%s1685 + $0x4] sm:$0xf]
  %v1688 = vld [vmem:[%s1685 + $0x8] sm:$0xf]
  %v1689 = vld [vmem:[%s1685 + $0xc] sm:$0xf]
  %v1690 = vld [vmem:[%s1685 + $0x10] sm:$0xf]
  %v1691 = vld [vmem:[%s1685 + $0x14] sm:$0xf]
  %v1692 = vld [vmem:[%s1685 + $0x18] sm:$0xf]
  %v1693 = vld [vmem:[%s1685 + $0x1c] sm:$0xf]
  %v1710 = vunpack.c.l.b16 %v1669
  %v1711 = vunpack.c.l.b16 %v1670
  %v1712 = vunpack.c.l.b16 %v1671
  %v1713 = vunpack.c.l.b16 %v1672
  %v1714 = vunpack.c.l.b16 %v1673
  %v1715 = vunpack.c.l.b16 %v1674
  %v1716 = vunpack.c.l.b16 %v1675
  %v1717 = vunpack.c.l.b16 %v1676
  %v1718 = vunpack.c.l.b16 %v1677
  %v1719 = vunpack.c.l.b16 %v1678
  %v1720 = vunpack.c.l.b16 %v1679
  %v1721 = vunpack.c.l.b16 %v1680
  %v1722 = vunpack.c.l.b16 %v1681
  %v1723 = vunpack.c.l.b16 %v1682
  %v1724 = vunpack.c.l.b16 %v1683
  %v1725 = vunpack.c.l.b16 %v1684
  %v1726 = vpack.c.b16 %v1711, %v1710
  %v1727 = vpack.c.b16 %v1713, %v1712
  %v1728 = vpack.c.b16 %v1715, %v1714
  %v1729 = vpack.c.b16 %v1717, %v1716
  %v1730 = vpack.c.b16 %v1719, %v1718
  %v1731 = vpack.c.b16 %v1721, %v1720
  %v1732 = vpack.c.b16 %v1723, %v1722
  %v1733 = vpack.c.b16 %v1725, %v1724
  %v1742 = vunpack.c.l.b16 %v1686
  %v1743 = vunpack.c.l.b16 %v1687
  %v1744 = vunpack.c.l.b16 %v1688
  %v1745 = vunpack.c.l.b16 %v1689
  %v1746 = vunpack.c.l.b16 %v1690
  %v1747 = vunpack.c.l.b16 %v1691
  %v1748 = vunpack.c.l.b16 %v1692
  %v1749 = vunpack.c.l.b16 %v1693
  %v1750 = vpack.c.b16 %v1743, %v1742
  %v1751 = vpack.c.b16 %v1745, %v1744
  %v1752 = vpack.c.b16 %v1747, %v1746
  %v1753 = vpack.c.b16 %v1749, %v1748
  %v1759 = vsel %vm357, %v1726, 0
  %v1762 = vsel %vm357, %v1727, 0
  %v1765 = vsel %vm357, %v1728, 0
  %v1768 = vsel %vm357, %v1729, 0
  %v1771 = vsel %vm357, %v1730, 0
  %v1774 = vsel %vm357, %v1731, 0
  %v1777 = vsel %vm357, %v1732, 0
  %v1780 = vsel %vm357, %v1733, 0
  %1782 = vmatpush.bf16.msra.mxu0 0
  %1783 = vmatpush.bf16.msra.mxu0 0
  %1784 = vmatpush.bf16.msra.mxu0 0
  %1785 = vmatpush.bf16.msra.mxu0 0
  %1786 = vmatpush.bf16.msra.mxu0 %v1753
  %1787 = vmatpush.bf16.msra.mxu0 %v1752
  %1788 = vmatpush.bf16.msra.mxu0 %v1751
  %1789 = vmatpush.bf16.msra.mxu0 %v1750
  %1790 = vmatmul.bf16.gmra.mxu0 %v1759
  %v1791 = vpop.f32.mrf.mxu0
  %v1792 = vadd.f32 0.0, %v1791
  %v1793 = vpop.f32.mrf.mxu0
  %v1794 = vadd.f32 0.0, %v1793
  %1795 = vmatmul.bf16.gmra.mxu0 %v1762
  %v1796 = vpop.f32.mrf.mxu0
  %v1797 = vadd.f32 0.0, %v1796
  %v1798 = vpop.f32.mrf.mxu0
  %v1799 = vadd.f32 0.0, %v1798
  %1800 = vmatmul.bf16.gmra.mxu0 %v1765
  %v1801 = vpop.f32.mrf.mxu0
  %v1802 = vadd.f32 0.0, %v1801
  %v1803 = vpop.f32.mrf.mxu0
  %v1804 = vadd.f32 0.0, %v1803
  %1805 = vmatmul.bf16.gmra.mxu0 %v1768
  %v1806 = vpop.f32.mrf.mxu0
  %v1807 = vadd.f32 0.0, %v1806
  %v1808 = vpop.f32.mrf.mxu0
  %v1809 = vadd.f32 0.0, %v1808
  %1810 = vmatmul.bf16.gmra.mxu0 %v1771
  %v1811 = vpop.f32.mrf.mxu0
  %v1812 = vadd.f32 0.0, %v1811
  %v1813 = vpop.f32.mrf.mxu0
  %v1814 = vadd.f32 0.0, %v1813
  %1815 = vmatmul.bf16.gmra.mxu0 %v1774
  %v1816 = vpop.f32.mrf.mxu0
  %v1817 = vadd.f32 0.0, %v1816
  %v1818 = vpop.f32.mrf.mxu0
  %v1819 = vadd.f32 0.0, %v1818
  %1820 = vmatmul.bf16.gmra.mxu0 %v1777
  %v1821 = vpop.f32.mrf.mxu0
  %v1822 = vadd.f32 0.0, %v1821
  %v1823 = vpop.f32.mrf.mxu0
  %v1824 = vadd.f32 0.0, %v1823
  %1825 = vmatmul.bf16.gmra.mxu0 %v1780
  %v1826 = vpop.f32.mrf.mxu0
  %v1827 = vadd.f32 0.0, %v1826
  %v1828 = vpop.f32.mrf.mxu0
  %v1829 = vadd.f32 0.0, %v1828
  %1830 = vdwg.mxu0
  %v1831 = vadd.f32 %v1652, %v1792
  %v1832 = vadd.f32 %v1653, %v1794
  %v1833 = vadd.f32 %v1654, %v1797
  %v1834 = vadd.f32 %v1655, %v1799
  %v1835 = vadd.f32 %v1656, %v1802
  %v1836 = vadd.f32 %v1657, %v1804
  %v1837 = vadd.f32 %v1658, %v1807
  %v1838 = vadd.f32 %v1659, %v1809
  %v1839 = vadd.f32 %v1660, %v1812
  %v1840 = vadd.f32 %v1661, %v1814
  %v1841 = vadd.f32 %v1662, %v1817
  %v1842 = vadd.f32 %v1663, %v1819
  %v1843 = vadd.f32 %v1664, %v1822
  %v1844 = vadd.f32 %v1665, %v1824
  %v1845 = vadd.f32 %v1666, %v1827
  %v1846 = vadd.f32 %v1667, %v1829
  %v1847 = vld [vmem:[%s1668] sm:$0xf]
  %v1848 = vld [vmem:[%s1668 + $0x4] sm:$0x1]
  %v1849 = vld [vmem:[%s1668 + $0x8] sm:$0xf]
  %v1850 = vld [vmem:[%s1668 + $0xc] sm:$0x1]
  %v1851 = vld [vmem:[%s1668 + $0x10] sm:$0xf]
  %v1852 = vld [vmem:[%s1668 + $0x14] sm:$0x1]
  %v1853 = vld [vmem:[%s1668 + $0x18] sm:$0xf]
  %v1854 = vld [vmem:[%s1668 + $0x1c] sm:$0x1]
  %v1855 = vld [vmem:[%s1668 + $0x20] sm:$0xf]
  %v1856 = vld [vmem:[%s1668 + $0x24] sm:$0x1]
  %v1857 = vld [vmem:[%s1668 + $0x28] sm:$0xf]
  %v1858 = vld [vmem:[%s1668 + $0x2c] sm:$0x1]
  %v1859 = vld [vmem:[%s1668 + $0x30] sm:$0xf]
  %v1860 = vld [vmem:[%s1668 + $0x34] sm:$0x1]
  %v1861 = vld [vmem:[%s1668 + $0x38] sm:$0xf]
  %v1862 = vld [vmem:[%s1668 + $0x3c] sm:$0x1]
  %v1863 = vld [vmem:[%s1668 + $0x50] sm:$0xf]
  %v1864 = vld [vmem:[%s1668 + $0x54] sm:$0x1]
  %v1865 = vld [vmem:[%s1668 + $0x58] sm:$0xf]
  %v1866 = vld [vmem:[%s1668 + $0x5c] sm:$0x1]
  %v1867 = vld [vmem:[%s1668 + $0x60] sm:$0xf]
  %v1868 = vld [vmem:[%s1668 + $0x64] sm:$0x1]
  %v1869 = vld [vmem:[%s1668 + $0x68] sm:$0xf]
  %v1870 = vld [vmem:[%s1668 + $0x6c] sm:$0x1]
  %v1871 = vld [vmem:[%s1668 + $0x70] sm:$0xf]
  %v1872 = vld [vmem:[%s1668 + $0x74] sm:$0x1]
  %v1873 = vld [vmem:[%s1668 + $0x78] sm:$0xf]
  %v1874 = vld [vmem:[%s1668 + $0x7c] sm:$0x1]
  %v1875 = vld [vmem:[%s1668 + $0x80] sm:$0xf]
  %v1876 = vld [vmem:[%s1668 + $0x84] sm:$0x1]
  %v1877 = vld [vmem:[%s1668 + $0x88] sm:$0xf]
  %v1878 = vld [vmem:[%s1668 + $0x8c] sm:$0x1]
  %v1880 = vshrl.u32 %v1847, 16
  %v1882 = vrot.slane %v1880, 4
  %v1883 = vshll.u32 %v1847, 16
  %v1885 = vrot.slane %v1883, 5
  %v1886 = vor.u32 %v1882, %v1885
  %v1887 = vrot.slane %v1886, 4
  %v1889 = vshll.u32 %v1848, 16
  %v1891 = vrot.slane %v1889, 5
  %v1892 = vsel %vm75, %v1887, %v1891
  %v1894 = vshrl.u32 %v1849, 16
  %v1896 = vrot.slane %v1894, 4
  %v1897 = vshll.u32 %v1849, 16
  %v1899 = vrot.slane %v1897, 5
  %v1900 = vor.u32 %v1896, %v1899
  %v1901 = vrot.slane %v1900, 4
  %v1903 = vshll.u32 %v1850, 16
  %v1905 = vrot.slane %v1903, 5
  %v1906 = vsel %vm75, %v1901, %v1905
  %v1908 = vshrl.u32 %v1851, 16
  %v1910 = vrot.slane %v1908, 4
  %v1911 = vshll.u32 %v1851, 16
  %v1913 = vrot.slane %v1911, 5
  %v1914 = vor.u32 %v1910, %v1913
  %v1915 = vrot.slane %v1914, 4
  %v1917 = vshll.u32 %v1852, 16
  %v1919 = vrot.slane %v1917, 5
  %v1920 = vsel %vm75, %v1915, %v1919
  %v1922 = vshrl.u32 %v1853, 16
  %v1924 = vrot.slane %v1922, 4
  %v1925 = vshll.u32 %v1853, 16
  %v1927 = vrot.slane %v1925, 5
  %v1928 = vor.u32 %v1924, %v1927
  %v1929 = vrot.slane %v1928, 4
  %v1931 = vshll.u32 %v1854, 16
  %v1933 = vrot.slane %v1931, 5
  %v1934 = vsel %vm75, %v1929, %v1933
  %v1936 = vshrl.u32 %v1855, 16
  %v1938 = vrot.slane %v1936, 4
  %v1939 = vshll.u32 %v1855, 16
  %v1941 = vrot.slane %v1939, 5
  %v1942 = vor.u32 %v1938, %v1941
  %v1943 = vrot.slane %v1942, 4
  %v1945 = vshll.u32 %v1856, 16
  %v1947 = vrot.slane %v1945, 5
  %v1948 = vsel %vm75, %v1943, %v1947
  %v1950 = vshrl.u32 %v1857, 16
  %v1952 = vrot.slane %v1950, 4
  %v1953 = vshll.u32 %v1857, 16
  %v1955 = vrot.slane %v1953, 5
  %v1956 = vor.u32 %v1952, %v1955
  %v1957 = vrot.slane %v1956, 4
  %v1959 = vshll.u32 %v1858, 16
  %v1961 = vrot.slane %v1959, 5
  %v1962 = vsel %vm75, %v1957, %v1961
  %v1964 = vshrl.u32 %v1859, 16
  %v1966 = vrot.slane %v1964, 4
  %v1967 = vshll.u32 %v1859, 16
  %v1969 = vrot.slane %v1967, 5
  %v1970 = vor.u32 %v1966, %v1969
  %v1971 = vrot.slane %v1970, 4
  %v1973 = vshll.u32 %v1860, 16
  %v1975 = vrot.slane %v1973, 5
  %v1976 = vsel %vm75, %v1971, %v1975
  %v1978 = vshrl.u32 %v1861, 16
  %v1980 = vrot.slane %v1978, 4
  %v1981 = vshll.u32 %v1861, 16
  %v1983 = vrot.slane %v1981, 5
  %v1984 = vor.u32 %v1980, %v1983
  %v1985 = vrot.slane %v1984, 4
  %v1987 = vshll.u32 %v1862, 16
  %v1989 = vrot.slane %v1987, 5
  %v1990 = vsel %vm75, %v1985, %v1989
  %v1992 = vshrl.u32 %v1863, 16
  %v1994 = vrot.slane %v1992, 4
  %v1995 = vshll.u32 %v1863, 16
  %v1997 = vrot.slane %v1995, 5
  %v1998 = vor.u32 %v1994, %v1997
  %v1999 = vrot.slane %v1998, 4
  %v2001 = vshll.u32 %v1864, 16
  %v2003 = vrot.slane %v2001, 5
  %v2004 = vsel %vm75, %v1999, %v2003
  %v2006 = vshrl.u32 %v1865, 16
  %v2008 = vrot.slane %v2006, 4
  %v2009 = vshll.u32 %v1865, 16
  %v2011 = vrot.slane %v2009, 5
  %v2012 = vor.u32 %v2008, %v2011
  %v2013 = vrot.slane %v2012, 4
  %v2015 = vshll.u32 %v1866, 16
  %v2017 = vrot.slane %v2015, 5
  %v2018 = vsel %vm75, %v2013, %v2017
  %v2020 = vshrl.u32 %v1867, 16
  %v2022 = vrot.slane %v2020, 4
  %v2023 = vshll.u32 %v1867, 16
  %v2025 = vrot.slane %v2023, 5
  %v2026 = vor.u32 %v2022, %v2025
  %v2027 = vrot.slane %v2026, 4
  %v2029 = vshll.u32 %v1868, 16
  %v2031 = vrot.slane %v2029, 5
  %v2032 = vsel %vm75, %v2027, %v2031
  %v2034 = vshrl.u32 %v1869, 16
  %v2036 = vrot.slane %v2034, 4
  %v2037 = vshll.u32 %v1869, 16
  %v2039 = vrot.slane %v2037, 5
  %v2040 = vor.u32 %v2036, %v2039
  %v2041 = vrot.slane %v2040, 4
  %v2043 = vshll.u32 %v1870, 16
  %v2045 = vrot.slane %v2043, 5
  %v2046 = vsel %vm75, %v2041, %v2045
  %v2048 = vshrl.u32 %v1871, 16
  %v2050 = vrot.slane %v2048, 4
  %v2051 = vshll.u32 %v1871, 16
  %v2053 = vrot.slane %v2051, 5
  %v2054 = vor.u32 %v2050, %v2053
  %v2055 = vrot.slane %v2054, 4
  %v2057 = vshll.u32 %v1872, 16
  %v2059 = vrot.slane %v2057, 5
  %v2060 = vsel %vm75, %v2055, %v2059
  %v2062 = vshrl.u32 %v1873, 16
  %v2064 = vrot.slane %v2062, 4
  %v2065 = vshll.u32 %v1873, 16
  %v2067 = vrot.slane %v2065, 5
  %v2068 = vor.u32 %v2064, %v2067
  %v2069 = vrot.slane %v2068, 4
  %v2071 = vshll.u32 %v1874, 16
  %v2073 = vrot.slane %v2071, 5
  %v2074 = vsel %vm75, %v2069, %v2073
  %v2076 = vshrl.u32 %v1875, 16
  %v2078 = vrot.slane %v2076, 4
  %v2079 = vshll.u32 %v1875, 16
  %v2081 = vrot.slane %v2079, 5
  %v2082 = vor.u32 %v2078, %v2081
  %v2083 = vrot.slane %v2082, 4
  %v2085 = vshll.u32 %v1876, 16
  %v2087 = vrot.slane %v2085, 5
  %v2088 = vsel %vm75, %v2083, %v2087
  %v2090 = vshrl.u32 %v1877, 16
  %v2092 = vrot.slane %v2090, 4
  %v2093 = vshll.u32 %v1877, 16
  %v2095 = vrot.slane %v2093, 5
  %v2096 = vor.u32 %v2092, %v2095
  %v2097 = vrot.slane %v2096, 4
  %v2099 = vshll.u32 %v1878, 16
  %v2101 = vrot.slane %v2099, 5
  %v2102 = vsel %vm75, %v2097, %v2101
  %s2103 = scalar_lea.vmem %s1, 224
  %v2104 = vld [vmem:[%s2103] sm:$0xf]
  %v2105 = vld [vmem:[%s2103 + $0x4] sm:$0xf]
  %v2106 = vld [vmem:[%s2103 + $0x8] sm:$0xf]
  %v2107 = vld [vmem:[%s2103 + $0xc] sm:$0xf]
  %v2108 = vld [vmem:[%s2103 + $0x10] sm:$0xf]
  %v2109 = vld [vmem:[%s2103 + $0x14] sm:$0xf]
  %v2110 = vld [vmem:[%s2103 + $0x18] sm:$0xf]
  %v2111 = vld [vmem:[%s2103 + $0x1c] sm:$0xf]
  %v2112 = vunpack.c.l.b16 %v1892
  %v2113 = vunpack.c.l.b16 %v1906
  %v2114 = vunpack.c.l.b16 %v1920
  %v2115 = vunpack.c.l.b16 %v1934
  %v2116 = vunpack.c.l.b16 %v1948
  %v2117 = vunpack.c.l.b16 %v1962
  %v2118 = vunpack.c.l.b16 %v1976
  %v2119 = vunpack.c.l.b16 %v1990
  %v2120 = vunpack.c.l.b16 %v2004
  %v2121 = vunpack.c.l.b16 %v2018
  %v2122 = vunpack.c.l.b16 %v2032
  %v2123 = vunpack.c.l.b16 %v2046
  %v2124 = vunpack.c.l.b16 %v2060
  %v2125 = vunpack.c.l.b16 %v2074
  %v2126 = vunpack.c.l.b16 %v2088
  %v2127 = vunpack.c.l.b16 %v2102
  %v2128 = vpack.c.b16 %v2113, %v2112
  %v2129 = vpack.c.b16 %v2115, %v2114
  %v2130 = vpack.c.b16 %v2117, %v2116
  %v2131 = vpack.c.b16 %v2119, %v2118
  %v2132 = vpack.c.b16 %v2121, %v2120
  %v2133 = vpack.c.b16 %v2123, %v2122
  %v2134 = vpack.c.b16 %v2125, %v2124
  %v2135 = vpack.c.b16 %v2127, %v2126
  %v2144 = vunpack.c.l.b16 %v2104
  %v2145 = vunpack.c.l.b16 %v2105
  %v2146 = vunpack.c.l.b16 %v2106
  %v2147 = vunpack.c.l.b16 %v2107
  %v2148 = vunpack.c.l.b16 %v2108
  %v2149 = vunpack.c.l.b16 %v2109
  %v2150 = vunpack.c.l.b16 %v2110
  %v2151 = vunpack.c.l.b16 %v2111
  %v2152 = vpack.c.b16 %v2145, %v2144
  %v2153 = vpack.c.b16 %v2147, %v2146
  %v2154 = vpack.c.b16 %v2149, %v2148
  %v2155 = vpack.c.b16 %v2151, %v2150
  %v2161 = vsel %vm357, %v2128, 0
  %v2164 = vsel %vm357, %v2129, 0
  %v2167 = vsel %vm357, %v2130, 0
  %v2170 = vsel %vm357, %v2131, 0
  %v2173 = vsel %vm357, %v2132, 0
  %v2176 = vsel %vm357, %v2133, 0
  %v2179 = vsel %vm357, %v2134, 0
  %v2182 = vsel %vm357, %v2135, 0
  %2184 = vmatpush.bf16.msra.mxu0 0
  %2185 = vmatpush.bf16.msra.mxu0 0
  %2186 = vmatpush.bf16.msra.mxu0 0
  %2187 = vmatpush.bf16.msra.mxu0 0
  %2188 = vmatpush.bf16.msra.mxu0 %v2155
  %2189 = vmatpush.bf16.msra.mxu0 %v2154
  %2190 = vmatpush.bf16.msra.mxu0 %v2153
  %2191 = vmatpush.bf16.msra.mxu0 %v2152
  %2192 = vmatmul.bf16.gmra.mxu0 %v2161
  %v2193 = vpop.f32.mrf.mxu0
  %v2194 = vadd.f32 0.0, %v2193
  %v2195 = vpop.f32.mrf.mxu0
  %v2196 = vadd.f32 0.0, %v2195
  %2197 = vmatmul.bf16.gmra.mxu0 %v2164
  %v2198 = vpop.f32.mrf.mxu0
  %v2199 = vadd.f32 0.0, %v2198
  %v2200 = vpop.f32.mrf.mxu0
  %v2201 = vadd.f32 0.0, %v2200
  %2202 = vmatmul.bf16.gmra.mxu0 %v2167
  %v2203 = vpop.f32.mrf.mxu0
  %v2204 = vadd.f32 0.0, %v2203
  %v2205 = vpop.f32.mrf.mxu0
  %v2206 = vadd.f32 0.0, %v2205
  %2207 = vmatmul.bf16.gmra.mxu0 %v2170
  %v2208 = vpop.f32.mrf.mxu0
  %v2209 = vadd.f32 0.0, %v2208
  %v2210 = vpop.f32.mrf.mxu0
  %v2211 = vadd.f32 0.0, %v2210
  %2212 = vmatmul.bf16.gmra.mxu0 %v2173
  %v2213 = vpop.f32.mrf.mxu0
  %v2214 = vadd.f32 0.0, %v2213
  %v2215 = vpop.f32.mrf.mxu0
  %v2216 = vadd.f32 0.0, %v2215
  %2217 = vmatmul.bf16.gmra.mxu0 %v2176
  %v2218 = vpop.f32.mrf.mxu0
  %v2219 = vadd.f32 0.0, %v2218
  %v2220 = vpop.f32.mrf.mxu0
  %v2221 = vadd.f32 0.0, %v2220
  %2222 = vmatmul.bf16.gmra.mxu0 %v2179
  %v2223 = vpop.f32.mrf.mxu0
  %v2224 = vadd.f32 0.0, %v2223
  %v2225 = vpop.f32.mrf.mxu0
  %v2226 = vadd.f32 0.0, %v2225
  %2227 = vmatmul.bf16.gmra.mxu0 %v2182
  %v2228 = vpop.f32.mrf.mxu0
  %v2229 = vadd.f32 0.0, %v2228
  %v2230 = vpop.f32.mrf.mxu0
  %v2231 = vadd.f32 0.0, %v2230
  %2232 = vdwg.mxu0
  %v2233 = vadd.f32 %v1831, %v2194
  %v2234 = vadd.f32 %v1832, %v2196
  %v2235 = vadd.f32 %v1833, %v2199
  %v2236 = vadd.f32 %v1834, %v2201
  %v2237 = vadd.f32 %v1835, %v2204
  %v2238 = vadd.f32 %v1836, %v2206
  %v2239 = vadd.f32 %v1837, %v2209
  %v2240 = vadd.f32 %v1838, %v2211
  %v2241 = vadd.f32 %v1839, %v2214
  %v2242 = vadd.f32 %v1840, %v2216
  %v2243 = vadd.f32 %v1841, %v2219
  %v2244 = vadd.f32 %v1842, %v2221
  %v2245 = vadd.f32 %v1843, %v2224
  %v2246 = vadd.f32 %v1844, %v2226
  %v2247 = vadd.f32 %v1845, %v2229
  %v2248 = vadd.f32 %v1846, %v2231
  %v2249 = vld [vmem:[%s1668] sm:$0xe]
  %v2250 = vld [vmem:[%s1668 + $0x8] sm:$0xe]
  %v2251 = vld [vmem:[%s1668 + $0x10] sm:$0xe]
  %v2252 = vld [vmem:[%s1668 + $0x18] sm:$0xe]
  %v2253 = vld [vmem:[%s1668 + $0x20] sm:$0xe]
  %v2254 = vld [vmem:[%s1668 + $0x28] sm:$0xe]
  %v2255 = vld [vmem:[%s1668 + $0x30] sm:$0xe]
  %v2256 = vld [vmem:[%s1668 + $0x38] sm:$0xe]
  %v2257 = vld [vmem:[%s1668 + $0x50] sm:$0xe]
  %v2258 = vld [vmem:[%s1668 + $0x58] sm:$0xe]
  %v2259 = vld [vmem:[%s1668 + $0x60] sm:$0xe]
  %v2260 = vld [vmem:[%s1668 + $0x68] sm:$0xe]
  %v2261 = vld [vmem:[%s1668 + $0x70] sm:$0xe]
  %v2262 = vld [vmem:[%s1668 + $0x78] sm:$0xe]
  %v2263 = vld [vmem:[%s1668 + $0x80] sm:$0xe]
  %v2264 = vld [vmem:[%s1668 + $0x88] sm:$0xe]
  %v2297 = vrot.slane %v2249, 5
  %v2298 = vrot.slane %v2297, 4
  %v2299 = vrot.slane %v1848, 5
  %v2300 = vsel %vm618, %v2298, %v2299
  %v2301 = vrot.slane %v2250, 5
  %v2302 = vrot.slane %v2301, 4
  %v2303 = vrot.slane %v1850, 5
  %v2304 = vsel %vm618, %v2302, %v2303
  %v2305 = vrot.slane %v2251, 5
  %v2306 = vrot.slane %v2305, 4
  %v2307 = vrot.slane %v1852, 5
  %v2308 = vsel %vm618, %v2306, %v2307
  %v2309 = vrot.slane %v2252, 5
  %v2310 = vrot.slane %v2309, 4
  %v2311 = vrot.slane %v1854, 5
  %v2312 = vsel %vm618, %v2310, %v2311
  %v2313 = vrot.slane %v2253, 5
  %v2314 = vrot.slane %v2313, 4
  %v2315 = vrot.slane %v1856, 5
  %v2316 = vsel %vm618, %v2314, %v2315
  %v2317 = vrot.slane %v2254, 5
  %v2318 = vrot.slane %v2317, 4
  %v2319 = vrot.slane %v1858, 5
  %v2320 = vsel %vm618, %v2318, %v2319
  %v2321 = vrot.slane %v2255, 5
  %v2322 = vrot.slane %v2321, 4
  %v2323 = vrot.slane %v1860, 5
  %v2324 = vsel %vm618, %v2322, %v2323
  %v2325 = vrot.slane %v2256, 5
  %v2326 = vrot.slane %v2325, 4
  %v2327 = vrot.slane %v1862, 5
  %v2328 = vsel %vm618, %v2326, %v2327
  %v2329 = vrot.slane %v2257, 5
  %v2330 = vrot.slane %v2329, 4
  %v2331 = vrot.slane %v1864, 5
  %v2332 = vsel %vm618, %v2330, %v2331
  %v2333 = vrot.slane %v2258, 5
  %v2334 = vrot.slane %v2333, 4
  %v2335 = vrot.slane %v1866, 5
  %v2336 = vsel %vm618, %v2334, %v2335
  %v2337 = vrot.slane %v2259, 5
  %v2338 = vrot.slane %v2337, 4
  %v2339 = vrot.slane %v1868, 5
  %v2340 = vsel %vm618, %v2338, %v2339
  %v2341 = vrot.slane %v2260, 5
  %v2342 = vrot.slane %v2341, 4
  %v2343 = vrot.slane %v1870, 5
  %v2344 = vsel %vm618, %v2342, %v2343
  %v2345 = vrot.slane %v2261, 5
  %v2346 = vrot.slane %v2345, 4
  %v2347 = vrot.slane %v1872, 5
  %v2348 = vsel %vm618, %v2346, %v2347
  %v2349 = vrot.slane %v2262, 5
  %v2350 = vrot.slane %v2349, 4
  %v2351 = vrot.slane %v1874, 5
  %v2352 = vsel %vm618, %v2350, %v2351
  %v2353 = vrot.slane %v2263, 5
  %v2354 = vrot.slane %v2353, 4
  %v2355 = vrot.slane %v1876, 5
  %v2356 = vsel %vm618, %v2354, %v2355
  %v2357 = vrot.slane %v2264, 5
  %v2358 = vrot.slane %v2357, 4
  %v2359 = vrot.slane %v1878, 5
  %v2360 = vsel %vm618, %v2358, %v2359
  %s2361 = scalar_lea.vmem %s1, 256
  %v2362 = vld [vmem:[%s2361] sm:$0xf]
  %v2363 = vld [vmem:[%s2361 + $0x4] sm:$0xf]
  %v2364 = vld [vmem:[%s2361 + $0x8] sm:$0xf]
  %v2365 = vld [vmem:[%s2361 + $0xc] sm:$0xf]
  %v2366 = vld [vmem:[%s2361 + $0x10] sm:$0xf]
  %v2367 = vld [vmem:[%s2361 + $0x14] sm:$0xf]
  %v2368 = vld [vmem:[%s2361 + $0x18] sm:$0xf]
  %v2369 = vld [vmem:[%s2361 + $0x1c] sm:$0xf]
  %v2370 = vunpack.c.l.b16 %v2300
  %v2371 = vunpack.c.l.b16 %v2304
  %v2372 = vunpack.c.l.b16 %v2308
  %v2373 = vunpack.c.l.b16 %v2312
  %v2374 = vunpack.c.l.b16 %v2316
  %v2375 = vunpack.c.l.b16 %v2320
  %v2376 = vunpack.c.l.b16 %v2324
  %v2377 = vunpack.c.l.b16 %v2328
  %v2378 = vunpack.c.l.b16 %v2332
  %v2379 = vunpack.c.l.b16 %v2336
  %v2380 = vunpack.c.l.b16 %v2340
  %v2381 = vunpack.c.l.b16 %v2344
  %v2382 = vunpack.c.l.b16 %v2348
  %v2383 = vunpack.c.l.b16 %v2352
  %v2384 = vunpack.c.l.b16 %v2356
  %v2385 = vunpack.c.l.b16 %v2360
  %v2386 = vpack.c.b16 %v2371, %v2370
  %v2387 = vpack.c.b16 %v2373, %v2372
  %v2388 = vpack.c.b16 %v2375, %v2374
  %v2389 = vpack.c.b16 %v2377, %v2376
  %v2390 = vpack.c.b16 %v2379, %v2378
  %v2391 = vpack.c.b16 %v2381, %v2380
  %v2392 = vpack.c.b16 %v2383, %v2382
  %v2393 = vpack.c.b16 %v2385, %v2384
  %v2402 = vunpack.c.l.b16 %v2362
  %v2403 = vunpack.c.l.b16 %v2363
  %v2404 = vunpack.c.l.b16 %v2364
  %v2405 = vunpack.c.l.b16 %v2365
  %v2406 = vunpack.c.l.b16 %v2366
  %v2407 = vunpack.c.l.b16 %v2367
  %v2408 = vunpack.c.l.b16 %v2368
  %v2409 = vunpack.c.l.b16 %v2369
  %v2410 = vpack.c.b16 %v2403, %v2402
  %v2411 = vpack.c.b16 %v2405, %v2404
  %v2412 = vpack.c.b16 %v2407, %v2406
  %v2413 = vpack.c.b16 %v2409, %v2408
  %v2419 = vsel %vm357, %v2386, 0
  %v2422 = vsel %vm357, %v2387, 0
  %v2425 = vsel %vm357, %v2388, 0
  %v2428 = vsel %vm357, %v2389, 0
  %v2431 = vsel %vm357, %v2390, 0
  %v2434 = vsel %vm357, %v2391, 0
  %v2437 = vsel %vm357, %v2392, 0
  %v2440 = vsel %vm357, %v2393, 0
  %2442 = vmatpush.bf16.msra.mxu0 0
  %2443 = vmatpush.bf16.msra.mxu0 0
  %2444 = vmatpush.bf16.msra.mxu0 0
  %2445 = vmatpush.bf16.msra.mxu0 0
  %2446 = vmatpush.bf16.msra.mxu0 %v2413
  %2447 = vmatpush.bf16.msra.mxu0 %v2412
  %2448 = vmatpush.bf16.msra.mxu0 %v2411
  %2449 = vmatpush.bf16.msra.mxu0 %v2410
  %2450 = vmatmul.bf16.gmra.mxu0 %v2419
  %v2451 = vpop.f32.mrf.mxu0
  %v2452 = vadd.f32 0.0, %v2451
  %v2453 = vpop.f32.mrf.mxu0
  %v2454 = vadd.f32 0.0, %v2453
  %2455 = vmatmul.bf16.gmra.mxu0 %v2422
  %v2456 = vpop.f32.mrf.mxu0
  %v2457 = vadd.f32 0.0, %v2456
  %v2458 = vpop.f32.mrf.mxu0
  %v2459 = vadd.f32 0.0, %v2458
  %2460 = vmatmul.bf16.gmra.mxu0 %v2425
  %v2461 = vpop.f32.mrf.mxu0
  %v2462 = vadd.f32 0.0, %v2461
  %v2463 = vpop.f32.mrf.mxu0
  %v2464 = vadd.f32 0.0, %v2463
  %2465 = vmatmul.bf16.gmra.mxu0 %v2428
  %v2466 = vpop.f32.mrf.mxu0
  %v2467 = vadd.f32 0.0, %v2466
  %v2468 = vpop.f32.mrf.mxu0
  %v2469 = vadd.f32 0.0, %v2468
  %2470 = vmatmul.bf16.gmra.mxu0 %v2431
  %v2471 = vpop.f32.mrf.mxu0
  %v2472 = vadd.f32 0.0, %v2471
  %v2473 = vpop.f32.mrf.mxu0
  %v2474 = vadd.f32 0.0, %v2473
  %2475 = vmatmul.bf16.gmra.mxu0 %v2434
  %v2476 = vpop.f32.mrf.mxu0
  %v2477 = vadd.f32 0.0, %v2476
  %v2478 = vpop.f32.mrf.mxu0
  %v2479 = vadd.f32 0.0, %v2478
  %2480 = vmatmul.bf16.gmra.mxu0 %v2437
  %v2481 = vpop.f32.mrf.mxu0
  %v2482 = vadd.f32 0.0, %v2481
  %v2483 = vpop.f32.mrf.mxu0
  %v2484 = vadd.f32 0.0, %v2483
  %2485 = vmatmul.bf16.gmra.mxu0 %v2440
  %v2486 = vpop.f32.mrf.mxu0
  %v2487 = vadd.f32 0.0, %v2486
  %v2488 = vpop.f32.mrf.mxu0
  %v2489 = vadd.f32 0.0, %v2488
  %2490 = vdwg.mxu0
  %v2491 = vadd.f32 %v2233, %v2452
  %v2492 = vadd.f32 %v2234, %v2454
  %v2493 = vadd.f32 %v2235, %v2457
  %v2494 = vadd.f32 %v2236, %v2459
  %v2495 = vadd.f32 %v2237, %v2462
  %v2496 = vadd.f32 %v2238, %v2464
  %v2497 = vadd.f32 %v2239, %v2467
  %v2498 = vadd.f32 %v2240, %v2469
  %v2499 = vadd.f32 %v2241, %v2472
  %v2500 = vadd.f32 %v2242, %v2474
  %v2501 = vadd.f32 %v2243, %v2477
  %v2502 = vadd.f32 %v2244, %v2479
  %v2503 = vadd.f32 %v2245, %v2482
  %v2504 = vadd.f32 %v2246, %v2484
  %v2505 = vadd.f32 %v2247, %v2487
  %v2506 = vadd.f32 %v2248, %v2489
  %v2507 = vld [vmem:[%s2] sm:$0x1]
  %v2509 = vperm.slane %v2507, 0
  %v2511 = vmul.f32 %v2491, %v2509
  %v2512 = vmul.f32 %v2492, %v2509
  %v2513 = vmul.f32 %v2493, %v2509
  %v2514 = vmul.f32 %v2494, %v2509
  %v2515 = vmul.f32 %v2495, %v2509
  %v2516 = vmul.f32 %v2496, %v2509
  %v2517 = vmul.f32 %v2497, %v2509
  %v2518 = vmul.f32 %v2498, %v2509
  %v2519 = vmul.f32 %v2499, %v2509
  %v2520 = vmul.f32 %v2500, %v2509
  %v2521 = vmul.f32 %v2501, %v2509
  %v2522 = vmul.f32 %v2502, %v2509
  %v2523 = vmul.f32 %v2503, %v2509
  %v2524 = vmul.f32 %v2504, %v2509
  %v2525 = vmul.f32 %v2505, %v2509
  %v2526 = vmul.f32 %v2506, %v2509
  %v2527 = vld [vmem:[%s3] sm:$0x1]
  %v2529 = vperm.slane %v2527, 0
  %v2531 = vadd.f32 %v2511, %v2529
  %v2532 = vadd.f32 %v2512, %v2529
  %v2533 = vadd.f32 %v2513, %v2529
  %v2534 = vadd.f32 %v2514, %v2529
  %v2535 = vadd.f32 %v2515, %v2529
  %v2536 = vadd.f32 %v2516, %v2529
  %v2537 = vadd.f32 %v2517, %v2529
  %v2538 = vadd.f32 %v2518, %v2529
  %v2539 = vadd.f32 %v2519, %v2529
  %v2540 = vadd.f32 %v2520, %v2529
  %v2541 = vadd.f32 %v2521, %v2529
  %v2542 = vadd.f32 %v2522, %v2529
  %v2543 = vadd.f32 %v2523, %v2529
  %v2544 = vadd.f32 %v2524, %v2529
  %v2545 = vadd.f32 %v2525, %v2529
  %v2546 = vadd.f32 %v2526, %v2529
  %v2547 = vmax.f32 %v2531, 0.0
  %v2548 = vmax.f32 %v2532, 0.0
  %v2549 = vmax.f32 %v2533, 0.0
  %v2550 = vmax.f32 %v2534, 0.0
  %v2551 = vmax.f32 %v2535, 0.0
  %v2552 = vmax.f32 %v2536, 0.0
  %v2553 = vmax.f32 %v2537, 0.0
  %v2554 = vmax.f32 %v2538, 0.0
  %v2555 = vmax.f32 %v2539, 0.0
  %v2556 = vmax.f32 %v2540, 0.0
  %v2557 = vmax.f32 %v2541, 0.0
  %v2558 = vmax.f32 %v2542, 0.0
  %v2559 = vmax.f32 %v2543, 0.0
  %v2560 = vmax.f32 %v2544, 0.0
  %v2561 = vmax.f32 %v2545, 0.0
  %v2562 = vmax.f32 %v2546, 0.0
  %vm2563 = vcmask 519168
  %2564 = vst.msk [vmem:[#allocation2] sm:$0xf] %vm2563, 0
  %2565 = vst.msk [vmem:[#allocation2 + $0x4] sm:$0xf] %vm2563, 0
  %2566 = vst.msk [vmem:[#allocation2 + $0x8] sm:$0xf] %vm2563, 0
  %2567 = vst.msk [vmem:[#allocation2 + $0xc] sm:$0xf] %vm2563, 0
  %2568 = vst.msk [vmem:[#allocation2 + $0x10] sm:$0xf] %vm2563, 0
  %2569 = vst.msk [vmem:[#allocation2 + $0x14] sm:$0xf] %vm2563, 0
  %2570 = vst.msk [vmem:[#allocation2 + $0x18] sm:$0xf] %vm2563, 0
  %2571 = vst.msk [vmem:[#allocation2 + $0x1c] sm:$0xf] %vm2563, 0
  %2572 = vst.msk [vmem:[#allocation2 + $0x20] sm:$0xf] %vm2563, 0
  %2573 = vst.msk [vmem:[#allocation2 + $0x24] sm:$0xf] %vm2563, 0
  %2574 = vst.msk [vmem:[#allocation2 + $0x28] sm:$0xf] %vm2563, 0
  %2575 = vst.msk [vmem:[#allocation2 + $0x2c] sm:$0xf] %vm2563, 0
  %2576 = vst.msk [vmem:[#allocation2 + $0x30] sm:$0xf] %vm2563, 0
  %2577 = vst.msk [vmem:[#allocation2 + $0x34] sm:$0xf] %vm2563, 0
  %2578 = vst.msk [vmem:[#allocation2 + $0x38] sm:$0xf] %vm2563, 0
  %2579 = vst.msk [vmem:[#allocation2 + $0x3c] sm:$0xf] %vm2563, 0
  %2580 = vst.msk [vmem:[#allocation2 + $0x40] sm:$0xf] %vm2563, 0
  %2581 = vst.msk [vmem:[#allocation2 + $0x44] sm:$0xf] %vm2563, 0
  %2582 = vst.msk [vmem:[#allocation2 + $0x48] sm:$0xf] %vm2563, 0
  %2583 = vst.msk [vmem:[#allocation2 + $0x4c] sm:$0xf] %vm2563, 0
  %2584 = vst.msk [vmem:[#allocation2 + $0x50] sm:$0xf] %vm2563, 0
  %2585 = vst.msk [vmem:[#allocation2 + $0x54] sm:$0xf] %vm2563, 0
  %2586 = vst.msk [vmem:[#allocation2 + $0x58] sm:$0xf] %vm2563, 0
  %2587 = vst.msk [vmem:[#allocation2 + $0x5c] sm:$0xf] %vm2563, 0
  %2588 = vst.msk [vmem:[#allocation2 + $0x60] sm:$0xf] %vm2563, 0
  %2589 = vst.msk [vmem:[#allocation2 + $0x64] sm:$0xf] %vm2563, 0
  %2590 = vst.msk [vmem:[#allocation2 + $0x68] sm:$0xf] %vm2563, 0
  %2591 = vst.msk [vmem:[#allocation2 + $0x6c] sm:$0xf] %vm2563, 0
  %2592 = vst.msk [vmem:[#allocation2 + $0x70] sm:$0xf] %vm2563, 0
  %2593 = vst.msk [vmem:[#allocation2 + $0x74] sm:$0xf] %vm2563, 0
  %2594 = vst.msk [vmem:[#allocation2 + $0x78] sm:$0xf] %vm2563, 0
  %2595 = vst.msk [vmem:[#allocation2 + $0x7c] sm:$0xf] %vm2563, 0
  %2596 = vst.msk [vmem:[#allocation2 + $0x80] sm:$0xf] %vm2563, 0
  %2597 = vst.msk [vmem:[#allocation2 + $0x84] sm:$0xf] %vm2563, 0
  %2598 = vst.msk [vmem:[#allocation2 + $0x88] sm:$0xf] %vm2563, 0
  %2599 = vst.msk [vmem:[#allocation2 + $0x8c] sm:$0xf] %vm2563, 0
  %2600 = vst.msk [vmem:[#allocation2 + $0x90] sm:$0xf] %vm2563, 0
  %2601 = vst.msk [vmem:[#allocation2 + $0x94] sm:$0xf] %vm2563, 0
  %2602 = vst.msk [vmem:[#allocation2 + $0x98] sm:$0xf] %vm2563, 0
  %2603 = vst.msk [vmem:[#allocation2 + $0x9c] sm:$0xf] %vm2563, 0
  %2604 = vst.msk [vmem:[#allocation2 + $0xa0] sm:$0xf] %vm2563, 0
  %2605 = vst.msk [vmem:[#allocation2 + $0xa4] sm:$0xf] %vm2563, 0
  %2606 = vst.msk [vmem:[#allocation2 + $0xa8] sm:$0xf] %vm2563, 0
  %2607 = vst.msk [vmem:[#allocation2 + $0xac] sm:$0xf] %vm2563, 0
  %2608 = vst.msk [vmem:[#allocation2 + $0xb0] sm:$0xf] %vm2563, 0
  %2609 = vst.msk [vmem:[#allocation2 + $0xb4] sm:$0xf] %vm2563, 0
  %2610 = vst.msk [vmem:[#allocation2 + $0xb8] sm:$0xf] %vm2563, 0
  %2611 = vst.msk [vmem:[#allocation2 + $0xbc] sm:$0xf] %vm2563, 0
  %2612 = vst.msk [vmem:[#allocation2 + $0xc0] sm:$0xf] %vm2563, 0
  %2613 = vst.msk [vmem:[#allocation2 + $0xc4] sm:$0xf] %vm2563, 0
  %2614 = vst.msk [vmem:[#allocation2 + $0xc8] sm:$0xf] %vm2563, 0
  %2615 = vst.msk [vmem:[#allocation2 + $0xcc] sm:$0xf] %vm2563, 0
  %2616 = vst.msk [vmem:[#allocation2 + $0xd0] sm:$0xf] %vm2563, 0
  %2617 = vst.msk [vmem:[#allocation2 + $0xd4] sm:$0xf] %vm2563, 0
  %2618 = vst.msk [vmem:[#allocation2 + $0xd8] sm:$0xf] %vm2563, 0
  %2619 = vst.msk [vmem:[#allocation2 + $0xdc] sm:$0xf] %vm2563, 0
  %2620 = vst.msk [vmem:[#allocation2 + $0xe0] sm:$0xf] %vm2563, 0
  %2621 = vst.msk [vmem:[#allocation2 + $0xe4] sm:$0xf] %vm2563, 0
  %2622 = vst.msk [vmem:[#allocation2 + $0xe8] sm:$0xf] %vm2563, 0
  %2623 = vst.msk [vmem:[#allocation2 + $0xec] sm:$0xf] %vm2563, 0
  %v2624 = vpack.c.bf16 %v2547, %v2547
  %v2625 = vpack.c.bf16 %v2548, %v2548
  %v2626 = vpack.c.bf16 %v2549, %v2549
  %v2627 = vpack.c.bf16 %v2550, %v2550
  %v2628 = vpack.c.bf16 %v2551, %v2551
  %v2629 = vpack.c.bf16 %v2552, %v2552
  %v2630 = vpack.c.bf16 %v2553, %v2553
  %v2631 = vpack.c.bf16 %v2554, %v2554
  %v2632 = vpack.c.bf16 %v2555, %v2555
  %v2633 = vpack.c.bf16 %v2556, %v2556
  %v2634 = vpack.c.bf16 %v2557, %v2557
  %v2635 = vpack.c.bf16 %v2558, %v2558
  %v2636 = vpack.c.bf16 %v2559, %v2559
  %v2637 = vpack.c.bf16 %v2560, %v2560
  %v2638 = vpack.c.bf16 %v2561, %v2561
  %v2639 = vpack.c.bf16 %v2562, %v2562
  %s2640 = scalar_lea.vmem [#allocation2], 12
  %2641 = vst.msk [vmem:[%s2640 + $0x4] sm:$0xf] %vm2563, %v2624
  %2642 = vst.msk [vmem:[%s2640 + $0x10] sm:$0xf] %vm2563, %v2625
  %2643 = vst.msk [vmem:[%s2640 + $0x1c] sm:$0xf] %vm2563, %v2626
  %2644 = vst.msk [vmem:[%s2640 + $0x28] sm:$0xf] %vm2563, %v2627
  %2645 = vst.msk [vmem:[%s2640 + $0x34] sm:$0xf] %vm2563, %v2628
  %2646 = vst.msk [vmem:[%s2640 + $0x40] sm:$0xf] %vm2563, %v2629
  %2647 = vst.msk [vmem:[%s2640 + $0x4c] sm:$0xf] %vm2563, %v2630
  %2648 = vst.msk [vmem:[%s2640 + $0x58] sm:$0xf] %vm2563, %v2631
  %2649 = vst.msk [vmem:[%s2640 + $0x7c] sm:$0xf] %vm2563, %v2632
  %2650 = vst.msk [vmem:[%s2640 + $0x88] sm:$0xf] %vm2563, %v2633
  %2651 = vst.msk [vmem:[%s2640 + $0x94] sm:$0xf] %vm2563, %v2634
  %2652 = vst.msk [vmem:[%s2640 + $0xa0] sm:$0xf] %vm2563, %v2635
  %2653 = vst.msk [vmem:[%s2640 + $0xac] sm:$0xf] %vm2563, %v2636
  %2654 = vst.msk [vmem:[%s2640 + $0xb8] sm:$0xf] %vm2563, %v2637
  %2655 = vst.msk [vmem:[%s2640 + $0xc4] sm:$0xf] %vm2563, %v2638
  %2656 = vst.msk [vmem:[%s2640 + $0xd0] sm:$0xf] %vm2563, %v2639
  %v2657 = vld [vmem:[#allocation2] sm:$0x8]
  %v2658 = vld [vmem:[#allocation2 + $0x4] sm:$0xf]
  %v2659 = vld [vmem:[#allocation2 + $0xc] sm:$0x8]
  %v2660 = vld [vmem:[#allocation2 + $0x10] sm:$0xf]
  %v2661 = vld [vmem:[#allocation2 + $0x18] sm:$0x8]
  %v2662 = vld [vmem:[#allocation2 + $0x1c] sm:$0xf]
  %v2663 = vld [vmem:[#allocation2 + $0x24] sm:$0x8]
  %v2664 = vld [vmem:[#allocation2 + $0x28] sm:$0xf]
  %v2665 = vld [vmem:[#allocation2 + $0x30] sm:$0x8]
  %v2666 = vld [vmem:[#allocation2 + $0x34] sm:$0xf]
  %v2667 = vld [vmem:[#allocation2 + $0x3c] sm:$0x8]
  %v2668 = vld [vmem:[#allocation2 + $0x40] sm:$0xf]
  %v2669 = vld [vmem:[#allocation2 + $0x48] sm:$0x8]
  %v2670 = vld [vmem:[#allocation2 + $0x4c] sm:$0xf]
  %v2671 = vld [vmem:[#allocation2 + $0x54] sm:$0x8]
  %v2672 = vld [vmem:[#allocation2 + $0x58] sm:$0xf]
  %v2673 = vld [vmem:[#allocation2 + $0x78] sm:$0x8]
  %v2674 = vld [vmem:[#allocation2 + $0x7c] sm:$0xf]
  %v2675 = vld [vmem:[#allocation2 + $0x84] sm:$0x8]
  %v2676 = vld [vmem:[#allocation2 + $0x88] sm:$0xf]
  %v2677 = vld [vmem:[#allocation2 + $0x90] sm:$0x8]
  %v2678 = vld [vmem:[#allocation2 + $0x94] sm:$0xf]
  %v2679 = vld [vmem:[#allocation2 + $0x9c] sm:$0x8]
  %v2680 = vld [vmem:[#allocation2 + $0xa0] sm:$0xf]
  %v2681 = vld [vmem:[#allocation2 + $0xa8] sm:$0x8]
  %v2682 = vld [vmem:[#allocation2 + $0xac] sm:$0xf]
  %v2683 = vld [vmem:[#allocation2 + $0xb4] sm:$0x8]
  %v2684 = vld [vmem:[#allocation2 + $0xb8] sm:$0xf]
  %v2685 = vld [vmem:[#allocation2 + $0xc0] sm:$0x8]
  %v2686 = vld [vmem:[#allocation2 + $0xc4] sm:$0xf]
  %v2687 = vld [vmem:[#allocation2 + $0xcc] sm:$0x8]
  %v2688 = vld [vmem:[#allocation2 + $0xd0] sm:$0xf]
  %vm2689 = vsmask.f32 256
  %vm2690 = vsmask.f32 4368
  %vm2691 = vmor %vm2689, %vm2690
  %v2693 = vshrl.u32 %v2657, 16
  %v2695 = vrot.slane %v2693, 7
  %v2696 = vrot.slane %v2695, 4
  %v2698 = vshrl.u32 %v2658, 16
  %v2700 = vrot.slane %v2698, 7
  %v2701 = vshll.u32 %v2658, 16
  %v2703 = vor.u32 %v2700, %v2701
  %v2704 = vsel %vm2691, %v2696, %v2703
  %v2706 = vshrl.u32 %v2659, 16
  %v2708 = vrot.slane %v2706, 7
  %v2709 = vrot.slane %v2708, 4
  %v2711 = vshrl.u32 %v2660, 16
  %v2713 = vrot.slane %v2711, 7
  %v2714 = vshll.u32 %v2660, 16
  %v2716 = vor.u32 %v2713, %v2714
  %v2717 = vsel %vm2691, %v2709, %v2716
  %v2719 = vshrl.u32 %v2661, 16
  %v2721 = vrot.slane %v2719, 7
  %v2722 = vrot.slane %v2721, 4
  %v2724 = vshrl.u32 %v2662, 16
  %v2726 = vrot.slane %v2724, 7
  %v2727 = vshll.u32 %v2662, 16
  %v2729 = vor.u32 %v2726, %v2727
  %v2730 = vsel %vm2691, %v2722, %v2729
  %v2732 = vshrl.u32 %v2663, 16
  %v2734 = vrot.slane %v2732, 7
  %v2735 = vrot.slane %v2734, 4
  %v2737 = vshrl.u32 %v2664, 16
  %v2739 = vrot.slane %v2737, 7
  %v2740 = vshll.u32 %v2664, 16
  %v2742 = vor.u32 %v2739, %v2740
  %v2743 = vsel %vm2691, %v2735, %v2742
  %v2745 = vshrl.u32 %v2665, 16
  %v2747 = vrot.slane %v2745, 7
  %v2748 = vrot.slane %v2747, 4
  %v2750 = vshrl.u32 %v2666, 16
  %v2752 = vrot.slane %v2750, 7
  %v2753 = vshll.u32 %v2666, 16
  %v2755 = vor.u32 %v2752, %v2753
  %v2756 = vsel %vm2691, %v2748, %v2755
  %v2758 = vshrl.u32 %v2667, 16
  %v2760 = vrot.slane %v2758, 7
  %v2761 = vrot.slane %v2760, 4
  %v2763 = vshrl.u32 %v2668, 16
  %v2765 = vrot.slane %v2763, 7
  %v2766 = vshll.u32 %v2668, 16
  %v2768 = vor.u32 %v2765, %v2766
  %v2769 = vsel %vm2691, %v2761, %v2768
  %v2771 = vshrl.u32 %v2669, 16
  %v2773 = vrot.slane %v2771, 7
  %v2774 = vrot.slane %v2773, 4
  %v2776 = vshrl.u32 %v2670, 16
  %v2778 = vrot.slane %v2776, 7
  %v2779 = vshll.u32 %v2670, 16
  %v2781 = vor.u32 %v2778, %v2779
  %v2782 = vsel %vm2691, %v2774, %v2781
  %v2784 = vshrl.u32 %v2671, 16
  %v2786 = vrot.slane %v2784, 7
  %v2787 = vrot.slane %v2786, 4
  %v2789 = vshrl.u32 %v2672, 16
  %v2791 = vrot.slane %v2789, 7
  %v2792 = vshll.u32 %v2672, 16
  %v2794 = vor.u32 %v2791, %v2792
  %v2795 = vsel %vm2691, %v2787, %v2794
  %v2797 = vshrl.u32 %v2673, 16
  %v2799 = vrot.slane %v2797, 7
  %v2800 = vrot.slane %v2799, 4
  %v2802 = vshrl.u32 %v2674, 16
  %v2804 = vrot.slane %v2802, 7
  %v2805 = vshll.u32 %v2674, 16
  %v2807 = vor.u32 %v2804, %v2805
  %v2808 = vsel %vm2691, %v2800, %v2807
  %v2810 = vshrl.u32 %v2675, 16
  %v2812 = vrot.slane %v2810, 7
  %v2813 = vrot.slane %v2812, 4
  %v2815 = vshrl.u32 %v2676, 16
  %v2817 = vrot.slane %v2815, 7
  %v2818 = vshll.u32 %v2676, 16
  %v2820 = vor.u32 %v2817, %v2818
  %v2821 = vsel %vm2691, %v2813, %v2820
  %v2823 = vshrl.u32 %v2677, 16
  %v2825 = vrot.slane %v2823, 7
  %v2826 = vrot.slane %v2825, 4
  %v2828 = vshrl.u32 %v2678, 16
  %v2830 = vrot.slane %v2828, 7
  %v2831 = vshll.u32 %v2678, 16
  %v2833 = vor.u32 %v2830, %v2831
  %v2834 = vsel %vm2691, %v2826, %v2833
  %v2836 = vshrl.u32 %v2679, 16
  %v2838 = vrot.slane %v2836, 7
  %v2839 = vrot.slane %v2838, 4
  %v2841 = vshrl.u32 %v2680, 16
  %v2843 = vrot.slane %v2841, 7
  %v2844 = vshll.u32 %v2680, 16
  %v2846 = vor.u32 %v2843, %v2844
  %v2847 = vsel %vm2691, %v2839, %v2846
  %v2849 = vshrl.u32 %v2681, 16
  %v2851 = vrot.slane %v2849, 7
  %v2852 = vrot.slane %v2851, 4
  %v2854 = vshrl.u32 %v2682, 16
  %v2856 = vrot.slane %v2854, 7
  %v2857 = vshll.u32 %v2682, 16
  %v2859 = vor.u32 %v2856, %v2857
  %v2860 = vsel %vm2691, %v2852, %v2859
  %v2862 = vshrl.u32 %v2683, 16
  %v2864 = vrot.slane %v2862, 7
  %v2865 = vrot.slane %v2864, 4
  %v2867 = vshrl.u32 %v2684, 16
  %v2869 = vrot.slane %v2867, 7
  %v2870 = vshll.u32 %v2684, 16
  %v2872 = vor.u32 %v2869, %v2870
  %v2873 = vsel %vm2691, %v2865, %v2872
  %v2875 = vshrl.u32 %v2685, 16
  %v2877 = vrot.slane %v2875, 7
  %v2878 = vrot.slane %v2877, 4
  %v2880 = vshrl.u32 %v2686, 16
  %v2882 = vrot.slane %v2880, 7
  %v2883 = vshll.u32 %v2686, 16
  %v2885 = vor.u32 %v2882, %v2883
  %v2886 = vsel %vm2691, %v2878, %v2885
  %v2888 = vshrl.u32 %v2687, 16
  %v2890 = vrot.slane %v2888, 7
  %v2891 = vrot.slane %v2890, 4
  %v2893 = vshrl.u32 %v2688, 16
  %v2895 = vrot.slane %v2893, 7
  %v2896 = vshll.u32 %v2688, 16
  %v2898 = vor.u32 %v2895, %v2896
  %v2899 = vsel %vm2691, %v2891, %v2898
  %v2900 = vld [vmem:[%s4] sm:$0xf]
  %v2901 = vld [vmem:[%s4 + $0x4] sm:$0xf]
  %v2902 = vld [vmem:[%s4 + $0x8] sm:$0xf]
  %v2903 = vld [vmem:[%s4 + $0xc] sm:$0xf]
  %v2904 = vld [vmem:[%s4 + $0x10] sm:$0xf]
  %v2905 = vld [vmem:[%s4 + $0x14] sm:$0xf]
  %v2906 = vld [vmem:[%s4 + $0x18] sm:$0xf]
  %v2907 = vld [vmem:[%s4 + $0x1c] sm:$0xf]
  %s2908 = scalar_lea.vmem %s4, 32
  %v2909 = vld [vmem:[%s2908] sm:$0xf]
  %v2910 = vld [vmem:[%s2908 + $0x4] sm:$0xf]
  %v2911 = vld [vmem:[%s2908 + $0x8] sm:$0xf]
  %v2912 = vld [vmem:[%s2908 + $0xc] sm:$0xf]
  %v2913 = vld [vmem:[%s2908 + $0x10] sm:$0xf]
  %v2914 = vld [vmem:[%s2908 + $0x14] sm:$0xf]
  %v2915 = vld [vmem:[%s2908 + $0x18] sm:$0xf]
  %v2916 = vld [vmem:[%s2908 + $0x1c] sm:$0xf]
  %v2933 = vunpack.c.l.b16 %v2658
  %v2934 = vunpack.c.l.b16 %v2660
  %v2935 = vunpack.c.l.b16 %v2662
  %v2936 = vunpack.c.l.b16 %v2664
  %v2937 = vunpack.c.l.b16 %v2666
  %v2938 = vunpack.c.l.b16 %v2668
  %v2939 = vunpack.c.l.b16 %v2670
  %v2940 = vunpack.c.l.b16 %v2672
  %v2941 = vunpack.c.l.b16 %v2674
  %v2942 = vunpack.c.l.b16 %v2676
  %v2943 = vunpack.c.l.b16 %v2678
  %v2944 = vunpack.c.l.b16 %v2680
  %v2945 = vunpack.c.l.b16 %v2682
  %v2946 = vunpack.c.l.b16 %v2684
  %v2947 = vunpack.c.l.b16 %v2686
  %v2948 = vunpack.c.l.b16 %v2688
  %v2949 = vpack.c.b16 %v2934, %v2933
  %v2950 = vpack.c.b16 %v2936, %v2935
  %v2951 = vpack.c.b16 %v2938, %v2937
  %v2952 = vpack.c.b16 %v2940, %v2939
  %v2953 = vpack.c.b16 %v2942, %v2941
  %v2954 = vpack.c.b16 %v2944, %v2943
  %v2955 = vpack.c.b16 %v2946, %v2945
  %v2956 = vpack.c.b16 %v2948, %v2947
  %v2965 = vunpack.c.l.b16 %v2909
  %v2966 = vunpack.c.l.b16 %v2910
  %v2967 = vunpack.c.l.b16 %v2911
  %v2968 = vunpack.c.l.b16 %v2912
  %v2969 = vunpack.c.l.b16 %v2913
  %v2970 = vunpack.c.l.b16 %v2914
  %v2971 = vunpack.c.l.b16 %v2915
  %v2972 = vunpack.c.l.b16 %v2916
  %v2973 = vpack.c.b16 %v2966, %v2965
  %v2974 = vpack.c.b16 %v2968, %v2967
  %v2975 = vpack.c.b16 %v2970, %v2969
  %v2976 = vpack.c.b16 %v2972, %v2971
  %v2982 = vsel %vm357, %v2949, 0
  %v2985 = vsel %vm357, %v2950, 0
  %v2988 = vsel %vm357, %v2951, 0
  %v2991 = vsel %vm357, %v2952, 0
  %v2994 = vsel %vm357, %v2953, 0
  %v2997 = vsel %vm357, %v2954, 0
  %v3000 = vsel %vm357, %v2955, 0
  %v3003 = vsel %vm357, %v2956, 0
  %3005 = vmatpush.bf16.msra.mxu0 0
  %3006 = vmatpush.bf16.msra.mxu0 0
  %3007 = vmatpush.bf16.msra.mxu0 0
  %3008 = vmatpush.bf16.msra.mxu0 0
  %3009 = vmatpush.bf16.msra.mxu0 %v2976
  %3010 = vmatpush.bf16.msra.mxu0 %v2975
  %3011 = vmatpush.bf16.msra.mxu0 %v2974
  %3012 = vmatpush.bf16.msra.mxu0 %v2973
  %3013 = vmatmul.bf16.gmra.mxu0 %v2982
  %v3014 = vpop.f32.mrf.mxu0
  %v3015 = vadd.f32 0.0, %v3014
  %v3016 = vpop.f32.mrf.mxu0
  %v3017 = vadd.f32 0.0, %v3016
  %3018 = vmatmul.bf16.gmra.mxu0 %v2985
  %v3019 = vpop.f32.mrf.mxu0
  %v3020 = vadd.f32 0.0, %v3019
  %v3021 = vpop.f32.mrf.mxu0
  %v3022 = vadd.f32 0.0, %v3021
  %3023 = vmatmul.bf16.gmra.mxu0 %v2988
  %v3024 = vpop.f32.mrf.mxu0
  %v3025 = vadd.f32 0.0, %v3024
  %v3026 = vpop.f32.mrf.mxu0
  %v3027 = vadd.f32 0.0, %v3026
  %3028 = vmatmul.bf16.gmra.mxu0 %v2991
  %v3029 = vpop.f32.mrf.mxu0
  %v3030 = vadd.f32 0.0, %v3029
  %v3031 = vpop.f32.mrf.mxu0
  %v3032 = vadd.f32 0.0, %v3031
  %3033 = vmatmul.bf16.gmra.mxu0 %v2994
  %v3034 = vpop.f32.mrf.mxu0
  %v3035 = vadd.f32 0.0, %v3034
  %v3036 = vpop.f32.mrf.mxu0
  %v3037 = vadd.f32 0.0, %v3036
  %3038 = vmatmul.bf16.gmra.mxu0 %v2997
  %v3039 = vpop.f32.mrf.mxu0
  %v3040 = vadd.f32 0.0, %v3039
  %v3041 = vpop.f32.mrf.mxu0
  %v3042 = vadd.f32 0.0, %v3041
  %3043 = vmatmul.bf16.gmra.mxu0 %v3000
  %v3044 = vpop.f32.mrf.mxu0
  %v3045 = vadd.f32 0.0, %v3044
  %v3046 = vpop.f32.mrf.mxu0
  %v3047 = vadd.f32 0.0, %v3046
  %3048 = vmatmul.bf16.gmra.mxu0 %v3003
  %v3049 = vpop.f32.mrf.mxu0
  %v3050 = vadd.f32 0.0, %v3049
  %v3051 = vpop.f32.mrf.mxu0
  %v3052 = vadd.f32 0.0, %v3051
  %3053 = vdwg.mxu0
  %v3054 = vunpack.c.l.b16 %v2704
  %v3055 = vunpack.c.l.b16 %v2717
  %v3056 = vunpack.c.l.b16 %v2730
  %v3057 = vunpack.c.l.b16 %v2743
  %v3058 = vunpack.c.l.b16 %v2756
  %v3059 = vunpack.c.l.b16 %v2769
  %v3060 = vunpack.c.l.b16 %v2782
  %v3061 = vunpack.c.l.b16 %v2795
  %v3062 = vunpack.c.l.b16 %v2808
  %v3063 = vunpack.c.l.b16 %v2821
  %v3064 = vunpack.c.l.b16 %v2834
  %v3065 = vunpack.c.l.b16 %v2847
  %v3066 = vunpack.c.l.b16 %v2860
  %v3067 = vunpack.c.l.b16 %v2873
  %v3068 = vunpack.c.l.b16 %v2886
  %v3069 = vunpack.c.l.b16 %v2899
  %v3070 = vpack.c.b16 %v3055, %v3054
  %v3071 = vpack.c.b16 %v3057, %v3056
  %v3072 = vpack.c.b16 %v3059, %v3058
  %v3073 = vpack.c.b16 %v3061, %v3060
  %v3074 = vpack.c.b16 %v3063, %v3062
  %v3075 = vpack.c.b16 %v3065, %v3064
  %v3076 = vpack.c.b16 %v3067, %v3066
  %v3077 = vpack.c.b16 %v3069, %v3068
  %v3086 = vunpack.c.l.b16 %v2900
  %v3087 = vunpack.c.l.b16 %v2901
  %v3088 = vunpack.c.l.b16 %v2902
  %v3089 = vunpack.c.l.b16 %v2903
  %v3090 = vunpack.c.l.b16 %v2904
  %v3091 = vunpack.c.l.b16 %v2905
  %v3092 = vunpack.c.l.b16 %v2906
  %v3093 = vunpack.c.l.b16 %v2907
  %v3094 = vpack.c.b16 %v3087, %v3086
  %v3095 = vpack.c.b16 %v3089, %v3088
  %v3096 = vpack.c.b16 %v3091, %v3090
  %v3097 = vpack.c.b16 %v3093, %v3092
  %v3103 = vsel %vm357, %v3070, 0
  %v3106 = vsel %vm357, %v3071, 0
  %v3109 = vsel %vm357, %v3072, 0
  %v3112 = vsel %vm357, %v3073, 0
  %v3115 = vsel %vm357, %v3074, 0
  %v3118 = vsel %vm357, %v3075, 0
  %v3121 = vsel %vm357, %v3076, 0
  %v3124 = vsel %vm357, %v3077, 0
  %3126 = vmatpush.bf16.msra.mxu0 0
  %3127 = vmatpush.bf16.msra.mxu0 0
  %3128 = vmatpush.bf16.msra.mxu0 0
  %3129 = vmatpush.bf16.msra.mxu0 0
  %3130 = vmatpush.bf16.msra.mxu0 %v3097
  %3131 = vmatpush.bf16.msra.mxu0 %v3096
  %3132 = vmatpush.bf16.msra.mxu0 %v3095
  %3133 = vmatpush.bf16.msra.mxu0 %v3094
  %3134 = vmatmul.bf16.gmra.mxu0 %v3103
  %v3135 = vpop.f32.mrf.mxu0
  %v3136 = vadd.f32 %v3015, %v3135
  %v3137 = vpop.f32.mrf.mxu0
  %v3138 = vadd.f32 %v3017, %v3137
  %3139 = vmatmul.bf16.gmra.mxu0 %v3106
  %v3140 = vpop.f32.mrf.mxu0
  %v3141 = vadd.f32 %v3020, %v3140
  %v3142 = vpop.f32.mrf.mxu0
  %v3143 = vadd.f32 %v3022, %v3142
  %3144 = vmatmul.bf16.gmra.mxu0 %v3109
  %v3145 = vpop.f32.mrf.mxu0
  %v3146 = vadd.f32 %v3025, %v3145
  %v3147 = vpop.f32.mrf.mxu0
  %v3148 = vadd.f32 %v3027, %v3147
  %3149 = vmatmul.bf16.gmra.mxu0 %v3112
  %v3150 = vpop.f32.mrf.mxu0
  %v3151 = vadd.f32 %v3030, %v3150
  %v3152 = vpop.f32.mrf.mxu0
  %v3153 = vadd.f32 %v3032, %v3152
  %3154 = vmatmul.bf16.gmra.mxu0 %v3115
  %v3155 = vpop.f32.mrf.mxu0
  %v3156 = vadd.f32 %v3035, %v3155
  %v3157 = vpop.f32.mrf.mxu0
  %v3158 = vadd.f32 %v3037, %v3157
  %3159 = vmatmul.bf16.gmra.mxu0 %v3118
  %v3160 = vpop.f32.mrf.mxu0
  %v3161 = vadd.f32 %v3040, %v3160
  %v3162 = vpop.f32.mrf.mxu0
  %v3163 = vadd.f32 %v3042, %v3162
  %3164 = vmatmul.bf16.gmra.mxu0 %v3121
  %v3165 = vpop.f32.mrf.mxu0
  %v3166 = vadd.f32 %v3045, %v3165
  %v3167 = vpop.f32.mrf.mxu0
  %v3168 = vadd.f32 %v3047, %v3167
  %3169 = vmatmul.bf16.gmra.mxu0 %v3124
  %v3170 = vpop.f32.mrf.mxu0
  %v3171 = vadd.f32 %v3050, %v3170
  %v3172 = vpop.f32.mrf.mxu0
  %v3173 = vadd.f32 %v3052, %v3172
  %3174 = vdwg.mxu0
  %v3175 = vld [vmem:[#allocation2 + $0x4] sm:$0xf]
  %v3176 = vld [vmem:[#allocation2 + $0x8] sm:$0x1]
  %v3177 = vld [vmem:[#allocation2 + $0x10] sm:$0xf]
  %v3178 = vld [vmem:[#allocation2 + $0x14] sm:$0x1]
  %v3179 = vld [vmem:[#allocation2 + $0x1c] sm:$0xf]
  %v3180 = vld [vmem:[#allocation2 + $0x20] sm:$0x1]
  %v3181 = vld [vmem:[#allocation2 + $0x28] sm:$0xf]
  %v3182 = vld [vmem:[#allocation2 + $0x2c] sm:$0x1]
  %v3183 = vld [vmem:[#allocation2 + $0x34] sm:$0xf]
  %v3184 = vld [vmem:[#allocation2 + $0x38] sm:$0x1]
  %v3185 = vld [vmem:[#allocation2 + $0x40] sm:$0xf]
  %v3186 = vld [vmem:[#allocation2 + $0x44] sm:$0x1]
  %v3187 = vld [vmem:[#allocation2 + $0x4c] sm:$0xf]
  %v3188 = vld [vmem:[#allocation2 + $0x50] sm:$0x1]
  %v3189 = vld [vmem:[#allocation2 + $0x58] sm:$0xf]
  %v3190 = vld [vmem:[#allocation2 + $0x5c] sm:$0x1]
  %v3191 = vld [vmem:[#allocation2 + $0x7c] sm:$0xf]
  %v3192 = vld [vmem:[#allocation2 + $0x80] sm:$0x1]
  %v3193 = vld [vmem:[#allocation2 + $0x88] sm:$0xf]
  %v3194 = vld [vmem:[#allocation2 + $0x8c] sm:$0x1]
  %v3195 = vld [vmem:[#allocation2 + $0x94] sm:$0xf]
  %v3196 = vld [vmem:[#allocation2 + $0x98] sm:$0x1]
  %v3197 = vld [vmem:[#allocation2 + $0xa0] sm:$0xf]
  %v3198 = vld [vmem:[#allocation2 + $0xa4] sm:$0x1]
  %v3199 = vld [vmem:[#allocation2 + $0xac] sm:$0xf]
  %v3200 = vld [vmem:[#allocation2 + $0xb0] sm:$0x1]
  %v3201 = vld [vmem:[#allocation2 + $0xb8] sm:$0xf]
  %v3202 = vld [vmem:[#allocation2 + $0xbc] sm:$0x1]
  %v3203 = vld [vmem:[#allocation2 + $0xc4] sm:$0xf]
  %v3204 = vld [vmem:[#allocation2 + $0xc8] sm:$0x1]
  %v3205 = vld [vmem:[#allocation2 + $0xd0] sm:$0xf]
  %v3206 = vld [vmem:[#allocation2 + $0xd4] sm:$0x1]
  %v3208 = vshrl.u32 %v3175, 16
  %v3210 = vrot.slane %v3208, 4
  %v3211 = vshll.u32 %v3175, 16
  %v3213 = vrot.slane %v3211, 5
  %v3214 = vor.u32 %v3210, %v3213
  %v3215 = vrot.slane %v3214, 4
  %v3217 = vshll.u32 %v3176, 16
  %v3219 = vrot.slane %v3217, 5
  %v3220 = vsel %vm75, %v3215, %v3219
  %v3222 = vshrl.u32 %v3177, 16
  %v3224 = vrot.slane %v3222, 4
  %v3225 = vshll.u32 %v3177, 16
  %v3227 = vrot.slane %v3225, 5
  %v3228 = vor.u32 %v3224, %v3227
  %v3229 = vrot.slane %v3228, 4
  %v3231 = vshll.u32 %v3178, 16
  %v3233 = vrot.slane %v3231, 5
  %v3234 = vsel %vm75, %v3229, %v3233
  %v3236 = vshrl.u32 %v3179, 16
  %v3238 = vrot.slane %v3236, 4
  %v3239 = vshll.u32 %v3179, 16
  %v3241 = vrot.slane %v3239, 5
  %v3242 = vor.u32 %v3238, %v3241
  %v3243 = vrot.slane %v3242, 4
  %v3245 = vshll.u32 %v3180, 16
  %v3247 = vrot.slane %v3245, 5
  %v3248 = vsel %vm75, %v3243, %v3247
  %v3250 = vshrl.u32 %v3181, 16
  %v3252 = vrot.slane %v3250, 4
  %v3253 = vshll.u32 %v3181, 16
  %v3255 = vrot.slane %v3253, 5
  %v3256 = vor.u32 %v3252, %v3255
  %v3257 = vrot.slane %v3256, 4
  %v3259 = vshll.u32 %v3182, 16
  %v3261 = vrot.slane %v3259, 5
  %v3262 = vsel %vm75, %v3257, %v3261
  %v3264 = vshrl.u32 %v3183, 16
  %v3266 = vrot.slane %v3264, 4
  %v3267 = vshll.u32 %v3183, 16
  %v3269 = vrot.slane %v3267, 5
  %v3270 = vor.u32 %v3266, %v3269
  %v3271 = vrot.slane %v3270, 4
  %v3273 = vshll.u32 %v3184, 16
  %v3275 = vrot.slane %v3273, 5
  %v3276 = vsel %vm75, %v3271, %v3275
  %v3278 = vshrl.u32 %v3185, 16
  %v3280 = vrot.slane %v3278, 4
  %v3281 = vshll.u32 %v3185, 16
  %v3283 = vrot.slane %v3281, 5
  %v3284 = vor.u32 %v3280, %v3283
  %v3285 = vrot.slane %v3284, 4
  %v3287 = vshll.u32 %v3186, 16
  %v3289 = vrot.slane %v3287, 5
  %v3290 = vsel %vm75, %v3285, %v3289
  %v3292 = vshrl.u32 %v3187, 16
  %v3294 = vrot.slane %v3292, 4
  %v3295 = vshll.u32 %v3187, 16
  %v3297 = vrot.slane %v3295, 5
  %v3298 = vor.u32 %v3294, %v3297
  %v3299 = vrot.slane %v3298, 4
  %v3301 = vshll.u32 %v3188, 16
  %v3303 = vrot.slane %v3301, 5
  %v3304 = vsel %vm75, %v3299, %v3303
  %v3306 = vshrl.u32 %v3189, 16
  %v3308 = vrot.slane %v3306, 4
  %v3309 = vshll.u32 %v3189, 16
  %v3311 = vrot.slane %v3309, 5
  %v3312 = vor.u32 %v3308, %v3311
  %v3313 = vrot.slane %v3312, 4
  %v3315 = vshll.u32 %v3190, 16
  %v3317 = vrot.slane %v3315, 5
  %v3318 = vsel %vm75, %v3313, %v3317
  %v3320 = vshrl.u32 %v3191, 16
  %v3322 = vrot.slane %v3320, 4
  %v3323 = vshll.u32 %v3191, 16
  %v3325 = vrot.slane %v3323, 5
  %v3326 = vor.u32 %v3322, %v3325
  %v3327 = vrot.slane %v3326, 4
  %v3329 = vshll.u32 %v3192, 16
  %v3331 = vrot.slane %v3329, 5
  %v3332 = vsel %vm75, %v3327, %v3331
  %v3334 = vshrl.u32 %v3193, 16
  %v3336 = vrot.slane %v3334, 4
  %v3337 = vshll.u32 %v3193, 16
  %v3339 = vrot.slane %v3337, 5
  %v3340 = vor.u32 %v3336, %v3339
  %v3341 = vrot.slane %v3340, 4
  %v3343 = vshll.u32 %v3194, 16
  %v3345 = vrot.slane %v3343, 5
  %v3346 = vsel %vm75, %v3341, %v3345
  %v3348 = vshrl.u32 %v3195, 16
  %v3350 = vrot.slane %v3348, 4
  %v3351 = vshll.u32 %v3195, 16
  %v3353 = vrot.slane %v3351, 5
  %v3354 = vor.u32 %v3350, %v3353
  %v3355 = vrot.slane %v3354, 4
  %v3357 = vshll.u32 %v3196, 16
  %v3359 = vrot.slane %v3357, 5
  %v3360 = vsel %vm75, %v3355, %v3359
  %v3362 = vshrl.u32 %v3197, 16
  %v3364 = vrot.slane %v3362, 4
  %v3365 = vshll.u32 %v3197, 16
  %v3367 = vrot.slane %v3365, 5
  %v3368 = vor.u32 %v3364, %v3367
  %v3369 = vrot.slane %v3368, 4
  %v3371 = vshll.u32 %v3198, 16
  %v3373 = vrot.slane %v3371, 5
  %v3374 = vsel %vm75, %v3369, %v3373
  %v3376 = vshrl.u32 %v3199, 16
  %v3378 = vrot.slane %v3376, 4
  %v3379 = vshll.u32 %v3199, 16
  %v3381 = vrot.slane %v3379, 5
  %v3382 = vor.u32 %v3378, %v3381
  %v3383 = vrot.slane %v3382, 4
  %v3385 = vshll.u32 %v3200, 16
  %v3387 = vrot.slane %v3385, 5
  %v3388 = vsel %vm75, %v3383, %v3387
  %v3390 = vshrl.u32 %v3201, 16
  %v3392 = vrot.slane %v3390, 4
  %v3393 = vshll.u32 %v3201, 16
  %v3395 = vrot.slane %v3393, 5
  %v3396 = vor.u32 %v3392, %v3395
  %v3397 = vrot.slane %v3396, 4
  %v3399 = vshll.u32 %v3202, 16
  %v3401 = vrot.slane %v3399, 5
  %v3402 = vsel %vm75, %v3397, %v3401
  %v3404 = vshrl.u32 %v3203, 16
  %v3406 = vrot.slane %v3404, 4
  %v3407 = vshll.u32 %v3203, 16
  %v3409 = vrot.slane %v3407, 5
  %v3410 = vor.u32 %v3406, %v3409
  %v3411 = vrot.slane %v3410, 4
  %v3413 = vshll.u32 %v3204, 16
  %v3415 = vrot.slane %v3413, 5
  %v3416 = vsel %vm75, %v3411, %v3415
  %v3418 = vshrl.u32 %v3205, 16
  %v3420 = vrot.slane %v3418, 4
  %v3421 = vshll.u32 %v3205, 16
  %v3423 = vrot.slane %v3421, 5
  %v3424 = vor.u32 %v3420, %v3423
  %v3425 = vrot.slane %v3424, 4
  %v3427 = vshll.u32 %v3206, 16
  %v3429 = vrot.slane %v3427, 5
  %v3430 = vsel %vm75, %v3425, %v3429
  %s3431 = scalar_lea.vmem %s4, 64
  %v3432 = vld [vmem:[%s3431] sm:$0xf]
  %v3433 = vld [vmem:[%s3431 + $0x4] sm:$0xf]
  %v3434 = vld [vmem:[%s3431 + $0x8] sm:$0xf]
  %v3435 = vld [vmem:[%s3431 + $0xc] sm:$0xf]
  %v3436 = vld [vmem:[%s3431 + $0x10] sm:$0xf]
  %v3437 = vld [vmem:[%s3431 + $0x14] sm:$0xf]
  %v3438 = vld [vmem:[%s3431 + $0x18] sm:$0xf]
  %v3439 = vld [vmem:[%s3431 + $0x1c] sm:$0xf]
  %v3440 = vunpack.c.l.b16 %v3220
  %v3441 = vunpack.c.l.b16 %v3234
  %v3442 = vunpack.c.l.b16 %v3248
  %v3443 = vunpack.c.l.b16 %v3262
  %v3444 = vunpack.c.l.b16 %v3276
  %v3445 = vunpack.c.l.b16 %v3290
  %v3446 = vunpack.c.l.b16 %v3304
  %v3447 = vunpack.c.l.b16 %v3318
  %v3448 = vunpack.c.l.b16 %v3332
  %v3449 = vunpack.c.l.b16 %v3346
  %v3450 = vunpack.c.l.b16 %v3360
  %v3451 = vunpack.c.l.b16 %v3374
  %v3452 = vunpack.c.l.b16 %v3388
  %v3453 = vunpack.c.l.b16 %v3402
  %v3454 = vunpack.c.l.b16 %v3416
  %v3455 = vunpack.c.l.b16 %v3430
  %v3456 = vpack.c.b16 %v3441, %v3440
  %v3457 = vpack.c.b16 %v3443, %v3442
  %v3458 = vpack.c.b16 %v3445, %v3444
  %v3459 = vpack.c.b16 %v3447, %v3446
  %v3460 = vpack.c.b16 %v3449, %v3448
  %v3461 = vpack.c.b16 %v3451, %v3450
  %v3462 = vpack.c.b16 %v3453, %v3452
  %v3463 = vpack.c.b16 %v3455, %v3454
  %v3472 = vunpack.c.l.b16 %v3432
  %v3473 = vunpack.c.l.b16 %v3433
  %v3474 = vunpack.c.l.b16 %v3434
  %v3475 = vunpack.c.l.b16 %v3435
  %v3476 = vunpack.c.l.b16 %v3436
  %v3477 = vunpack.c.l.b16 %v3437
  %v3478 = vunpack.c.l.b16 %v3438
  %v3479 = vunpack.c.l.b16 %v3439
  %v3480 = vpack.c.b16 %v3473, %v3472
  %v3481 = vpack.c.b16 %v3475, %v3474
  %v3482 = vpack.c.b16 %v3477, %v3476
  %v3483 = vpack.c.b16 %v3479, %v3478
  %v3489 = vsel %vm357, %v3456, 0
  %v3492 = vsel %vm357, %v3457, 0
  %v3495 = vsel %vm357, %v3458, 0
  %v3498 = vsel %vm357, %v3459, 0
  %v3501 = vsel %vm357, %v3460, 0
  %v3504 = vsel %vm357, %v3461, 0
  %v3507 = vsel %vm357, %v3462, 0
  %v3510 = vsel %vm357, %v3463, 0
  %3512 = vmatpush.bf16.msra.mxu0 0
  %3513 = vmatpush.bf16.msra.mxu0 0
  %3514 = vmatpush.bf16.msra.mxu0 0
  %3515 = vmatpush.bf16.msra.mxu0 0
  %3516 = vmatpush.bf16.msra.mxu0 %v3483
  %3517 = vmatpush.bf16.msra.mxu0 %v3482
  %3518 = vmatpush.bf16.msra.mxu0 %v3481
  %3519 = vmatpush.bf16.msra.mxu0 %v3480
  %3520 = vmatmul.bf16.gmra.mxu0 %v3489
  %v3521 = vpop.f32.mrf.mxu0
  %v3522 = vadd.f32 0.0, %v3521
  %v3523 = vpop.f32.mrf.mxu0
  %v3524 = vadd.f32 0.0, %v3523
  %3525 = vmatmul.bf16.gmra.mxu0 %v3492
  %v3526 = vpop.f32.mrf.mxu0
  %v3527 = vadd.f32 0.0, %v3526
  %v3528 = vpop.f32.mrf.mxu0
  %v3529 = vadd.f32 0.0, %v3528
  %3530 = vmatmul.bf16.gmra.mxu0 %v3495
  %v3531 = vpop.f32.mrf.mxu0
  %v3532 = vadd.f32 0.0, %v3531
  %v3533 = vpop.f32.mrf.mxu0
  %v3534 = vadd.f32 0.0, %v3533
  %3535 = vmatmul.bf16.gmra.mxu0 %v3498
  %v3536 = vpop.f32.mrf.mxu0
  %v3537 = vadd.f32 0.0, %v3536
  %v3538 = vpop.f32.mrf.mxu0
  %v3539 = vadd.f32 0.0, %v3538
  %3540 = vmatmul.bf16.gmra.mxu0 %v3501
  %v3541 = vpop.f32.mrf.mxu0
  %v3542 = vadd.f32 0.0, %v3541
  %v3543 = vpop.f32.mrf.mxu0
  %v3544 = vadd.f32 0.0, %v3543
  %3545 = vmatmul.bf16.gmra.mxu0 %v3504
  %v3546 = vpop.f32.mrf.mxu0
  %v3547 = vadd.f32 0.0, %v3546
  %v3548 = vpop.f32.mrf.mxu0
  %v3549 = vadd.f32 0.0, %v3548
  %3550 = vmatmul.bf16.gmra.mxu0 %v3507
  %v3551 = vpop.f32.mrf.mxu0
  %v3552 = vadd.f32 0.0, %v3551
  %v3553 = vpop.f32.mrf.mxu0
  %v3554 = vadd.f32 0.0, %v3553
  %3555 = vmatmul.bf16.gmra.mxu0 %v3510
  %v3556 = vpop.f32.mrf.mxu0
  %v3557 = vadd.f32 0.0, %v3556
  %v3558 = vpop.f32.mrf.mxu0
  %v3559 = vadd.f32 0.0, %v3558
  %3560 = vdwg.mxu0
  %v3561 = vadd.f32 %v3136, %v3522
  %v3562 = vadd.f32 %v3138, %v3524
  %v3563 = vadd.f32 %v3141, %v3527
  %v3564 = vadd.f32 %v3143, %v3529
  %v3565 = vadd.f32 %v3146, %v3532
  %v3566 = vadd.f32 %v3148, %v3534
  %v3567 = vadd.f32 %v3151, %v3537
  %v3568 = vadd.f32 %v3153, %v3539
  %v3569 = vadd.f32 %v3156, %v3542
  %v3570 = vadd.f32 %v3158, %v3544
  %v3571 = vadd.f32 %v3161, %v3547
  %v3572 = vadd.f32 %v3163, %v3549
  %v3573 = vadd.f32 %v3166, %v3552
  %v3574 = vadd.f32 %v3168, %v3554
  %v3575 = vadd.f32 %v3171, %v3557
  %v3576 = vadd.f32 %v3173, %v3559
  %v3577 = vld [vmem:[%s2640] sm:$0x8]
  %v3578 = vld [vmem:[%s2640 + $0x4] sm:$0xf]
  %v3579 = vld [vmem:[%s2640 + $0xc] sm:$0x8]
  %v3580 = vld [vmem:[%s2640 + $0x10] sm:$0xf]
  %v3581 = vld [vmem:[%s2640 + $0x18] sm:$0x8]
  %v3582 = vld [vmem:[%s2640 + $0x1c] sm:$0xf]
  %v3583 = vld [vmem:[%s2640 + $0x24] sm:$0x8]
  %v3584 = vld [vmem:[%s2640 + $0x28] sm:$0xf]
  %v3585 = vld [vmem:[%s2640 + $0x30] sm:$0x8]
  %v3586 = vld [vmem:[%s2640 + $0x34] sm:$0xf]
  %v3587 = vld [vmem:[%s2640 + $0x3c] sm:$0x8]
  %v3588 = vld [vmem:[%s2640 + $0x40] sm:$0xf]
  %v3589 = vld [vmem:[%s2640 + $0x48] sm:$0x8]
  %v3590 = vld [vmem:[%s2640 + $0x4c] sm:$0xf]
  %v3591 = vld [vmem:[%s2640 + $0x54] sm:$0x8]
  %v3592 = vld [vmem:[%s2640 + $0x58] sm:$0xf]
  %v3593 = vld [vmem:[%s2640 + $0x78] sm:$0x8]
  %v3594 = vld [vmem:[%s2640 + $0x7c] sm:$0xf]
  %v3595 = vld [vmem:[%s2640 + $0x84] sm:$0x8]
  %v3596 = vld [vmem:[%s2640 + $0x88] sm:$0xf]
  %v3597 = vld [vmem:[%s2640 + $0x90] sm:$0x8]
  %v3598 = vld [vmem:[%s2640 + $0x94] sm:$0xf]
  %v3599 = vld [vmem:[%s2640 + $0x9c] sm:$0x8]
  %v3600 = vld [vmem:[%s2640 + $0xa0] sm:$0xf]
  %v3601 = vld [vmem:[%s2640 + $0xa8] sm:$0x8]
  %v3602 = vld [vmem:[%s2640 + $0xac] sm:$0xf]
  %v3603 = vld [vmem:[%s2640 + $0xb4] sm:$0x8]
  %v3604 = vld [vmem:[%s2640 + $0xb8] sm:$0xf]
  %v3605 = vld [vmem:[%s2640 + $0xc0] sm:$0x8]
  %v3606 = vld [vmem:[%s2640 + $0xc4] sm:$0xf]
  %v3607 = vld [vmem:[%s2640 + $0xcc] sm:$0x8]
  %v3608 = vld [vmem:[%s2640 + $0xd0] sm:$0xf]
  %v3610 = vshrl.u32 %v3577, 16
  %v3612 = vrot.slane %v3610, 7
  %v3613 = vrot.slane %v3612, 4
  %v3615 = vshrl.u32 %v3578, 16
  %v3617 = vrot.slane %v3615, 7
  %v3618 = vshll.u32 %v3578, 16
  %v3620 = vor.u32 %v3617, %v3618
  %v3621 = vsel %vm2691, %v3613, %v3620
  %v3623 = vshrl.u32 %v3579, 16
  %v3625 = vrot.slane %v3623, 7
  %v3626 = vrot.slane %v3625, 4
  %v3628 = vshrl.u32 %v3580, 16
  %v3630 = vrot.slane %v3628, 7
  %v3631 = vshll.u32 %v3580, 16
  %v3633 = vor.u32 %v3630, %v3631
  %v3634 = vsel %vm2691, %v3626, %v3633
  %v3636 = vshrl.u32 %v3581, 16
  %v3638 = vrot.slane %v3636, 7
  %v3639 = vrot.slane %v3638, 4
  %v3641 = vshrl.u32 %v3582, 16
  %v3643 = vrot.slane %v3641, 7
  %v3644 = vshll.u32 %v3582, 16
  %v3646 = vor.u32 %v3643, %v3644
  %v3647 = vsel %vm2691, %v3639, %v3646
  %v3649 = vshrl.u32 %v3583, 16
  %v3651 = vrot.slane %v3649, 7
  %v3652 = vrot.slane %v3651, 4
  %v3654 = vshrl.u32 %v3584, 16
  %v3656 = vrot.slane %v3654, 7
  %v3657 = vshll.u32 %v3584, 16
  %v3659 = vor.u32 %v3656, %v3657
  %v3660 = vsel %vm2691, %v3652, %v3659
  %v3662 = vshrl.u32 %v3585, 16
  %v3664 = vrot.slane %v3662, 7
  %v3665 = vrot.slane %v3664, 4
  %v3667 = vshrl.u32 %v3586, 16
  %v3669 = vrot.slane %v3667, 7
  %v3670 = vshll.u32 %v3586, 16
  %v3672 = vor.u32 %v3669, %v3670
  %v3673 = vsel %vm2691, %v3665, %v3672
  %v3675 = vshrl.u32 %v3587, 16
  %v3677 = vrot.slane %v3675, 7
  %v3678 = vrot.slane %v3677, 4
  %v3680 = vshrl.u32 %v3588, 16
  %v3682 = vrot.slane %v3680, 7
  %v3683 = vshll.u32 %v3588, 16
  %v3685 = vor.u32 %v3682, %v3683
  %v3686 = vsel %vm2691, %v3678, %v3685
  %v3688 = vshrl.u32 %v3589, 16
  %v3690 = vrot.slane %v3688, 7
  %v3691 = vrot.slane %v3690, 4
  %v3693 = vshrl.u32 %v3590, 16
  %v3695 = vrot.slane %v3693, 7
  %v3696 = vshll.u32 %v3590, 16
  %v3698 = vor.u32 %v3695, %v3696
  %v3699 = vsel %vm2691, %v3691, %v3698
  %v3701 = vshrl.u32 %v3591, 16
  %v3703 = vrot.slane %v3701, 7
  %v3704 = vrot.slane %v3703, 4
  %v3706 = vshrl.u32 %v3592, 16
  %v3708 = vrot.slane %v3706, 7
  %v3709 = vshll.u32 %v3592, 16
  %v3711 = vor.u32 %v3708, %v3709
  %v3712 = vsel %vm2691, %v3704, %v3711
  %v3714 = vshrl.u32 %v3593, 16
  %v3716 = vrot.slane %v3714, 7
  %v3717 = vrot.slane %v3716, 4
  %v3719 = vshrl.u32 %v3594, 16
  %v3721 = vrot.slane %v3719, 7
  %v3722 = vshll.u32 %v3594, 16
  %v3724 = vor.u32 %v3721, %v3722
  %v3725 = vsel %vm2691, %v3717, %v3724
  %v3727 = vshrl.u32 %v3595, 16
  %v3729 = vrot.slane %v3727, 7
  %v3730 = vrot.slane %v3729, 4
  %v3732 = vshrl.u32 %v3596, 16
  %v3734 = vrot.slane %v3732, 7
  %v3735 = vshll.u32 %v3596, 16
  %v3737 = vor.u32 %v3734, %v3735
  %v3738 = vsel %vm2691, %v3730, %v3737
  %v3740 = vshrl.u32 %v3597, 16
  %v3742 = vrot.slane %v3740, 7
  %v3743 = vrot.slane %v3742, 4
  %v3745 = vshrl.u32 %v3598, 16
  %v3747 = vrot.slane %v3745, 7
  %v3748 = vshll.u32 %v3598, 16
  %v3750 = vor.u32 %v3747, %v3748
  %v3751 = vsel %vm2691, %v3743, %v3750
  %v3753 = vshrl.u32 %v3599, 16
  %v3755 = vrot.slane %v3753, 7
  %v3756 = vrot.slane %v3755, 4
  %v3758 = vshrl.u32 %v3600, 16
  %v3760 = vrot.slane %v3758, 7
  %v3761 = vshll.u32 %v3600, 16
  %v3763 = vor.u32 %v3760, %v3761
  %v3764 = vsel %vm2691, %v3756, %v3763
  %v3766 = vshrl.u32 %v3601, 16
  %v3768 = vrot.slane %v3766, 7
  %v3769 = vrot.slane %v3768, 4
  %v3771 = vshrl.u32 %v3602, 16
  %v3773 = vrot.slane %v3771, 7
  %v3774 = vshll.u32 %v3602, 16
  %v3776 = vor.u32 %v3773, %v3774
  %v3777 = vsel %vm2691, %v3769, %v3776
  %v3779 = vshrl.u32 %v3603, 16
  %v3781 = vrot.slane %v3779, 7
  %v3782 = vrot.slane %v3781, 4
  %v3784 = vshrl.u32 %v3604, 16
  %v3786 = vrot.slane %v3784, 7
  %v3787 = vshll.u32 %v3604, 16
  %v3789 = vor.u32 %v3786, %v3787
  %v3790 = vsel %vm2691, %v3782, %v3789
  %v3792 = vshrl.u32 %v3605, 16
  %v3794 = vrot.slane %v3792, 7
  %v3795 = vrot.slane %v3794, 4
  %v3797 = vshrl.u32 %v3606, 16
  %v3799 = vrot.slane %v3797, 7
  %v3800 = vshll.u32 %v3606, 16
  %v3802 = vor.u32 %v3799, %v3800
  %v3803 = vsel %vm2691, %v3795, %v3802
  %v3805 = vshrl.u32 %v3607, 16
  %v3807 = vrot.slane %v3805, 7
  %v3808 = vrot.slane %v3807, 4
  %v3810 = vshrl.u32 %v3608, 16
  %v3812 = vrot.slane %v3810, 7
  %v3813 = vshll.u32 %v3608, 16
  %v3815 = vor.u32 %v3812, %v3813
  %v3816 = vsel %vm2691, %v3808, %v3815
  %s3817 = scalar_lea.vmem %s4, 96
  %v3818 = vld [vmem:[%s3817] sm:$0xf]
  %v3819 = vld [vmem:[%s3817 + $0x4] sm:$0xf]
  %v3820 = vld [vmem:[%s3817 + $0x8] sm:$0xf]
  %v3821 = vld [vmem:[%s3817 + $0xc] sm:$0xf]
  %v3822 = vld [vmem:[%s3817 + $0x10] sm:$0xf]
  %v3823 = vld [vmem:[%s3817 + $0x14] sm:$0xf]
  %v3824 = vld [vmem:[%s3817 + $0x18] sm:$0xf]
  %v3825 = vld [vmem:[%s3817 + $0x1c] sm:$0xf]
  %v3826 = vunpack.c.l.b16 %v3621
  %v3827 = vunpack.c.l.b16 %v3634
  %v3828 = vunpack.c.l.b16 %v3647
  %v3829 = vunpack.c.l.b16 %v3660
  %v3830 = vunpack.c.l.b16 %v3673
  %v3831 = vunpack.c.l.b16 %v3686
  %v3832 = vunpack.c.l.b16 %v3699
  %v3833 = vunpack.c.l.b16 %v3712
  %v3834 = vunpack.c.l.b16 %v3725
  %v3835 = vunpack.c.l.b16 %v3738
  %v3836 = vunpack.c.l.b16 %v3751
  %v3837 = vunpack.c.l.b16 %v3764
  %v3838 = vunpack.c.l.b16 %v3777
  %v3839 = vunpack.c.l.b16 %v3790
  %v3840 = vunpack.c.l.b16 %v3803
  %v3841 = vunpack.c.l.b16 %v3816
  %v3842 = vpack.c.b16 %v3827, %v3826
  %v3843 = vpack.c.b16 %v3829, %v3828
  %v3844 = vpack.c.b16 %v3831, %v3830
  %v3845 = vpack.c.b16 %v3833, %v3832
  %v3846 = vpack.c.b16 %v3835, %v3834
  %v3847 = vpack.c.b16 %v3837, %v3836
  %v3848 = vpack.c.b16 %v3839, %v3838
  %v3849 = vpack.c.b16 %v3841, %v3840
  %v3858 = vunpack.c.l.b16 %v3818
  %v3859 = vunpack.c.l.b16 %v3819
  %v3860 = vunpack.c.l.b16 %v3820
  %v3861 = vunpack.c.l.b16 %v3821
  %v3862 = vunpack.c.l.b16 %v3822
  %v3863 = vunpack.c.l.b16 %v3823
  %v3864 = vunpack.c.l.b16 %v3824
  %v3865 = vunpack.c.l.b16 %v3825
  %v3866 = vpack.c.b16 %v3859, %v3858
  %v3867 = vpack.c.b16 %v3861, %v3860
  %v3868 = vpack.c.b16 %v3863, %v3862
  %v3869 = vpack.c.b16 %v3865, %v3864
  %v3875 = vsel %vm357, %v3842, 0
  %v3878 = vsel %vm357, %v3843, 0
  %v3881 = vsel %vm357, %v3844, 0
  %v3884 = vsel %vm357, %v3845, 0
  %v3887 = vsel %vm357, %v3846, 0
  %v3890 = vsel %vm357, %v3847, 0
  %v3893 = vsel %vm357, %v3848, 0
  %v3896 = vsel %vm357, %v3849, 0
  %3898 = vmatpush.bf16.msra.mxu0 0
  %3899 = vmatpush.bf16.msra.mxu0 0
  %3900 = vmatpush.bf16.msra.mxu0 0
  %3901 = vmatpush.bf16.msra.mxu0 0
  %3902 = vmatpush.bf16.msra.mxu0 %v3869
  %3903 = vmatpush.bf16.msra.mxu0 %v3868
  %3904 = vmatpush.bf16.msra.mxu0 %v3867
  %3905 = vmatpush.bf16.msra.mxu0 %v3866
  %3906 = vmatmul.bf16.gmra.mxu0 %v3875
  %v3907 = vpop.f32.mrf.mxu0
  %v3908 = vadd.f32 0.0, %v3907
  %v3909 = vpop.f32.mrf.mxu0
  %v3910 = vadd.f32 0.0, %v3909
  %3911 = vmatmul.bf16.gmra.mxu0 %v3878
  %v3912 = vpop.f32.mrf.mxu0
  %v3913 = vadd.f32 0.0, %v3912
  %v3914 = vpop.f32.mrf.mxu0
  %v3915 = vadd.f32 0.0, %v3914
  %3916 = vmatmul.bf16.gmra.mxu0 %v3881
  %v3917 = vpop.f32.mrf.mxu0
  %v3918 = vadd.f32 0.0, %v3917
  %v3919 = vpop.f32.mrf.mxu0
  %v3920 = vadd.f32 0.0, %v3919
  %3921 = vmatmul.bf16.gmra.mxu0 %v3884
  %v3922 = vpop.f32.mrf.mxu0
  %v3923 = vadd.f32 0.0, %v3922
  %v3924 = vpop.f32.mrf.mxu0
  %v3925 = vadd.f32 0.0, %v3924
  %3926 = vmatmul.bf16.gmra.mxu0 %v3887
  %v3927 = vpop.f32.mrf.mxu0
  %v3928 = vadd.f32 0.0, %v3927
  %v3929 = vpop.f32.mrf.mxu0
  %v3930 = vadd.f32 0.0, %v3929
  %3931 = vmatmul.bf16.gmra.mxu0 %v3890
  %v3932 = vpop.f32.mrf.mxu0
  %v3933 = vadd.f32 0.0, %v3932
  %v3934 = vpop.f32.mrf.mxu0
  %v3935 = vadd.f32 0.0, %v3934
  %3936 = vmatmul.bf16.gmra.mxu0 %v3893
  %v3937 = vpop.f32.mrf.mxu0
  %v3938 = vadd.f32 0.0, %v3937
  %v3939 = vpop.f32.mrf.mxu0
  %v3940 = vadd.f32 0.0, %v3939
  %3941 = vmatmul.bf16.gmra.mxu0 %v3896
  %v3942 = vpop.f32.mrf.mxu0
  %v3943 = vadd.f32 0.0, %v3942
  %v3944 = vpop.f32.mrf.mxu0
  %v3945 = vadd.f32 0.0, %v3944
  %3946 = vdwg.mxu0
  %v3947 = vadd.f32 %v3561, %v3908
  %v3948 = vadd.f32 %v3562, %v3910
  %v3949 = vadd.f32 %v3563, %v3913
  %v3950 = vadd.f32 %v3564, %v3915
  %v3951 = vadd.f32 %v3565, %v3918
  %v3952 = vadd.f32 %v3566, %v3920
  %v3953 = vadd.f32 %v3567, %v3923
  %v3954 = vadd.f32 %v3568, %v3925
  %v3955 = vadd.f32 %v3569, %v3928
  %v3956 = vadd.f32 %v3570, %v3930
  %v3957 = vadd.f32 %v3571, %v3933
  %v3958 = vadd.f32 %v3572, %v3935
  %v3959 = vadd.f32 %v3573, %v3938
  %v3960 = vadd.f32 %v3574, %v3940
  %v3961 = vadd.f32 %v3575, %v3943
  %v3962 = vadd.f32 %v3576, %v3945
  %s3963 = scalar_lea.vmem %s4, 128
  %v3964 = vld [vmem:[%s3963] sm:$0xf]
  %v3965 = vld [vmem:[%s3963 + $0x4] sm:$0xf]
  %v3966 = vld [vmem:[%s3963 + $0x8] sm:$0xf]
  %v3967 = vld [vmem:[%s3963 + $0xc] sm:$0xf]
  %v3968 = vld [vmem:[%s3963 + $0x10] sm:$0xf]
  %v3969 = vld [vmem:[%s3963 + $0x14] sm:$0xf]
  %v3970 = vld [vmem:[%s3963 + $0x18] sm:$0xf]
  %v3971 = vld [vmem:[%s3963 + $0x1c] sm:$0xf]
  %v3988 = vunpack.c.l.b16 %v3578
  %v3989 = vunpack.c.l.b16 %v3580
  %v3990 = vunpack.c.l.b16 %v3582
  %v3991 = vunpack.c.l.b16 %v3584
  %v3992 = vunpack.c.l.b16 %v3586
  %v3993 = vunpack.c.l.b16 %v3588
  %v3994 = vunpack.c.l.b16 %v3590
  %v3995 = vunpack.c.l.b16 %v3592
  %v3996 = vunpack.c.l.b16 %v3594
  %v3997 = vunpack.c.l.b16 %v3596
  %v3998 = vunpack.c.l.b16 %v3598
  %v3999 = vunpack.c.l.b16 %v3600
  %v4000 = vunpack.c.l.b16 %v3602
  %v4001 = vunpack.c.l.b16 %v3604
  %v4002 = vunpack.c.l.b16 %v3606
  %v4003 = vunpack.c.l.b16 %v3608
  %v4004 = vpack.c.b16 %v3989, %v3988
  %v4005 = vpack.c.b16 %v3991, %v3990
  %v4006 = vpack.c.b16 %v3993, %v3992
  %v4007 = vpack.c.b16 %v3995, %v3994
  %v4008 = vpack.c.b16 %v3997, %v3996
  %v4009 = vpack.c.b16 %v3999, %v3998
  %v4010 = vpack.c.b16 %v4001, %v4000
  %v4011 = vpack.c.b16 %v4003, %v4002
  %v4020 = vunpack.c.l.b16 %v3964
  %v4021 = vunpack.c.l.b16 %v3965
  %v4022 = vunpack.c.l.b16 %v3966
  %v4023 = vunpack.c.l.b16 %v3967
  %v4024 = vunpack.c.l.b16 %v3968
  %v4025 = vunpack.c.l.b16 %v3969
  %v4026 = vunpack.c.l.b16 %v3970
  %v4027 = vunpack.c.l.b16 %v3971
  %v4028 = vpack.c.b16 %v4021, %v4020
  %v4029 = vpack.c.b16 %v4023, %v4022
  %v4030 = vpack.c.b16 %v4025, %v4024
  %v4031 = vpack.c.b16 %v4027, %v4026
  %v4037 = vsel %vm357, %v4004, 0
  %v4040 = vsel %vm357, %v4005, 0
  %v4043 = vsel %vm357, %v4006, 0
  %v4046 = vsel %vm357, %v4007, 0
  %v4049 = vsel %vm357, %v4008, 0
  %v4052 = vsel %vm357, %v4009, 0
  %v4055 = vsel %vm357, %v4010, 0
  %v4058 = vsel %vm357, %v4011, 0
  %4060 = vmatpush.bf16.msra.mxu0 0
  %4061 = vmatpush.bf16.msra.mxu0 0
  %4062 = vmatpush.bf16.msra.mxu0 0
  %4063 = vmatpush.bf16.msra.mxu0 0
  %4064 = vmatpush.bf16.msra.mxu0 %v4031
  %4065 = vmatpush.bf16.msra.mxu0 %v4030
  %4066 = vmatpush.bf16.msra.mxu0 %v4029
  %4067 = vmatpush.bf16.msra.mxu0 %v4028
  %4068 = vmatmul.bf16.gmra.mxu0 %v4037
  %v4069 = vpop.f32.mrf.mxu0
  %v4070 = vadd.f32 0.0, %v4069
  %v4071 = vpop.f32.mrf.mxu0
  %v4072 = vadd.f32 0.0, %v4071
  %4073 = vmatmul.bf16.gmra.mxu0 %v4040
  %v4074 = vpop.f32.mrf.mxu0
  %v4075 = vadd.f32 0.0, %v4074
  %v4076 = vpop.f32.mrf.mxu0
  %v4077 = vadd.f32 0.0, %v4076
  %4078 = vmatmul.bf16.gmra.mxu0 %v4043
  %v4079 = vpop.f32.mrf.mxu0
  %v4080 = vadd.f32 0.0, %v4079
  %v4081 = vpop.f32.mrf.mxu0
  %v4082 = vadd.f32 0.0, %v4081
  %4083 = vmatmul.bf16.gmra.mxu0 %v4046
  %v4084 = vpop.f32.mrf.mxu0
  %v4085 = vadd.f32 0.0, %v4084
  %v4086 = vpop.f32.mrf.mxu0
  %v4087 = vadd.f32 0.0, %v4086
  %4088 = vmatmul.bf16.gmra.mxu0 %v4049
  %v4089 = vpop.f32.mrf.mxu0
  %v4090 = vadd.f32 0.0, %v4089
  %v4091 = vpop.f32.mrf.mxu0
  %v4092 = vadd.f32 0.0, %v4091
  %4093 = vmatmul.bf16.gmra.mxu0 %v4052
  %v4094 = vpop.f32.mrf.mxu0
  %v4095 = vadd.f32 0.0, %v4094
  %v4096 = vpop.f32.mrf.mxu0
  %v4097 = vadd.f32 0.0, %v4096
  %4098 = vmatmul.bf16.gmra.mxu0 %v4055
  %v4099 = vpop.f32.mrf.mxu0
  %v4100 = vadd.f32 0.0, %v4099
  %v4101 = vpop.f32.mrf.mxu0
  %v4102 = vadd.f32 0.0, %v4101
  %4103 = vmatmul.bf16.gmra.mxu0 %v4058
  %v4104 = vpop.f32.mrf.mxu0
  %v4105 = vadd.f32 0.0, %v4104
  %v4106 = vpop.f32.mrf.mxu0
  %v4107 = vadd.f32 0.0, %v4106
  %4108 = vdwg.mxu0
  %v4109 = vadd.f32 %v3947, %v4070
  %v4110 = vadd.f32 %v3948, %v4072
  %v4111 = vadd.f32 %v3949, %v4075
  %v4112 = vadd.f32 %v3950, %v4077
  %v4113 = vadd.f32 %v3951, %v4080
  %v4114 = vadd.f32 %v3952, %v4082
  %v4115 = vadd.f32 %v3953, %v4085
  %v4116 = vadd.f32 %v3954, %v4087
  %v4117 = vadd.f32 %v3955, %v4090
  %v4118 = vadd.f32 %v3956, %v4092
  %v4119 = vadd.f32 %v3957, %v4095
  %v4120 = vadd.f32 %v3958, %v4097
  %v4121 = vadd.f32 %v3959, %v4100
  %v4122 = vadd.f32 %v3960, %v4102
  %v4123 = vadd.f32 %v3961, %v4105
  %v4124 = vadd.f32 %v3962, %v4107
  %v4125 = vld [vmem:[%s2640 + $0x4] sm:$0xf]
  %v4126 = vld [vmem:[%s2640 + $0x8] sm:$0x1]
  %v4127 = vld [vmem:[%s2640 + $0x10] sm:$0xf]
  %v4128 = vld [vmem:[%s2640 + $0x14] sm:$0x1]
  %v4129 = vld [vmem:[%s2640 + $0x1c] sm:$0xf]
  %v4130 = vld [vmem:[%s2640 + $0x20] sm:$0x1]
  %v4131 = vld [vmem:[%s2640 + $0x28] sm:$0xf]
  %v4132 = vld [vmem:[%s2640 + $0x2c] sm:$0x1]
  %v4133 = vld [vmem:[%s2640 + $0x34] sm:$0xf]
  %v4134 = vld [vmem:[%s2640 + $0x38] sm:$0x1]
  %v4135 = vld [vmem:[%s2640 + $0x40] sm:$0xf]
  %v4136 = vld [vmem:[%s2640 + $0x44] sm:$0x1]
  %v4137 = vld [vmem:[%s2640 + $0x4c] sm:$0xf]
  %v4138 = vld [vmem:[%s2640 + $0x50] sm:$0x1]
  %v4139 = vld [vmem:[%s2640 + $0x58] sm:$0xf]
  %v4140 = vld [vmem:[%s2640 + $0x5c] sm:$0x1]
  %v4141 = vld [vmem:[%s2640 + $0x7c] sm:$0xf]
  %v4142 = vld [vmem:[%s2640 + $0x80] sm:$0x1]
  %v4143 = vld [vmem:[%s2640 + $0x88] sm:$0xf]
  %v4144 = vld [vmem:[%s2640 + $0x8c] sm:$0x1]
  %v4145 = vld [vmem:[%s2640 + $0x94] sm:$0xf]
  %v4146 = vld [vmem:[%s2640 + $0x98] sm:$0x1]
  %v4147 = vld [vmem:[%s2640 + $0xa0] sm:$0xf]
  %v4148 = vld [vmem:[%s2640 + $0xa4] sm:$0x1]
  %v4149 = vld [vmem:[%s2640 + $0xac] sm:$0xf]
  %v4150 = vld [vmem:[%s2640 + $0xb0] sm:$0x1]
  %v4151 = vld [vmem:[%s2640 + $0xb8] sm:$0xf]
  %v4152 = vld [vmem:[%s2640 + $0xbc] sm:$0x1]
  %v4153 = vld [vmem:[%s2640 + $0xc4] sm:$0xf]
  %v4154 = vld [vmem:[%s2640 + $0xc8] sm:$0x1]
  %v4155 = vld [vmem:[%s2640 + $0xd0] sm:$0xf]
  %v4156 = vld [vmem:[%s2640 + $0xd4] sm:$0x1]
  %v4158 = vshrl.u32 %v4125, 16
  %v4160 = vrot.slane %v4158, 4
  %v4161 = vshll.u32 %v4125, 16
  %v4163 = vrot.slane %v4161, 5
  %v4164 = vor.u32 %v4160, %v4163
  %v4165 = vrot.slane %v4164, 4
  %v4167 = vshll.u32 %v4126, 16
  %v4169 = vrot.slane %v4167, 5
  %v4170 = vsel %vm75, %v4165, %v4169
  %v4172 = vshrl.u32 %v4127, 16
  %v4174 = vrot.slane %v4172, 4
  %v4175 = vshll.u32 %v4127, 16
  %v4177 = vrot.slane %v4175, 5
  %v4178 = vor.u32 %v4174, %v4177
  %v4179 = vrot.slane %v4178, 4
  %v4181 = vshll.u32 %v4128, 16
  %v4183 = vrot.slane %v4181, 5
  %v4184 = vsel %vm75, %v4179, %v4183
  %v4186 = vshrl.u32 %v4129, 16
  %v4188 = vrot.slane %v4186, 4
  %v4189 = vshll.u32 %v4129, 16
  %v4191 = vrot.slane %v4189, 5
  %v4192 = vor.u32 %v4188, %v4191
  %v4193 = vrot.slane %v4192, 4
  %v4195 = vshll.u32 %v4130, 16
  %v4197 = vrot.slane %v4195, 5
  %v4198 = vsel %vm75, %v4193, %v4197
  %v4200 = vshrl.u32 %v4131, 16
  %v4202 = vrot.slane %v4200, 4
  %v4203 = vshll.u32 %v4131, 16
  %v4205 = vrot.slane %v4203, 5
  %v4206 = vor.u32 %v4202, %v4205
  %v4207 = vrot.slane %v4206, 4
  %v4209 = vshll.u32 %v4132, 16
  %v4211 = vrot.slane %v4209, 5
  %v4212 = vsel %vm75, %v4207, %v4211
  %v4214 = vshrl.u32 %v4133, 16
  %v4216 = vrot.slane %v4214, 4
  %v4217 = vshll.u32 %v4133, 16
  %v4219 = vrot.slane %v4217, 5
  %v4220 = vor.u32 %v4216, %v4219
  %v4221 = vrot.slane %v4220, 4
  %v4223 = vshll.u32 %v4134, 16
  %v4225 = vrot.slane %v4223, 5
  %v4226 = vsel %vm75, %v4221, %v4225
  %v4228 = vshrl.u32 %v4135, 16
  %v4230 = vrot.slane %v4228, 4
  %v4231 = vshll.u32 %v4135, 16
  %v4233 = vrot.slane %v4231, 5
  %v4234 = vor.u32 %v4230, %v4233
  %v4235 = vrot.slane %v4234, 4
  %v4237 = vshll.u32 %v4136, 16
  %v4239 = vrot.slane %v4237, 5
  %v4240 = vsel %vm75, %v4235, %v4239
  %v4242 = vshrl.u32 %v4137, 16
  %v4244 = vrot.slane %v4242, 4
  %v4245 = vshll.u32 %v4137, 16
  %v4247 = vrot.slane %v4245, 5
  %v4248 = vor.u32 %v4244, %v4247
  %v4249 = vrot.slane %v4248, 4
  %v4251 = vshll.u32 %v4138, 16
  %v4253 = vrot.slane %v4251, 5
  %v4254 = vsel %vm75, %v4249, %v4253
  %v4256 = vshrl.u32 %v4139, 16
  %v4258 = vrot.slane %v4256, 4
  %v4259 = vshll.u32 %v4139, 16
  %v4261 = vrot.slane %v4259, 5
  %v4262 = vor.u32 %v4258, %v4261
  %v4263 = vrot.slane %v4262, 4
  %v4265 = vshll.u32 %v4140, 16
  %v4267 = vrot.slane %v4265, 5
  %v4268 = vsel %vm75, %v4263, %v4267
  %v4270 = vshrl.u32 %v4141, 16
  %v4272 = vrot.slane %v4270, 4
  %v4273 = vshll.u32 %v4141, 16
  %v4275 = vrot.slane %v4273, 5
  %v4276 = vor.u32 %v4272, %v4275
  %v4277 = vrot.slane %v4276, 4
  %v4279 = vshll.u32 %v4142, 16
  %v4281 = vrot.slane %v4279, 5
  %v4282 = vsel %vm75, %v4277, %v4281
  %v4284 = vshrl.u32 %v4143, 16
  %v4286 = vrot.slane %v4284, 4
  %v4287 = vshll.u32 %v4143, 16
  %v4289 = vrot.slane %v4287, 5
  %v4290 = vor.u32 %v4286, %v4289
  %v4291 = vrot.slane %v4290, 4
  %v4293 = vshll.u32 %v4144, 16
  %v4295 = vrot.slane %v4293, 5
  %v4296 = vsel %vm75, %v4291, %v4295
  %v4298 = vshrl.u32 %v4145, 16
  %v4300 = vrot.slane %v4298, 4
  %v4301 = vshll.u32 %v4145, 16
  %v4303 = vrot.slane %v4301, 5
  %v4304 = vor.u32 %v4300, %v4303
  %v4305 = vrot.slane %v4304, 4
  %v4307 = vshll.u32 %v4146, 16
  %v4309 = vrot.slane %v4307, 5
  %v4310 = vsel %vm75, %v4305, %v4309
  %v4312 = vshrl.u32 %v4147, 16
  %v4314 = vrot.slane %v4312, 4
  %v4315 = vshll.u32 %v4147, 16
  %v4317 = vrot.slane %v4315, 5
  %v4318 = vor.u32 %v4314, %v4317
  %v4319 = vrot.slane %v4318, 4
  %v4321 = vshll.u32 %v4148, 16
  %v4323 = vrot.slane %v4321, 5
  %v4324 = vsel %vm75, %v4319, %v4323
  %v4326 = vshrl.u32 %v4149, 16
  %v4328 = vrot.slane %v4326, 4
  %v4329 = vshll.u32 %v4149, 16
  %v4331 = vrot.slane %v4329, 5
  %v4332 = vor.u32 %v4328, %v4331
  %v4333 = vrot.slane %v4332, 4
  %v4335 = vshll.u32 %v4150, 16
  %v4337 = vrot.slane %v4335, 5
  %v4338 = vsel %vm75, %v4333, %v4337
  %v4340 = vshrl.u32 %v4151, 16
  %v4342 = vrot.slane %v4340, 4
  %v4343 = vshll.u32 %v4151, 16
  %v4345 = vrot.slane %v4343, 5
  %v4346 = vor.u32 %v4342, %v4345
  %v4347 = vrot.slane %v4346, 4
  %v4349 = vshll.u32 %v4152, 16
  %v4351 = vrot.slane %v4349, 5
  %v4352 = vsel %vm75, %v4347, %v4351
  %v4354 = vshrl.u32 %v4153, 16
  %v4356 = vrot.slane %v4354, 4
  %v4357 = vshll.u32 %v4153, 16
  %v4359 = vrot.slane %v4357, 5
  %v4360 = vor.u32 %v4356, %v4359
  %v4361 = vrot.slane %v4360, 4
  %v4363 = vshll.u32 %v4154, 16
  %v4365 = vrot.slane %v4363, 5
  %v4366 = vsel %vm75, %v4361, %v4365
  %v4368 = vshrl.u32 %v4155, 16
  %v4370 = vrot.slane %v4368, 4
  %v4371 = vshll.u32 %v4155, 16
  %v4373 = vrot.slane %v4371, 5
  %v4374 = vor.u32 %v4370, %v4373
  %v4375 = vrot.slane %v4374, 4
  %v4377 = vshll.u32 %v4156, 16
  %v4379 = vrot.slane %v4377, 5
  %v4380 = vsel %vm75, %v4375, %v4379
  %s4381 = scalar_lea.vmem %s4, 160
  %v4382 = vld [vmem:[%s4381] sm:$0xf]
  %v4383 = vld [vmem:[%s4381 + $0x4] sm:$0xf]
  %v4384 = vld [vmem:[%s4381 + $0x8] sm:$0xf]
  %v4385 = vld [vmem:[%s4381 + $0xc] sm:$0xf]
  %v4386 = vld [vmem:[%s4381 + $0x10] sm:$0xf]
  %v4387 = vld [vmem:[%s4381 + $0x14] sm:$0xf]
  %v4388 = vld [vmem:[%s4381 + $0x18] sm:$0xf]
  %v4389 = vld [vmem:[%s4381 + $0x1c] sm:$0xf]
  %v4390 = vunpack.c.l.b16 %v4170
  %v4391 = vunpack.c.l.b16 %v4184
  %v4392 = vunpack.c.l.b16 %v4198
  %v4393 = vunpack.c.l.b16 %v4212
  %v4394 = vunpack.c.l.b16 %v4226
  %v4395 = vunpack.c.l.b16 %v4240
  %v4396 = vunpack.c.l.b16 %v4254
  %v4397 = vunpack.c.l.b16 %v4268
  %v4398 = vunpack.c.l.b16 %v4282
  %v4399 = vunpack.c.l.b16 %v4296
  %v4400 = vunpack.c.l.b16 %v4310
  %v4401 = vunpack.c.l.b16 %v4324
  %v4402 = vunpack.c.l.b16 %v4338
  %v4403 = vunpack.c.l.b16 %v4352
  %v4404 = vunpack.c.l.b16 %v4366
  %v4405 = vunpack.c.l.b16 %v4380
  %v4406 = vpack.c.b16 %v4391, %v4390
  %v4407 = vpack.c.b16 %v4393, %v4392
  %v4408 = vpack.c.b16 %v4395, %v4394
  %v4409 = vpack.c.b16 %v4397, %v4396
  %v4410 = vpack.c.b16 %v4399, %v4398
  %v4411 = vpack.c.b16 %v4401, %v4400
  %v4412 = vpack.c.b16 %v4403, %v4402
  %v4413 = vpack.c.b16 %v4405, %v4404
  %v4422 = vunpack.c.l.b16 %v4382
  %v4423 = vunpack.c.l.b16 %v4383
  %v4424 = vunpack.c.l.b16 %v4384
  %v4425 = vunpack.c.l.b16 %v4385
  %v4426 = vunpack.c.l.b16 %v4386
  %v4427 = vunpack.c.l.b16 %v4387
  %v4428 = vunpack.c.l.b16 %v4388
  %v4429 = vunpack.c.l.b16 %v4389
  %v4430 = vpack.c.b16 %v4423, %v4422
  %v4431 = vpack.c.b16 %v4425, %v4424
  %v4432 = vpack.c.b16 %v4427, %v4426
  %v4433 = vpack.c.b16 %v4429, %v4428
  %v4439 = vsel %vm357, %v4406, 0
  %v4442 = vsel %vm357, %v4407, 0
  %v4445 = vsel %vm357, %v4408, 0
  %v4448 = vsel %vm357, %v4409, 0
  %v4451 = vsel %vm357, %v4410, 0
  %v4454 = vsel %vm357, %v4411, 0
  %v4457 = vsel %vm357, %v4412, 0
  %v4460 = vsel %vm357, %v4413, 0
  %4462 = vmatpush.bf16.msra.mxu0 0
  %4463 = vmatpush.bf16.msra.mxu0 0
  %4464 = vmatpush.bf16.msra.mxu0 0
  %4465 = vmatpush.bf16.msra.mxu0 0
  %4466 = vmatpush.bf16.msra.mxu0 %v4433
  %4467 = vmatpush.bf16.msra.mxu0 %v4432
  %4468 = vmatpush.bf16.msra.mxu0 %v4431
  %4469 = vmatpush.bf16.msra.mxu0 %v4430
  %4470 = vmatmul.bf16.gmra.mxu0 %v4439
  %v4471 = vpop.f32.mrf.mxu0
  %v4472 = vadd.f32 0.0, %v4471
  %v4473 = vpop.f32.mrf.mxu0
  %v4474 = vadd.f32 0.0, %v4473
  %4475 = vmatmul.bf16.gmra.mxu0 %v4442
  %v4476 = vpop.f32.mrf.mxu0
  %v4477 = vadd.f32 0.0, %v4476
  %v4478 = vpop.f32.mrf.mxu0
  %v4479 = vadd.f32 0.0, %v4478
  %4480 = vmatmul.bf16.gmra.mxu0 %v4445
  %v4481 = vpop.f32.mrf.mxu0
  %v4482 = vadd.f32 0.0, %v4481
  %v4483 = vpop.f32.mrf.mxu0
  %v4484 = vadd.f32 0.0, %v4483
  %4485 = vmatmul.bf16.gmra.mxu0 %v4448
  %v4486 = vpop.f32.mrf.mxu0
  %v4487 = vadd.f32 0.0, %v4486
  %v4488 = vpop.f32.mrf.mxu0
  %v4489 = vadd.f32 0.0, %v4488
  %4490 = vmatmul.bf16.gmra.mxu0 %v4451
  %v4491 = vpop.f32.mrf.mxu0
  %v4492 = vadd.f32 0.0, %v4491
  %v4493 = vpop.f32.mrf.mxu0
  %v4494 = vadd.f32 0.0, %v4493
  %4495 = vmatmul.bf16.gmra.mxu0 %v4454
  %v4496 = vpop.f32.mrf.mxu0
  %v4497 = vadd.f32 0.0, %v4496
  %v4498 = vpop.f32.mrf.mxu0
  %v4499 = vadd.f32 0.0, %v4498
  %4500 = vmatmul.bf16.gmra.mxu0 %v4457
  %v4501 = vpop.f32.mrf.mxu0
  %v4502 = vadd.f32 0.0, %v4501
  %v4503 = vpop.f32.mrf.mxu0
  %v4504 = vadd.f32 0.0, %v4503
  %4505 = vmatmul.bf16.gmra.mxu0 %v4460
  %v4506 = vpop.f32.mrf.mxu0
  %v4507 = vadd.f32 0.0, %v4506
  %v4508 = vpop.f32.mrf.mxu0
  %v4509 = vadd.f32 0.0, %v4508
  %4510 = vdwg.mxu0
  %v4511 = vadd.f32 %v4109, %v4472
  %v4512 = vadd.f32 %v4110, %v4474
  %v4513 = vadd.f32 %v4111, %v4477
  %v4514 = vadd.f32 %v4112, %v4479
  %v4515 = vadd.f32 %v4113, %v4482
  %v4516 = vadd.f32 %v4114, %v4484
  %v4517 = vadd.f32 %v4115, %v4487
  %v4518 = vadd.f32 %v4116, %v4489
  %v4519 = vadd.f32 %v4117, %v4492
  %v4520 = vadd.f32 %v4118, %v4494
  %v4521 = vadd.f32 %v4119, %v4497
  %v4522 = vadd.f32 %v4120, %v4499
  %v4523 = vadd.f32 %v4121, %v4502
  %v4524 = vadd.f32 %v4122, %v4504
  %v4525 = vadd.f32 %v4123, %v4507
  %v4526 = vadd.f32 %v4124, %v4509
  %s4527 = scalar_lea.vmem [#allocation2], 24
  %v4528 = vld [vmem:[%s4527] sm:$0x8]
  %v4529 = vld [vmem:[%s4527 + $0x4] sm:$0xf]
  %v4530 = vld [vmem:[%s4527 + $0xc] sm:$0x8]
  %v4531 = vld [vmem:[%s4527 + $0x10] sm:$0xf]
  %v4532 = vld [vmem:[%s4527 + $0x18] sm:$0x8]
  %v4533 = vld [vmem:[%s4527 + $0x1c] sm:$0xf]
  %v4534 = vld [vmem:[%s4527 + $0x24] sm:$0x8]
  %v4535 = vld [vmem:[%s4527 + $0x28] sm:$0xf]
  %v4536 = vld [vmem:[%s4527 + $0x30] sm:$0x8]
  %v4537 = vld [vmem:[%s4527 + $0x34] sm:$0xf]
  %v4538 = vld [vmem:[%s4527 + $0x3c] sm:$0x8]
  %v4539 = vld [vmem:[%s4527 + $0x40] sm:$0xf]
  %v4540 = vld [vmem:[%s4527 + $0x48] sm:$0x8]
  %v4541 = vld [vmem:[%s4527 + $0x4c] sm:$0xf]
  %v4542 = vld [vmem:[%s4527 + $0x54] sm:$0x8]
  %v4543 = vld [vmem:[%s4527 + $0x58] sm:$0xf]
  %v4544 = vld [vmem:[%s4527 + $0x78] sm:$0x8]
  %v4545 = vld [vmem:[%s4527 + $0x7c] sm:$0xf]
  %v4546 = vld [vmem:[%s4527 + $0x84] sm:$0x8]
  %v4547 = vld [vmem:[%s4527 + $0x88] sm:$0xf]
  %v4548 = vld [vmem:[%s4527 + $0x90] sm:$0x8]
  %v4549 = vld [vmem:[%s4527 + $0x94] sm:$0xf]
  %v4550 = vld [vmem:[%s4527 + $0x9c] sm:$0x8]
  %v4551 = vld [vmem:[%s4527 + $0xa0] sm:$0xf]
  %v4552 = vld [vmem:[%s4527 + $0xa8] sm:$0x8]
  %v4553 = vld [vmem:[%s4527 + $0xac] sm:$0xf]
  %v4554 = vld [vmem:[%s4527 + $0xb4] sm:$0x8]
  %v4555 = vld [vmem:[%s4527 + $0xb8] sm:$0xf]
  %v4556 = vld [vmem:[%s4527 + $0xc0] sm:$0x8]
  %v4557 = vld [vmem:[%s4527 + $0xc4] sm:$0xf]
  %v4558 = vld [vmem:[%s4527 + $0xcc] sm:$0x8]
  %v4559 = vld [vmem:[%s4527 + $0xd0] sm:$0xf]
  %v4561 = vshrl.u32 %v4528, 16
  %v4563 = vrot.slane %v4561, 7
  %v4564 = vrot.slane %v4563, 4
  %v4566 = vshrl.u32 %v4529, 16
  %v4568 = vrot.slane %v4566, 7
  %v4569 = vshll.u32 %v4529, 16
  %v4571 = vor.u32 %v4568, %v4569
  %v4572 = vsel %vm2691, %v4564, %v4571
  %v4574 = vshrl.u32 %v4530, 16
  %v4576 = vrot.slane %v4574, 7
  %v4577 = vrot.slane %v4576, 4
  %v4579 = vshrl.u32 %v4531, 16
  %v4581 = vrot.slane %v4579, 7
  %v4582 = vshll.u32 %v4531, 16
  %v4584 = vor.u32 %v4581, %v4582
  %v4585 = vsel %vm2691, %v4577, %v4584
  %v4587 = vshrl.u32 %v4532, 16
  %v4589 = vrot.slane %v4587, 7
  %v4590 = vrot.slane %v4589, 4
  %v4592 = vshrl.u32 %v4533, 16
  %v4594 = vrot.slane %v4592, 7
  %v4595 = vshll.u32 %v4533, 16
  %v4597 = vor.u32 %v4594, %v4595
  %v4598 = vsel %vm2691, %v4590, %v4597
  %v4600 = vshrl.u32 %v4534, 16
  %v4602 = vrot.slane %v4600, 7
  %v4603 = vrot.slane %v4602, 4
  %v4605 = vshrl.u32 %v4535, 16
  %v4607 = vrot.slane %v4605, 7
  %v4608 = vshll.u32 %v4535, 16
  %v4610 = vor.u32 %v4607, %v4608
  %v4611 = vsel %vm2691, %v4603, %v4610
  %v4613 = vshrl.u32 %v4536, 16
  %v4615 = vrot.slane %v4613, 7
  %v4616 = vrot.slane %v4615, 4
  %v4618 = vshrl.u32 %v4537, 16
  %v4620 = vrot.slane %v4618, 7
  %v4621 = vshll.u32 %v4537, 16
  %v4623 = vor.u32 %v4620, %v4621
  %v4624 = vsel %vm2691, %v4616, %v4623
  %v4626 = vshrl.u32 %v4538, 16
  %v4628 = vrot.slane %v4626, 7
  %v4629 = vrot.slane %v4628, 4
  %v4631 = vshrl.u32 %v4539, 16
  %v4633 = vrot.slane %v4631, 7
  %v4634 = vshll.u32 %v4539, 16
  %v4636 = vor.u32 %v4633, %v4634
  %v4637 = vsel %vm2691, %v4629, %v4636
  %v4639 = vshrl.u32 %v4540, 16
  %v4641 = vrot.slane %v4639, 7
  %v4642 = vrot.slane %v4641, 4
  %v4644 = vshrl.u32 %v4541, 16
  %v4646 = vrot.slane %v4644, 7
  %v4647 = vshll.u32 %v4541, 16
  %v4649 = vor.u32 %v4646, %v4647
  %v4650 = vsel %vm2691, %v4642, %v4649
  %v4652 = vshrl.u32 %v4542, 16
  %v4654 = vrot.slane %v4652, 7
  %v4655 = vrot.slane %v4654, 4
  %v4657 = vshrl.u32 %v4543, 16
  %v4659 = vrot.slane %v4657, 7
  %v4660 = vshll.u32 %v4543, 16
  %v4662 = vor.u32 %v4659, %v4660
  %v4663 = vsel %vm2691, %v4655, %v4662
  %v4665 = vshrl.u32 %v4544, 16
  %v4667 = vrot.slane %v4665, 7
  %v4668 = vrot.slane %v4667, 4
  %v4670 = vshrl.u32 %v4545, 16
  %v4672 = vrot.slane %v4670, 7
  %v4673 = vshll.u32 %v4545, 16
  %v4675 = vor.u32 %v4672, %v4673
  %v4676 = vsel %vm2691, %v4668, %v4675
  %v4678 = vshrl.u32 %v4546, 16
  %v4680 = vrot.slane %v4678, 7
  %v4681 = vrot.slane %v4680, 4
  %v4683 = vshrl.u32 %v4547, 16
  %v4685 = vrot.slane %v4683, 7
  %v4686 = vshll.u32 %v4547, 16
  %v4688 = vor.u32 %v4685, %v4686
  %v4689 = vsel %vm2691, %v4681, %v4688
  %v4691 = vshrl.u32 %v4548, 16
  %v4693 = vrot.slane %v4691, 7
  %v4694 = vrot.slane %v4693, 4
  %v4696 = vshrl.u32 %v4549, 16
  %v4698 = vrot.slane %v4696, 7
  %v4699 = vshll.u32 %v4549, 16
  %v4701 = vor.u32 %v4698, %v4699
  %v4702 = vsel %vm2691, %v4694, %v4701
  %v4704 = vshrl.u32 %v4550, 16
  %v4706 = vrot.slane %v4704, 7
  %v4707 = vrot.slane %v4706, 4
  %v4709 = vshrl.u32 %v4551, 16
  %v4711 = vrot.slane %v4709, 7
  %v4712 = vshll.u32 %v4551, 16
  %v4714 = vor.u32 %v4711, %v4712
  %v4715 = vsel %vm2691, %v4707, %v4714
  %v4717 = vshrl.u32 %v4552, 16
  %v4719 = vrot.slane %v4717, 7
  %v4720 = vrot.slane %v4719, 4
  %v4722 = vshrl.u32 %v4553, 16
  %v4724 = vrot.slane %v4722, 7
  %v4725 = vshll.u32 %v4553, 16
  %v4727 = vor.u32 %v4724, %v4725
  %v4728 = vsel %vm2691, %v4720, %v4727
  %v4730 = vshrl.u32 %v4554, 16
  %v4732 = vrot.slane %v4730, 7
  %v4733 = vrot.slane %v4732, 4
  %v4735 = vshrl.u32 %v4555, 16
  %v4737 = vrot.slane %v4735, 7
  %v4738 = vshll.u32 %v4555, 16
  %v4740 = vor.u32 %v4737, %v4738
  %v4741 = vsel %vm2691, %v4733, %v4740
  %v4743 = vshrl.u32 %v4556, 16
  %v4745 = vrot.slane %v4743, 7
  %v4746 = vrot.slane %v4745, 4
  %v4748 = vshrl.u32 %v4557, 16
  %v4750 = vrot.slane %v4748, 7
  %v4751 = vshll.u32 %v4557, 16
  %v4753 = vor.u32 %v4750, %v4751
  %v4754 = vsel %vm2691, %v4746, %v4753
  %v4756 = vshrl.u32 %v4558, 16
  %v4758 = vrot.slane %v4756, 7
  %v4759 = vrot.slane %v4758, 4
  %v4761 = vshrl.u32 %v4559, 16
  %v4763 = vrot.slane %v4761, 7
  %v4764 = vshll.u32 %v4559, 16
  %v4766 = vor.u32 %v4763, %v4764
  %v4767 = vsel %vm2691, %v4759, %v4766
  %s4768 = scalar_lea.vmem %s4, 192
  %v4769 = vld [vmem:[%s4768] sm:$0xf]
  %v4770 = vld [vmem:[%s4768 + $0x4] sm:$0xf]
  %v4771 = vld [vmem:[%s4768 + $0x8] sm:$0xf]
  %v4772 = vld [vmem:[%s4768 + $0xc] sm:$0xf]
  %v4773 = vld [vmem:[%s4768 + $0x10] sm:$0xf]
  %v4774 = vld [vmem:[%s4768 + $0x14] sm:$0xf]
  %v4775 = vld [vmem:[%s4768 + $0x18] sm:$0xf]
  %v4776 = vld [vmem:[%s4768 + $0x1c] sm:$0xf]
  %v4777 = vunpack.c.l.b16 %v4572
  %v4778 = vunpack.c.l.b16 %v4585
  %v4779 = vunpack.c.l.b16 %v4598
  %v4780 = vunpack.c.l.b16 %v4611
  %v4781 = vunpack.c.l.b16 %v4624
  %v4782 = vunpack.c.l.b16 %v4637
  %v4783 = vunpack.c.l.b16 %v4650
  %v4784 = vunpack.c.l.b16 %v4663
  %v4785 = vunpack.c.l.b16 %v4676
  %v4786 = vunpack.c.l.b16 %v4689
  %v4787 = vunpack.c.l.b16 %v4702
  %v4788 = vunpack.c.l.b16 %v4715
  %v4789 = vunpack.c.l.b16 %v4728
  %v4790 = vunpack.c.l.b16 %v4741
  %v4791 = vunpack.c.l.b16 %v4754
  %v4792 = vunpack.c.l.b16 %v4767
  %v4793 = vpack.c.b16 %v4778, %v4777
  %v4794 = vpack.c.b16 %v4780, %v4779
  %v4795 = vpack.c.b16 %v4782, %v4781
  %v4796 = vpack.c.b16 %v4784, %v4783
  %v4797 = vpack.c.b16 %v4786, %v4785
  %v4798 = vpack.c.b16 %v4788, %v4787
  %v4799 = vpack.c.b16 %v4790, %v4789
  %v4800 = vpack.c.b16 %v4792, %v4791
  %v4809 = vunpack.c.l.b16 %v4769
  %v4810 = vunpack.c.l.b16 %v4770
  %v4811 = vunpack.c.l.b16 %v4771
  %v4812 = vunpack.c.l.b16 %v4772
  %v4813 = vunpack.c.l.b16 %v4773
  %v4814 = vunpack.c.l.b16 %v4774
  %v4815 = vunpack.c.l.b16 %v4775
  %v4816 = vunpack.c.l.b16 %v4776
  %v4817 = vpack.c.b16 %v4810, %v4809
  %v4818 = vpack.c.b16 %v4812, %v4811
  %v4819 = vpack.c.b16 %v4814, %v4813
  %v4820 = vpack.c.b16 %v4816, %v4815
  %v4826 = vsel %vm357, %v4793, 0
  %v4829 = vsel %vm357, %v4794, 0
  %v4832 = vsel %vm357, %v4795, 0
  %v4835 = vsel %vm357, %v4796, 0
  %v4838 = vsel %vm357, %v4797, 0
  %v4841 = vsel %vm357, %v4798, 0
  %v4844 = vsel %vm357, %v4799, 0
  %v4847 = vsel %vm357, %v4800, 0
  %4849 = vmatpush.bf16.msra.mxu0 0
  %4850 = vmatpush.bf16.msra.mxu0 0
  %4851 = vmatpush.bf16.msra.mxu0 0
  %4852 = vmatpush.bf16.msra.mxu0 0
  %4853 = vmatpush.bf16.msra.mxu0 %v4820
  %4854 = vmatpush.bf16.msra.mxu0 %v4819
  %4855 = vmatpush.bf16.msra.mxu0 %v4818
  %4856 = vmatpush.bf16.msra.mxu0 %v4817
  %4857 = vmatmul.bf16.gmra.mxu0 %v4826
  %v4858 = vpop.f32.mrf.mxu0
  %v4859 = vadd.f32 0.0, %v4858
  %v4860 = vpop.f32.mrf.mxu0
  %v4861 = vadd.f32 0.0, %v4860
  %4862 = vmatmul.bf16.gmra.mxu0 %v4829
  %v4863 = vpop.f32.mrf.mxu0
  %v4864 = vadd.f32 0.0, %v4863
  %v4865 = vpop.f32.mrf.mxu0
  %v4866 = vadd.f32 0.0, %v4865
  %4867 = vmatmul.bf16.gmra.mxu0 %v4832
  %v4868 = vpop.f32.mrf.mxu0
  %v4869 = vadd.f32 0.0, %v4868
  %v4870 = vpop.f32.mrf.mxu0
  %v4871 = vadd.f32 0.0, %v4870
  %4872 = vmatmul.bf16.gmra.mxu0 %v4835
  %v4873 = vpop.f32.mrf.mxu0
  %v4874 = vadd.f32 0.0, %v4873
  %v4875 = vpop.f32.mrf.mxu0
  %v4876 = vadd.f32 0.0, %v4875
  %4877 = vmatmul.bf16.gmra.mxu0 %v4838
  %v4878 = vpop.f32.mrf.mxu0
  %v4879 = vadd.f32 0.0, %v4878
  %v4880 = vpop.f32.mrf.mxu0
  %v4881 = vadd.f32 0.0, %v4880
  %4882 = vmatmul.bf16.gmra.mxu0 %v4841
  %v4883 = vpop.f32.mrf.mxu0
  %v4884 = vadd.f32 0.0, %v4883
  %v4885 = vpop.f32.mrf.mxu0
  %v4886 = vadd.f32 0.0, %v4885
  %4887 = vmatmul.bf16.gmra.mxu0 %v4844
  %v4888 = vpop.f32.mrf.mxu0
  %v4889 = vadd.f32 0.0, %v4888
  %v4890 = vpop.f32.mrf.mxu0
  %v4891 = vadd.f32 0.0, %v4890
  %4892 = vmatmul.bf16.gmra.mxu0 %v4847
  %v4893 = vpop.f32.mrf.mxu0
  %v4894 = vadd.f32 0.0, %v4893
  %v4895 = vpop.f32.mrf.mxu0
  %v4896 = vadd.f32 0.0, %v4895
  %4897 = vdwg.mxu0
  %v4898 = vadd.f32 %v4511, %v4859
  %v4899 = vadd.f32 %v4512, %v4861
  %v4900 = vadd.f32 %v4513, %v4864
  %v4901 = vadd.f32 %v4514, %v4866
  %v4902 = vadd.f32 %v4515, %v4869
  %v4903 = vadd.f32 %v4516, %v4871
  %v4904 = vadd.f32 %v4517, %v4874
  %v4905 = vadd.f32 %v4518, %v4876
  %v4906 = vadd.f32 %v4519, %v4879
  %v4907 = vadd.f32 %v4520, %v4881
  %v4908 = vadd.f32 %v4521, %v4884
  %v4909 = vadd.f32 %v4522, %v4886
  %v4910 = vadd.f32 %v4523, %v4889
  %v4911 = vadd.f32 %v4524, %v4891
  %v4912 = vadd.f32 %v4525, %v4894
  %v4913 = vadd.f32 %v4526, %v4896
  %s4914 = scalar_lea.vmem %s4, 224
  %v4915 = vld [vmem:[%s4914] sm:$0xf]
  %v4916 = vld [vmem:[%s4914 + $0x4] sm:$0xf]
  %v4917 = vld [vmem:[%s4914 + $0x8] sm:$0xf]
  %v4918 = vld [vmem:[%s4914 + $0xc] sm:$0xf]
  %v4919 = vld [vmem:[%s4914 + $0x10] sm:$0xf]
  %v4920 = vld [vmem:[%s4914 + $0x14] sm:$0xf]
  %v4921 = vld [vmem:[%s4914 + $0x18] sm:$0xf]
  %v4922 = vld [vmem:[%s4914 + $0x1c] sm:$0xf]
  %v4939 = vunpack.c.l.b16 %v4529
  %v4940 = vunpack.c.l.b16 %v4531
  %v4941 = vunpack.c.l.b16 %v4533
  %v4942 = vunpack.c.l.b16 %v4535
  %v4943 = vunpack.c.l.b16 %v4537
  %v4944 = vunpack.c.l.b16 %v4539
  %v4945 = vunpack.c.l.b16 %v4541
  %v4946 = vunpack.c.l.b16 %v4543
  %v4947 = vunpack.c.l.b16 %v4545
  %v4948 = vunpack.c.l.b16 %v4547
  %v4949 = vunpack.c.l.b16 %v4549
  %v4950 = vunpack.c.l.b16 %v4551
  %v4951 = vunpack.c.l.b16 %v4553
  %v4952 = vunpack.c.l.b16 %v4555
  %v4953 = vunpack.c.l.b16 %v4557
  %v4954 = vunpack.c.l.b16 %v4559
  %v4955 = vpack.c.b16 %v4940, %v4939
  %v4956 = vpack.c.b16 %v4942, %v4941
  %v4957 = vpack.c.b16 %v4944, %v4943
  %v4958 = vpack.c.b16 %v4946, %v4945
  %v4959 = vpack.c.b16 %v4948, %v4947
  %v4960 = vpack.c.b16 %v4950, %v4949
  %v4961 = vpack.c.b16 %v4952, %v4951
  %v4962 = vpack.c.b16 %v4954, %v4953
  %v4971 = vunpack.c.l.b16 %v4915
  %v4972 = vunpack.c.l.b16 %v4916
  %v4973 = vunpack.c.l.b16 %v4917
  %v4974 = vunpack.c.l.b16 %v4918
  %v4975 = vunpack.c.l.b16 %v4919
  %v4976 = vunpack.c.l.b16 %v4920
  %v4977 = vunpack.c.l.b16 %v4921
  %v4978 = vunpack.c.l.b16 %v4922
  %v4979 = vpack.c.b16 %v4972, %v4971
  %v4980 = vpack.c.b16 %v4974, %v4973
  %v4981 = vpack.c.b16 %v4976, %v4975
  %v4982 = vpack.c.b16 %v4978, %v4977
  %v4988 = vsel %vm357, %v4955, 0
  %v4991 = vsel %vm357, %v4956, 0
  %v4994 = vsel %vm357, %v4957, 0
  %v4997 = vsel %vm357, %v4958, 0
  %v5000 = vsel %vm357, %v4959, 0
  %v5003 = vsel %vm357, %v4960, 0
  %v5006 = vsel %vm357, %v4961, 0
  %v5009 = vsel %vm357, %v4962, 0
  %5011 = vmatpush.bf16.msra.mxu0 0
  %5012 = vmatpush.bf16.msra.mxu0 0
  %5013 = vmatpush.bf16.msra.mxu0 0
  %5014 = vmatpush.bf16.msra.mxu0 0
  %5015 = vmatpush.bf16.msra.mxu0 %v4982
  %5016 = vmatpush.bf16.msra.mxu0 %v4981
  %5017 = vmatpush.bf16.msra.mxu0 %v4980
  %5018 = vmatpush.bf16.msra.mxu0 %v4979
  %5019 = vmatmul.bf16.gmra.mxu0 %v4988
  %v5020 = vpop.f32.mrf.mxu0
  %v5021 = vadd.f32 0.0, %v5020
  %v5022 = vpop.f32.mrf.mxu0
  %v5023 = vadd.f32 0.0, %v5022
  %5024 = vmatmul.bf16.gmra.mxu0 %v4991
  %v5025 = vpop.f32.mrf.mxu0
  %v5026 = vadd.f32 0.0, %v5025
  %v5027 = vpop.f32.mrf.mxu0
  %v5028 = vadd.f32 0.0, %v5027
  %5029 = vmatmul.bf16.gmra.mxu0 %v4994
  %v5030 = vpop.f32.mrf.mxu0
  %v5031 = vadd.f32 0.0, %v5030
  %v5032 = vpop.f32.mrf.mxu0
  %v5033 = vadd.f32 0.0, %v5032
  %5034 = vmatmul.bf16.gmra.mxu0 %v4997
  %v5035 = vpop.f32.mrf.mxu0
  %v5036 = vadd.f32 0.0, %v5035
  %v5037 = vpop.f32.mrf.mxu0
  %v5038 = vadd.f32 0.0, %v5037
  %5039 = vmatmul.bf16.gmra.mxu0 %v5000
  %v5040 = vpop.f32.mrf.mxu0
  %v5041 = vadd.f32 0.0, %v5040
  %v5042 = vpop.f32.mrf.mxu0
  %v5043 = vadd.f32 0.0, %v5042
  %5044 = vmatmul.bf16.gmra.mxu0 %v5003
  %v5045 = vpop.f32.mrf.mxu0
  %v5046 = vadd.f32 0.0, %v5045
  %v5047 = vpop.f32.mrf.mxu0
  %v5048 = vadd.f32 0.0, %v5047
  %5049 = vmatmul.bf16.gmra.mxu0 %v5006
  %v5050 = vpop.f32.mrf.mxu0
  %v5051 = vadd.f32 0.0, %v5050
  %v5052 = vpop.f32.mrf.mxu0
  %v5053 = vadd.f32 0.0, %v5052
  %5054 = vmatmul.bf16.gmra.mxu0 %v5009
  %v5055 = vpop.f32.mrf.mxu0
  %v5056 = vadd.f32 0.0, %v5055
  %v5057 = vpop.f32.mrf.mxu0
  %v5058 = vadd.f32 0.0, %v5057
  %5059 = vdwg.mxu0
  %v5060 = vadd.f32 %v4898, %v5021
  %v5061 = vadd.f32 %v4899, %v5023
  %v5062 = vadd.f32 %v4900, %v5026
  %v5063 = vadd.f32 %v4901, %v5028
  %v5064 = vadd.f32 %v4902, %v5031
  %v5065 = vadd.f32 %v4903, %v5033
  %v5066 = vadd.f32 %v4904, %v5036
  %v5067 = vadd.f32 %v4905, %v5038
  %v5068 = vadd.f32 %v4906, %v5041
  %v5069 = vadd.f32 %v4907, %v5043
  %v5070 = vadd.f32 %v4908, %v5046
  %v5071 = vadd.f32 %v4909, %v5048
  %v5072 = vadd.f32 %v4910, %v5051
  %v5073 = vadd.f32 %v4911, %v5053
  %v5074 = vadd.f32 %v4912, %v5056
  %v5075 = vadd.f32 %v4913, %v5058
  %v5076 = vld [vmem:[%s4527 + $0x4] sm:$0xf]
  %v5077 = vld [vmem:[%s4527 + $0x8] sm:$0x1]
  %v5078 = vld [vmem:[%s4527 + $0x10] sm:$0xf]
  %v5079 = vld [vmem:[%s4527 + $0x14] sm:$0x1]
  %v5080 = vld [vmem:[%s4527 + $0x1c] sm:$0xf]
  %v5081 = vld [vmem:[%s4527 + $0x20] sm:$0x1]
  %v5082 = vld [vmem:[%s4527 + $0x28] sm:$0xf]
  %v5083 = vld [vmem:[%s4527 + $0x2c] sm:$0x1]
  %v5084 = vld [vmem:[%s4527 + $0x34] sm:$0xf]
  %v5085 = vld [vmem:[%s4527 + $0x38] sm:$0x1]
  %v5086 = vld [vmem:[%s4527 + $0x40] sm:$0xf]
  %v5087 = vld [vmem:[%s4527 + $0x44] sm:$0x1]
  %v5088 = vld [vmem:[%s4527 + $0x4c] sm:$0xf]
  %v5089 = vld [vmem:[%s4527 + $0x50] sm:$0x1]
  %v5090 = vld [vmem:[%s4527 + $0x58] sm:$0xf]
  %v5091 = vld [vmem:[%s4527 + $0x5c] sm:$0x1]
  %v5092 = vld [vmem:[%s4527 + $0x7c] sm:$0xf]
  %v5093 = vld [vmem:[%s4527 + $0x80] sm:$0x1]
  %v5094 = vld [vmem:[%s4527 + $0x88] sm:$0xf]
  %v5095 = vld [vmem:[%s4527 + $0x8c] sm:$0x1]
  %v5096 = vld [vmem:[%s4527 + $0x94] sm:$0xf]
  %v5097 = vld [vmem:[%s4527 + $0x98] sm:$0x1]
  %v5098 = vld [vmem:[%s4527 + $0xa0] sm:$0xf]
  %v5099 = vld [vmem:[%s4527 + $0xa4] sm:$0x1]
  %v5100 = vld [vmem:[%s4527 + $0xac] sm:$0xf]
  %v5101 = vld [vmem:[%s4527 + $0xb0] sm:$0x1]
  %v5102 = vld [vmem:[%s4527 + $0xb8] sm:$0xf]
  %v5103 = vld [vmem:[%s4527 + $0xbc] sm:$0x1]
  %v5104 = vld [vmem:[%s4527 + $0xc4] sm:$0xf]
  %v5105 = vld [vmem:[%s4527 + $0xc8] sm:$0x1]
  %v5106 = vld [vmem:[%s4527 + $0xd0] sm:$0xf]
  %v5107 = vld [vmem:[%s4527 + $0xd4] sm:$0x1]
  %v5109 = vshrl.u32 %v5076, 16
  %v5111 = vrot.slane %v5109, 4
  %v5112 = vshll.u32 %v5076, 16
  %v5114 = vrot.slane %v5112, 5
  %v5115 = vor.u32 %v5111, %v5114
  %v5116 = vrot.slane %v5115, 4
  %v5118 = vshll.u32 %v5077, 16
  %v5120 = vrot.slane %v5118, 5
  %v5121 = vsel %vm75, %v5116, %v5120
  %v5123 = vshrl.u32 %v5078, 16
  %v5125 = vrot.slane %v5123, 4
  %v5126 = vshll.u32 %v5078, 16
  %v5128 = vrot.slane %v5126, 5
  %v5129 = vor.u32 %v5125, %v5128
  %v5130 = vrot.slane %v5129, 4
  %v5132 = vshll.u32 %v5079, 16
  %v5134 = vrot.slane %v5132, 5
  %v5135 = vsel %vm75, %v5130, %v5134
  %v5137 = vshrl.u32 %v5080, 16
  %v5139 = vrot.slane %v5137, 4
  %v5140 = vshll.u32 %v5080, 16
  %v5142 = vrot.slane %v5140, 5
  %v5143 = vor.u32 %v5139, %v5142
  %v5144 = vrot.slane %v5143, 4
  %v5146 = vshll.u32 %v5081, 16
  %v5148 = vrot.slane %v5146, 5
  %v5149 = vsel %vm75, %v5144, %v5148
  %v5151 = vshrl.u32 %v5082, 16
  %v5153 = vrot.slane %v5151, 4
  %v5154 = vshll.u32 %v5082, 16
  %v5156 = vrot.slane %v5154, 5
  %v5157 = vor.u32 %v5153, %v5156
  %v5158 = vrot.slane %v5157, 4
  %v5160 = vshll.u32 %v5083, 16
  %v5162 = vrot.slane %v5160, 5
  %v5163 = vsel %vm75, %v5158, %v5162
  %v5165 = vshrl.u32 %v5084, 16
  %v5167 = vrot.slane %v5165, 4
  %v5168 = vshll.u32 %v5084, 16
  %v5170 = vrot.slane %v5168, 5
  %v5171 = vor.u32 %v5167, %v5170
  %v5172 = vrot.slane %v5171, 4
  %v5174 = vshll.u32 %v5085, 16
  %v5176 = vrot.slane %v5174, 5
  %v5177 = vsel %vm75, %v5172, %v5176
  %v5179 = vshrl.u32 %v5086, 16
  %v5181 = vrot.slane %v5179, 4
  %v5182 = vshll.u32 %v5086, 16
  %v5184 = vrot.slane %v5182, 5
  %v5185 = vor.u32 %v5181, %v5184
  %v5186 = vrot.slane %v5185, 4
  %v5188 = vshll.u32 %v5087, 16
  %v5190 = vrot.slane %v5188, 5
  %v5191 = vsel %vm75, %v5186, %v5190
  %v5193 = vshrl.u32 %v5088, 16
  %v5195 = vrot.slane %v5193, 4
  %v5196 = vshll.u32 %v5088, 16
  %v5198 = vrot.slane %v5196, 5
  %v5199 = vor.u32 %v5195, %v5198
  %v5200 = vrot.slane %v5199, 4
  %v5202 = vshll.u32 %v5089, 16
  %v5204 = vrot.slane %v5202, 5
  %v5205 = vsel %vm75, %v5200, %v5204
  %v5207 = vshrl.u32 %v5090, 16
  %v5209 = vrot.slane %v5207, 4
  %v5210 = vshll.u32 %v5090, 16
  %v5212 = vrot.slane %v5210, 5
  %v5213 = vor.u32 %v5209, %v5212
  %v5214 = vrot.slane %v5213, 4
  %v5216 = vshll.u32 %v5091, 16
  %v5218 = vrot.slane %v5216, 5
  %v5219 = vsel %vm75, %v5214, %v5218
  %v5221 = vshrl.u32 %v5092, 16
  %v5223 = vrot.slane %v5221, 4
  %v5224 = vshll.u32 %v5092, 16
  %v5226 = vrot.slane %v5224, 5
  %v5227 = vor.u32 %v5223, %v5226
  %v5228 = vrot.slane %v5227, 4
  %v5230 = vshll.u32 %v5093, 16
  %v5232 = vrot.slane %v5230, 5
  %v5233 = vsel %vm75, %v5228, %v5232
  %v5235 = vshrl.u32 %v5094, 16
  %v5237 = vrot.slane %v5235, 4
  %v5238 = vshll.u32 %v5094, 16
  %v5240 = vrot.slane %v5238, 5
  %v5241 = vor.u32 %v5237, %v5240
  %v5242 = vrot.slane %v5241, 4
  %v5244 = vshll.u32 %v5095, 16
  %v5246 = vrot.slane %v5244, 5
  %v5247 = vsel %vm75, %v5242, %v5246
  %v5249 = vshrl.u32 %v5096, 16
  %v5251 = vrot.slane %v5249, 4
  %v5252 = vshll.u32 %v5096, 16
  %v5254 = vrot.slane %v5252, 5
  %v5255 = vor.u32 %v5251, %v5254
  %v5256 = vrot.slane %v5255, 4
  %v5258 = vshll.u32 %v5097, 16
  %v5260 = vrot.slane %v5258, 5
  %v5261 = vsel %vm75, %v5256, %v5260
  %v5263 = vshrl.u32 %v5098, 16
  %v5265 = vrot.slane %v5263, 4
  %v5266 = vshll.u32 %v5098, 16
  %v5268 = vrot.slane %v5266, 5
  %v5269 = vor.u32 %v5265, %v5268
  %v5270 = vrot.slane %v5269, 4
  %v5272 = vshll.u32 %v5099, 16
  %v5274 = vrot.slane %v5272, 5
  %v5275 = vsel %vm75, %v5270, %v5274
  %v5277 = vshrl.u32 %v5100, 16
  %v5279 = vrot.slane %v5277, 4
  %v5280 = vshll.u32 %v5100, 16
  %v5282 = vrot.slane %v5280, 5
  %v5283 = vor.u32 %v5279, %v5282
  %v5284 = vrot.slane %v5283, 4
  %v5286 = vshll.u32 %v5101, 16
  %v5288 = vrot.slane %v5286, 5
  %v5289 = vsel %vm75, %v5284, %v5288
  %v5291 = vshrl.u32 %v5102, 16
  %v5293 = vrot.slane %v5291, 4
  %v5294 = vshll.u32 %v5102, 16
  %v5296 = vrot.slane %v5294, 5
  %v5297 = vor.u32 %v5293, %v5296
  %v5298 = vrot.slane %v5297, 4
  %v5300 = vshll.u32 %v5103, 16
  %v5302 = vrot.slane %v5300, 5
  %v5303 = vsel %vm75, %v5298, %v5302
  %v5305 = vshrl.u32 %v5104, 16
  %v5307 = vrot.slane %v5305, 4
  %v5308 = vshll.u32 %v5104, 16
  %v5310 = vrot.slane %v5308, 5
  %v5311 = vor.u32 %v5307, %v5310
  %v5312 = vrot.slane %v5311, 4
  %v5314 = vshll.u32 %v5105, 16
  %v5316 = vrot.slane %v5314, 5
  %v5317 = vsel %vm75, %v5312, %v5316
  %v5319 = vshrl.u32 %v5106, 16
  %v5321 = vrot.slane %v5319, 4
  %v5322 = vshll.u32 %v5106, 16
  %v5324 = vrot.slane %v5322, 5
  %v5325 = vor.u32 %v5321, %v5324
  %v5326 = vrot.slane %v5325, 4
  %v5328 = vshll.u32 %v5107, 16
  %v5330 = vrot.slane %v5328, 5
  %v5331 = vsel %vm75, %v5326, %v5330
  %s5332 = scalar_lea.vmem %s4, 256
  %v5333 = vld [vmem:[%s5332] sm:$0xf]
  %v5334 = vld [vmem:[%s5332 + $0x4] sm:$0xf]
  %v5335 = vld [vmem:[%s5332 + $0x8] sm:$0xf]
  %v5336 = vld [vmem:[%s5332 + $0xc] sm:$0xf]
  %v5337 = vld [vmem:[%s5332 + $0x10] sm:$0xf]
  %v5338 = vld [vmem:[%s5332 + $0x14] sm:$0xf]
  %v5339 = vld [vmem:[%s5332 + $0x18] sm:$0xf]
  %v5340 = vld [vmem:[%s5332 + $0x1c] sm:$0xf]
  %v5341 = vunpack.c.l.b16 %v5121
  %v5342 = vunpack.c.l.b16 %v5135
  %v5343 = vunpack.c.l.b16 %v5149
  %v5344 = vunpack.c.l.b16 %v5163
  %v5345 = vunpack.c.l.b16 %v5177
  %v5346 = vunpack.c.l.b16 %v5191
  %v5347 = vunpack.c.l.b16 %v5205
  %v5348 = vunpack.c.l.b16 %v5219
  %v5349 = vunpack.c.l.b16 %v5233
  %v5350 = vunpack.c.l.b16 %v5247
  %v5351 = vunpack.c.l.b16 %v5261
  %v5352 = vunpack.c.l.b16 %v5275
  %v5353 = vunpack.c.l.b16 %v5289
  %v5354 = vunpack.c.l.b16 %v5303
  %v5355 = vunpack.c.l.b16 %v5317
  %v5356 = vunpack.c.l.b16 %v5331
  %v5357 = vpack.c.b16 %v5342, %v5341
  %v5358 = vpack.c.b16 %v5344, %v5343
  %v5359 = vpack.c.b16 %v5346, %v5345
  %v5360 = vpack.c.b16 %v5348, %v5347
  %v5361 = vpack.c.b16 %v5350, %v5349
  %v5362 = vpack.c.b16 %v5352, %v5351
  %v5363 = vpack.c.b16 %v5354, %v5353
  %v5364 = vpack.c.b16 %v5356, %v5355
  %v5373 = vunpack.c.l.b16 %v5333
  %v5374 = vunpack.c.l.b16 %v5334
  %v5375 = vunpack.c.l.b16 %v5335
  %v5376 = vunpack.c.l.b16 %v5336
  %v5377 = vunpack.c.l.b16 %v5337
  %v5378 = vunpack.c.l.b16 %v5338
  %v5379 = vunpack.c.l.b16 %v5339
  %v5380 = vunpack.c.l.b16 %v5340
  %v5381 = vpack.c.b16 %v5374, %v5373
  %v5382 = vpack.c.b16 %v5376, %v5375
  %v5383 = vpack.c.b16 %v5378, %v5377
  %v5384 = vpack.c.b16 %v5380, %v5379
  %v5390 = vsel %vm357, %v5357, 0
  %v5393 = vsel %vm357, %v5358, 0
  %v5396 = vsel %vm357, %v5359, 0
  %v5399 = vsel %vm357, %v5360, 0
  %v5402 = vsel %vm357, %v5361, 0
  %v5405 = vsel %vm357, %v5362, 0
  %v5408 = vsel %vm357, %v5363, 0
  %v5411 = vsel %vm357, %v5364, 0
  %5413 = vmatpush.bf16.msra.mxu0 0
  %5414 = vmatpush.bf16.msra.mxu0 0
  %5415 = vmatpush.bf16.msra.mxu0 0
  %5416 = vmatpush.bf16.msra.mxu0 0
  %5417 = vmatpush.bf16.msra.mxu0 %v5384
  %5418 = vmatpush.bf16.msra.mxu0 %v5383
  %5419 = vmatpush.bf16.msra.mxu0 %v5382
  %5420 = vmatpush.bf16.msra.mxu0 %v5381
  %5421 = vmatmul.bf16.gmra.mxu0 %v5390
  %v5422 = vpop.f32.mrf.mxu0
  %v5423 = vadd.f32 0.0, %v5422
  %v5424 = vpop.f32.mrf.mxu0
  %v5425 = vadd.f32 0.0, %v5424
  %5426 = vmatmul.bf16.gmra.mxu0 %v5393
  %v5427 = vpop.f32.mrf.mxu0
  %v5428 = vadd.f32 0.0, %v5427
  %v5429 = vpop.f32.mrf.mxu0
  %v5430 = vadd.f32 0.0, %v5429
  %5431 = vmatmul.bf16.gmra.mxu0 %v5396
  %v5432 = vpop.f32.mrf.mxu0
  %v5433 = vadd.f32 0.0, %v5432
  %v5434 = vpop.f32.mrf.mxu0
  %v5435 = vadd.f32 0.0, %v5434
  %5436 = vmatmul.bf16.gmra.mxu0 %v5399
  %v5437 = vpop.f32.mrf.mxu0
  %v5438 = vadd.f32 0.0, %v5437
  %v5439 = vpop.f32.mrf.mxu0
  %v5440 = vadd.f32 0.0, %v5439
  %5441 = vmatmul.bf16.gmra.mxu0 %v5402
  %v5442 = vpop.f32.mrf.mxu0
  %v5443 = vadd.f32 0.0, %v5442
  %v5444 = vpop.f32.mrf.mxu0
  %v5445 = vadd.f32 0.0, %v5444
  %5446 = vmatmul.bf16.gmra.mxu0 %v5405
  %v5447 = vpop.f32.mrf.mxu0
  %v5448 = vadd.f32 0.0, %v5447
  %v5449 = vpop.f32.mrf.mxu0
  %v5450 = vadd.f32 0.0, %v5449
  %5451 = vmatmul.bf16.gmra.mxu0 %v5408
  %v5452 = vpop.f32.mrf.mxu0
  %v5453 = vadd.f32 0.0, %v5452
  %v5454 = vpop.f32.mrf.mxu0
  %v5455 = vadd.f32 0.0, %v5454
  %5456 = vmatmul.bf16.gmra.mxu0 %v5411
  %v5457 = vpop.f32.mrf.mxu0
  %v5458 = vadd.f32 0.0, %v5457
  %v5459 = vpop.f32.mrf.mxu0
  %v5460 = vadd.f32 0.0, %v5459
  %5461 = vdwg.mxu0
  %v5462 = vadd.f32 %v5060, %v5423
  %v5463 = vadd.f32 %v5061, %v5425
  %v5464 = vadd.f32 %v5062, %v5428
  %v5465 = vadd.f32 %v5063, %v5430
  %v5466 = vadd.f32 %v5064, %v5433
  %v5467 = vadd.f32 %v5065, %v5435
  %v5468 = vadd.f32 %v5066, %v5438
  %v5469 = vadd.f32 %v5067, %v5440
  %v5470 = vadd.f32 %v5068, %v5443
  %v5471 = vadd.f32 %v5069, %v5445
  %v5472 = vadd.f32 %v5070, %v5448
  %v5473 = vadd.f32 %v5071, %v5450
  %v5474 = vadd.f32 %v5072, %v5453
  %v5475 = vadd.f32 %v5073, %v5455
  %v5476 = vadd.f32 %v5074, %v5458
  %v5477 = vadd.f32 %v5075, %v5460
  %v5478 = vld [vmem:[%s5] sm:$0x1]
  %v5480 = vperm.slane %v5478, 0
  %v5482 = vmul.f32 %v5462, %v5480
  %v5483 = vmul.f32 %v5463, %v5480
  %v5484 = vmul.f32 %v5464, %v5480
  %v5485 = vmul.f32 %v5465, %v5480
  %v5486 = vmul.f32 %v5466, %v5480
  %v5487 = vmul.f32 %v5467, %v5480
  %v5488 = vmul.f32 %v5468, %v5480
  %v5489 = vmul.f32 %v5469, %v5480
  %v5490 = vmul.f32 %v5470, %v5480
  %v5491 = vmul.f32 %v5471, %v5480
  %v5492 = vmul.f32 %v5472, %v5480
  %v5493 = vmul.f32 %v5473, %v5480
  %v5494 = vmul.f32 %v5474, %v5480
  %v5495 = vmul.f32 %v5475, %v5480
  %v5496 = vmul.f32 %v5476, %v5480
  %v5497 = vmul.f32 %v5477, %v5480
  %v5498 = vld [vmem:[%s6] sm:$0x1]
  %v5500 = vperm.slane %v5498, 0
  %v5502 = vadd.f32 %v5482, %v5500
  %v5503 = vadd.f32 %v5483, %v5500
  %v5504 = vadd.f32 %v5484, %v5500
  %v5505 = vadd.f32 %v5485, %v5500
  %v5506 = vadd.f32 %v5486, %v5500
  %v5507 = vadd.f32 %v5487, %v5500
  %v5508 = vadd.f32 %v5488, %v5500
  %v5509 = vadd.f32 %v5489, %v5500
  %v5510 = vadd.f32 %v5490, %v5500
  %v5511 = vadd.f32 %v5491, %v5500
  %v5512 = vadd.f32 %v5492, %v5500
  %v5513 = vadd.f32 %v5493, %v5500
  %v5514 = vadd.f32 %v5494, %v5500
  %v5515 = vadd.f32 %v5495, %v5500
  %v5516 = vadd.f32 %v5496, %v5500
  %v5517 = vadd.f32 %v5497, %v5500
  %v5518 = vmax.f32 %v5502, 0.0
  %v5519 = vmax.f32 %v5503, 0.0
  %v5520 = vmax.f32 %v5504, 0.0
  %v5521 = vmax.f32 %v5505, 0.0
  %v5522 = vmax.f32 %v5506, 0.0
  %v5523 = vmax.f32 %v5507, 0.0
  %v5524 = vmax.f32 %v5508, 0.0
  %v5525 = vmax.f32 %v5509, 0.0
  %v5526 = vmax.f32 %v5510, 0.0
  %v5527 = vmax.f32 %v5511, 0.0
  %v5528 = vmax.f32 %v5512, 0.0
  %v5529 = vmax.f32 %v5513, 0.0
  %v5530 = vmax.f32 %v5514, 0.0
  %v5531 = vmax.f32 %v5515, 0.0
  %v5532 = vmax.f32 %v5516, 0.0
  %v5533 = vmax.f32 %v5517, 0.0
  %v5534 = vpack.c.bf16 %v5519, %v5518
  %v5535 = vpack.c.bf16 %v5521, %v5520
  %v5536 = vpack.c.bf16 %v5523, %v5522
  %v5537 = vpack.c.bf16 %v5525, %v5524
  %v5538 = vpack.c.bf16 %v5527, %v5526
  %v5539 = vpack.c.bf16 %v5529, %v5528
  %v5540 = vpack.c.bf16 %v5531, %v5530
  %v5541 = vpack.c.bf16 %v5533, %v5532
  %v5542 = vld [vmem:[%s7] sm:$0xf]
  %v5543 = vld [vmem:[%s7 + $0x4] sm:$0xf]
  %v5544 = vld [vmem:[%s7 + $0x8] sm:$0xf]
  %v5545 = vld [vmem:[%s7 + $0xc] sm:$0xf]
  %v5546 = vld [vmem:[%s7 + $0x10] sm:$0xf]
  %v5547 = vld [vmem:[%s7 + $0x14] sm:$0xf]
  %v5548 = vld [vmem:[%s7 + $0x18] sm:$0xf]
  %v5549 = vld [vmem:[%s7 + $0x1c] sm:$0xf]
  %v5550 = vld [vmem:[%s8] sm:$0x1]
  %v5552 = vperm.slane %v5550, 0
  %v5562 = vunpack.c.l.b16 %v5542
  %v5563 = vunpack.c.l.b16 %v5543
  %v5564 = vunpack.c.l.b16 %v5544
  %v5565 = vunpack.c.l.b16 %v5545
  %v5566 = vunpack.c.l.b16 %v5546
  %v5567 = vunpack.c.l.b16 %v5547
  %v5568 = vunpack.c.l.b16 %v5548
  %v5569 = vunpack.c.l.b16 %v5549
  %v5570 = vpack.c.b16 %v5563, %v5562
  %v5571 = vpack.c.b16 %v5565, %v5564
  %v5572 = vpack.c.b16 %v5567, %v5566
  %v5573 = vpack.c.b16 %v5569, %v5568
  %v5579 = vsel %vm357, %v5534, 0
  %v5582 = vsel %vm357, %v5535, 0
  %v5585 = vsel %vm357, %v5536, 0
  %v5588 = vsel %vm357, %v5537, 0
  %v5591 = vsel %vm357, %v5538, 0
  %v5594 = vsel %vm357, %v5539, 0
  %v5597 = vsel %vm357, %v5540, 0
  %v5600 = vsel %vm357, %v5541, 0
  %5602 = vmatpush.bf16.msra.mxu0 0
  %5603 = vmatpush.bf16.msra.mxu0 0
  %5604 = vmatpush.bf16.msra.mxu0 0
  %5605 = vmatpush.bf16.msra.mxu0 0
  %5606 = vmatpush.bf16.msra.mxu0 %v5573
  %5607 = vmatpush.bf16.msra.mxu0 %v5572
  %5608 = vmatpush.bf16.msra.mxu0 %v5571
  %5609 = vmatpush.bf16.msra.mxu0 %v5570
  %5610 = vmatmul.bf16.gmra.mxu0 %v5579
  %v5611 = vpop.f32.mrf.mxu0
  %v5612 = vadd.f32 %v5552, %v5611
  %v5613 = vpop.f32.mrf.mxu0
  %v5614 = vadd.f32 %v5552, %v5613
  %5615 = vmatmul.bf16.gmra.mxu0 %v5582
  %v5616 = vpop.f32.mrf.mxu0
  %v5617 = vadd.f32 %v5552, %v5616
  %v5618 = vpop.f32.mrf.mxu0
  %v5619 = vadd.f32 %v5552, %v5618
  %5620 = vmatmul.bf16.gmra.mxu0 %v5585
  %v5621 = vpop.f32.mrf.mxu0
  %v5622 = vadd.f32 %v5552, %v5621
  %v5623 = vpop.f32.mrf.mxu0
  %v5624 = vadd.f32 %v5552, %v5623
  %5625 = vmatmul.bf16.gmra.mxu0 %v5588
  %v5626 = vpop.f32.mrf.mxu0
  %v5627 = vadd.f32 %v5552, %v5626
  %v5628 = vpop.f32.mrf.mxu0
  %v5629 = vadd.f32 %v5552, %v5628
  %5630 = vmatmul.bf16.gmra.mxu0 %v5591
  %v5631 = vpop.f32.mrf.mxu0
  %v5632 = vadd.f32 %v5552, %v5631
  %v5633 = vpop.f32.mrf.mxu0
  %v5634 = vadd.f32 %v5552, %v5633
  %5635 = vmatmul.bf16.gmra.mxu0 %v5594
  %v5636 = vpop.f32.mrf.mxu0
  %v5637 = vadd.f32 %v5552, %v5636
  %v5638 = vpop.f32.mrf.mxu0
  %v5639 = vadd.f32 %v5552, %v5638
  %5640 = vmatmul.bf16.gmra.mxu0 %v5597
  %v5641 = vpop.f32.mrf.mxu0
  %v5642 = vadd.f32 %v5552, %v5641
  %v5643 = vpop.f32.mrf.mxu0
  %v5644 = vadd.f32 %v5552, %v5643
  %5645 = vmatmul.bf16.gmra.mxu0 %v5600
  %v5646 = vpop.f32.mrf.mxu0
  %v5647 = vadd.f32 %v5552, %v5646
  %v5648 = vpop.f32.mrf.mxu0
  %v5649 = vadd.f32 %v5552, %v5648
  %5650 = vdwg.mxu0
  %5651 = vxpose.xlu0.b32.start [1/16] %v5612, 128
  %5652 = vxpose.xlu0.b32.cont [2/16] %v5614, 128
  %5653 = vxpose.xlu0.b32.cont [3/16] %v5617, 128
  %5654 = vxpose.xlu0.b32.cont [4/16] %v5619, 128
  %5655 = vxpose.xlu0.b32.cont [5/16] %v5622, 128
  %5656 = vxpose.xlu0.b32.cont [6/16] %v5624, 128
  %5657 = vxpose.xlu0.b32.cont [7/16] %v5627, 128
  %5658 = vxpose.xlu0.b32.cont [8/16] %v5629, 128
  %5659 = vxpose.xlu0.b32.cont [9/16] %v5632, 128
  %5660 = vxpose.xlu0.b32.cont [10/16] %v5634, 128
  %5661 = vxpose.xlu0.b32.cont [11/16] %v5637, 128
  %5662 = vxpose.xlu0.b32.cont [12/16] %v5639, 128
  %5663 = vxpose.xlu0.b32.cont [13/16] %v5642, 128
  %5664 = vxpose.xlu0.b32.cont [14/16] %v5644, 128
  %5665 = vxpose.xlu0.b32.cont [15/16] %v5647, 128
  %5666 = vxpose.xlu0.b32.end [16/16] %v5649, 128
  %v5667 = vpop.trf.xlu0
  %v5668 = vpop.trf.xlu0
  %v5669 = vpop.trf.xlu0
  %v5670 = vpop.trf.xlu0
  %v5671 = vpop.trf.xlu0
  %v5672 = vpop.trf.xlu0
  %v5673 = vpop.trf.xlu0
  %v5674 = vpop.trf.xlu0
  %v5675 = vpop.trf.xlu0
  %v5676 = vpop.trf.xlu0
  %v5677 = vpop.trf.xlu0
  %v5678 = vpop.trf.xlu0
  %v5679 = vpop.trf.xlu0
  %v5680 = vpop.trf.xlu0
  %v5681 = vpop.trf.xlu0
  %v5682 = vpop.trf.xlu0
  %v5683 = vrot.slane %v5667, 4
  %v5684 = vmax.f32 %v5667, %v5683
  %v5685 = vrot.slane %v5684, 2
  %v5686 = vmax.f32 %v5684, %v5685
  %v5687 = vrot.slane %v5686, 1
  %v5688 = vmax.f32 %v5686, %v5687
  %v5689 = vsub.f32 %v5667, %v5688
  %v5690 = vmul.f32 %v5689, 1.442695
  %v5691 = vpow.pop %v5690
  %v5692 = vrot.slane %v5691, 4
  %v5693 = vadd.f32 %v5691, %v5692
  %v5694 = vrot.slane %v5693, 2
  %v5695 = vadd.f32 %v5693, %v5694
  %v5696 = vrot.slane %v5695, 1
  %v5697 = vadd.f32 %v5695, %v5696
  %v5698 = vrcp.pop %v5697
  %v5699 = vmul.f32 %v5691, %v5698
  %v5702 = vrot.slane %v5668, 1
  %v5703 = vrot.slane %v5668, 2
  %v5704 = vrot.slane %v5668, 3
  %v5705 = vrot.slane %v5668, 4
  %v5706 = vrot.slane %v5668, 5
  %v5707 = vrot.slane %v5668, 6
  %v5708 = vrot.slane %v5668, 7
  %v5709 = vrot.slane %v5669, 1
  %v5710 = vrot.slane %v5669, 2
  %v5711 = vrot.slane %v5669, 3
  %v5712 = vrot.slane %v5669, 4
  %v5713 = vrot.slane %v5669, 5
  %v5714 = vrot.slane %v5669, 6
  %v5715 = vrot.slane %v5669, 7
  %v5716 = vperm.slane %v5668, 0
  %v5717 = vperm.slane %v5702, 0
  %v5718 = vperm.slane %v5703, 0
  %v5719 = vperm.slane %v5704, 0
  %v5720 = vperm.slane %v5705, 0
  %v5721 = vperm.slane %v5706, 0
  %v5722 = vperm.slane %v5707, 0
  %v5723 = vperm.slane %v5708, 0
  %v5724 = vperm.slane %v5669, 0
  %v5725 = vperm.slane %v5709, 0
  %v5726 = vperm.slane %v5710, 0
  %v5727 = vperm.slane %v5711, 0
  %v5728 = vperm.slane %v5712, 0
  %v5729 = vperm.slane %v5713, 0
  %v5730 = vperm.slane %v5714, 0
  %v5731 = vperm.slane %v5715, 0
  %v5748 = vmul.f32 %v5716, %v5699
  %v5749 = vmul.f32 %v5717, %v5699
  %v5750 = vmul.f32 %v5718, %v5699
  %v5751 = vmul.f32 %v5719, %v5699
  %v5752 = vmul.f32 %v5720, %v5699
  %v5753 = vmul.f32 %v5721, %v5699
  %v5754 = vmul.f32 %v5722, %v5699
  %v5755 = vmul.f32 %v5723, %v5699
  %v5756 = vmul.f32 %v5724, %v5699
  %v5757 = vmul.f32 %v5725, %v5699
  %v5758 = vmul.f32 %v5726, %v5699
  %v5759 = vmul.f32 %v5727, %v5699
  %v5760 = vmul.f32 %v5728, %v5699
  %v5761 = vmul.f32 %v5729, %v5699
  %v5762 = vmul.f32 %v5730, %v5699
  %v5763 = vmul.f32 %v5731, %v5699
  %v5764 = vpack.c.bf16 %v5748, %v5748
  %v5765 = vpack.c.bf16 %v5749, %v5749
  %v5766 = vpack.c.bf16 %v5750, %v5750
  %v5767 = vpack.c.bf16 %v5751, %v5751
  %v5768 = vpack.c.bf16 %v5752, %v5752
  %v5769 = vpack.c.bf16 %v5753, %v5753
  %v5770 = vpack.c.bf16 %v5754, %v5754
  %v5771 = vpack.c.bf16 %v5755, %v5755
  %v5772 = vpack.c.bf16 %v5756, %v5756
  %v5773 = vpack.c.bf16 %v5757, %v5757
  %v5774 = vpack.c.bf16 %v5758, %v5758
  %v5775 = vpack.c.bf16 %v5759, %v5759
  %v5776 = vpack.c.bf16 %v5760, %v5760
  %v5777 = vpack.c.bf16 %v5761, %v5761
  %v5778 = vpack.c.bf16 %v5762, %v5762
  %v5779 = vpack.c.bf16 %v5763, %v5763
  %5780 = vst.msk [vmem:[%s9] sm:$0xf] %vm2563, %v5764
  %5781 = vst.msk [vmem:[%s9 + $0x4] sm:$0xf] %vm2563, %v5765
  %5782 = vst.msk [vmem:[%s9 + $0x8] sm:$0xf] %vm2563, %v5766
  %5783 = vst.msk [vmem:[%s9 + $0xc] sm:$0xf] %vm2563, %v5767
  %5784 = vst.msk [vmem:[%s9 + $0x10] sm:$0xf] %vm2563, %v5768
  %5785 = vst.msk [vmem:[%s9 + $0x14] sm:$0xf] %vm2563, %v5769
  %5786 = vst.msk [vmem:[%s9 + $0x18] sm:$0xf] %vm2563, %v5770
  %5787 = vst.msk [vmem:[%s9 + $0x1c] sm:$0xf] %vm2563, %v5771
  %5788 = vst.msk [vmem:[%s9 + $0x20] sm:$0xf] %vm2563, %v5772
  %5789 = vst.msk [vmem:[%s9 + $0x24] sm:$0xf] %vm2563, %v5773
  %5790 = vst.msk [vmem:[%s9 + $0x28] sm:$0xf] %vm2563, %v5774
  %5791 = vst.msk [vmem:[%s9 + $0x2c] sm:$0xf] %vm2563, %v5775
  %5792 = vst.msk [vmem:[%s9 + $0x30] sm:$0xf] %vm2563, %v5776
  %5793 = vst.msk [vmem:[%s9 + $0x34] sm:$0xf] %vm2563, %v5777
  %5794 = vst.msk [vmem:[%s9 + $0x38] sm:$0xf] %vm2563, %v5778
  %5795 = vst.msk [vmem:[%s9 + $0x3c] sm:$0xf] %vm2563, %v5779
  %5812 = vrot.lane.b32.xlu0 %v5764, 64
  %v5813 = vpop.permute.xlu0 %5812
  %5814 = vrot.lane.b32.xlu0 %v5765, 64
  %v5815 = vpop.permute.xlu0 %5814
  %5816 = vrot.lane.b32.xlu0 %v5766, 64
  %v5817 = vpop.permute.xlu0 %5816
  %5818 = vrot.lane.b32.xlu0 %v5767, 64
  %v5819 = vpop.permute.xlu0 %5818
  %5820 = vrot.lane.b32.xlu0 %v5768, 64
  %v5821 = vpop.permute.xlu0 %5820
  %5822 = vrot.lane.b32.xlu0 %v5769, 64
  %v5823 = vpop.permute.xlu0 %5822
  %5824 = vrot.lane.b32.xlu0 %v5770, 64
  %v5825 = vpop.permute.xlu0 %5824
  %5826 = vrot.lane.b32.xlu0 %v5771, 64
  %v5827 = vpop.permute.xlu0 %5826
  %5828 = vrot.lane.b32.xlu0 %v5772, 64
  %v5829 = vpop.permute.xlu0 %5828
  %5830 = vrot.lane.b32.xlu0 %v5773, 64
  %v5831 = vpop.permute.xlu0 %5830
  %5832 = vrot.lane.b32.xlu0 %v5774, 64
  %v5833 = vpop.permute.xlu0 %5832
  %5834 = vrot.lane.b32.xlu0 %v5775, 64
  %v5835 = vpop.permute.xlu0 %5834
  %5836 = vrot.lane.b32.xlu0 %v5776, 64
  %v5837 = vpop.permute.xlu0 %5836
  %5838 = vrot.lane.b32.xlu0 %v5777, 64
  %v5839 = vpop.permute.xlu0 %5838
  %5840 = vrot.lane.b32.xlu0 %v5778, 64
  %v5841 = vpop.permute.xlu0 %5840
  %5842 = vrot.lane.b32.xlu0 %v5779, 64
  %v5843 = vpop.permute.xlu0 %5842
  %s5860 = scalar_lea.vmem %s9, 64
  %5861 = vst.msk [vmem:[%s5860] sm:$0xf] %vm2563, %v5813
  %5862 = vst.msk [vmem:[%s5860 + $0x4] sm:$0xf] %vm2563, %v5815
  %5863 = vst.msk [vmem:[%s5860 + $0x8] sm:$0xf] %vm2563, %v5817
  %5864 = vst.msk [vmem:[%s5860 + $0xc] sm:$0xf] %vm2563, %v5819
  %5865 = vst.msk [vmem:[%s5860 + $0x10] sm:$0xf] %vm2563, %v5821
  %5866 = vst.msk [vmem:[%s5860 + $0x14] sm:$0xf] %vm2563, %v5823
  %5867 = vst.msk [vmem:[%s5860 + $0x18] sm:$0xf] %vm2563, %v5825
  %5868 = vst.msk [vmem:[%s5860 + $0x1c] sm:$0xf] %vm2563, %v5827
  %5869 = vst.msk [vmem:[%s5860 + $0x20] sm:$0xf] %vm2563, %v5829
  %5870 = vst.msk [vmem:[%s5860 + $0x24] sm:$0xf] %vm2563, %v5831
  %5871 = vst.msk [vmem:[%s5860 + $0x28] sm:$0xf] %vm2563, %v5833
  %5872 = vst.msk [vmem:[%s5860 + $0x2c] sm:$0xf] %vm2563, %v5835
  %5873 = vst.msk [vmem:[%s5860 + $0x30] sm:$0xf] %vm2563, %v5837
  %5874 = vst.msk [vmem:[%s5860 + $0x34] sm:$0xf] %vm2563, %v5839
  %5875 = vst.msk [vmem:[%s5860 + $0x38] sm:$0xf] %vm2563, %v5841
  %5876 = vst.msk [vmem:[%s5860 + $0x3c] sm:$0xf] %vm2563, %v5843
  // Predicated region
  $region38: #{cam_encode_forward.1} parent=0 // pred_check
    _
  $region39: #{cam_encode_forward.1} parent=0 // pred_check_branch
    %5878 = sbr.rel (0) target = $region41
  $region40: #{cam_encode_forward.1} parent=0 // pred_region
    _
  $region41: #{cam_encode_forward.1} parent=0 // pred_fallthru
    _
  // Predicated region
  $region42: #{cam_encode_forward.1} parent=0 // pred_check
    _
  $region43: #{cam_encode_forward.1} parent=0 // pred_check_branch
    %5880 = sbr.rel (0) target = $region45
  $region44: #{cam_encode_forward.1} parent=0 // pred_region
    _
  $region45: #{cam_encode_forward.1} parent=0 // pred_fallthru
    _

</llo_original>
